<compile_context>
chip_gen: v7x
topology: tpu7x:2x2x1
jax: 0.10.0
libtpu: 0.0.40
codegen_flags: <defaults>
</compile_context>

<pallas_src>
import math
import functools

import jax
import jax.numpy as jnp
from jax.experimental import pallas as pl
from jax.experimental.pallas import tpu as pltpu

# ---- scaled-down DistilBERT config (real model: 30522/512/768/12/3072/6, out 1280) ----
VOCAB = 512
MAX_POS = 64
D = 128          # hidden size
H = 4            # attention heads
DH = D // H      # head dim
FFN = 256        # feed-forward hidden
LAYERS = 2       # transformer layers
OUT_SIZE = 256   # text_linear_layer output
LN_EPS = 1e-12
NEG_INF = -1e9   # TODO(synk): HF uses torch.finfo(dtype).min; -1e9 equivalent post-softmax


# ------------------------------ fused kernel -------------------------------

def _layernorm(y, g, b):
    """LayerNorm in f32. y:[N,D], g/b:[1,D]."""
    mu = jnp.mean(y, axis=-1, keepdims=True)
    var = jnp.mean(jnp.square(y - mu), axis=-1, keepdims=True)
    return (y - mu) * jax.lax.rsqrt(var + LN_EPS) * g + b


def encoder_kernel(
    h_emb_ref, bias_ref,                     # embedded tokens, additive key mask
    emb_g_ref, emb_b_ref,                    # embedding LayerNorm
    w_qkv_ref, b_qkv_ref, w_o_ref, b_o_ref,  # attention weights (stacked per layer)
    ln1_g_ref, ln1_b_ref,
    w1_ref, b1_ref, w2_ref, b2_ref,          # FFN weights (stacked per layer)
    ln2_g_ref, ln2_b_ref,
    w_txt_ref, b_txt_ref,                    # text_linear_layer
    out_ref,
    h_scratch,                               # [N, D] f32, resident across layers
    *, batch, seq):
    l = pl.program_id(0)
    n_tok = batch * seq

    # --- grid step 0: embedding LayerNorm straight into the resident scratch ---
    @pl.when(l == 0)
    def _():
        h_scratch[...] = _layernorm(h_emb_ref[...].astype(jnp.float32),
                                    emb_g_ref[...], emb_b_ref[...])

    h = h_scratch[...]                                           # [N, D] f32
    h_bf = h.astype(jnp.bfloat16)

    # --- fused Q|K|V projection: one [D, 3D] bf16 matmul, f32 accumulation ---
    qkv = jnp.dot(h_bf, w_qkv_ref[0],
                  preferred_element_type=jnp.float32) + b_qkv_ref[0]   # [N, 3D]
    q = qkv[:, 0 * D:1 * D].astype(jnp.bfloat16)
    k = qkv[:, 1 * D:2 * D].astype(jnp.bfloat16)
    v = qkv[:, 2 * D:3 * D].astype(jnp.bfloat16)

    bias = bias_ref[...]                                          # [B, 1, S] f32
    scale = 1.0 / math.sqrt(DH)
    w_o = w_o_ref[0]                                              # [D, D] bf16

    # --- multi-head attention + output projection, all VMEM-resident.
    # Heads are split by static lane slices; the output projection is
    # accumulated per-head so the merged context never leaves VMEM.
    attn_out = jnp.zeros((n_tok, D), jnp.float32)
    for hd in range(H):
        sl = slice(hd * DH, (hd + 1) * DH)
        qh = q[:, sl].reshape(batch, seq, DH)
        kh = k[:, sl].reshape(batch, seq, DH)
        vh = v[:, sl].reshape(batch, seq, DH)
        s = jnp.einsum('bqd,bkd->bqk', qh, kh,
                       preferred_element_type=jnp.float32) * scale + bias
        m = jnp.max(s, axis=-1, keepdims=True)
        e = jnp.exp(s - m)
        p = e * pl.reciprocal(jnp.sum(e, axis=-1, keepdims=True), approx=True)
        ctx = jnp.einsum('bqk,bkd->bqd', p.astype(jnp.bfloat16), vh,
                         preferred_element_type=jnp.float32)
        ctx2 = ctx.reshape(n_tok, DH).astype(jnp.bfloat16)
        attn_out = attn_out + jnp.dot(ctx2, w_o[sl, :],
                                      preferred_element_type=jnp.float32)
    attn_out = attn_out + b_o_ref[0]

    # --- residual + LayerNorm 1 (f32) ---
    h1 = _layernorm(attn_out + h, ln1_g_ref[0], ln1_b_ref[0])

    # --- feed-forward: Linear -> GELU -> Linear, bf16 matmuls / f32 math ---
    f = jnp.dot(h1.astype(jnp.bfloat16), w1_ref[0],
                preferred_element_type=jnp.float32) + b1_ref[0]
    # TODO(synk): DistilBERT uses exact erf-GELU; tanh approximation used here.
    f = jax.nn.gelu(f, approximate=True)
    f = jnp.dot(f.astype(jnp.bfloat16), w2_ref[0],
                preferred_element_type=jnp.float32) + b2_ref[0]

    # --- residual + LayerNorm 2; new hidden state stays resident in VMEM ---
    h2 = _layernorm(f + h1, ln2_g_ref[0], ln2_b_ref[0])
    h_scratch[...] = h2

    # --- final text_linear_layer, only at the last layer step ---
    @pl.when(l == pl.num_programs(0) - 1)
    def _():
        out_ref[...] = (jnp.dot(h2.astype(jnp.bfloat16), w_txt_ref[...],
                                preferred_element_type=jnp.float32)
                        + b_txt_ref[...]).astype(out_ref.dtype)


# ------------------------------- parameters --------------------------------

def init_params(key):
    keys = jax.random.split(key, 7)

    def stacked_dense(k, din, dout):
        w = 0.02 * jax.random.normal(k, (LAYERS, din, dout), jnp.float32)
        b = jnp.zeros((LAYERS, 1, dout), jnp.float32)
        return w.astype(jnp.bfloat16), b          # bf16 weights, f32 biases

    params = {
        "word_emb": 0.02 * jax.random.normal(keys[0], (VOCAB, D), jnp.float32),
        "pos_emb": 0.02 * jax.random.normal(keys[1], (MAX_POS, D), jnp.float32),
        "emb_ln_g": jnp.ones((1, D), jnp.float32),
        "emb_ln_b": jnp.zeros((1, D), jnp.float32),
    }
    # fused Q|K|V projection: [LAYERS, D, 3D]
    params["w_qkv"], params["b_qkv"] = stacked_dense(keys[2], D, 3 * D)
    params["w_o"], params["b_o"] = stacked_dense(keys[3], D, D)
    params["w1"], params["b1"] = stacked_dense(keys[4], D, FFN)
    params["w2"], params["b2"] = stacked_dense(keys[5], FFN, D)
    params["ln1_g"] = jnp.ones((LAYERS, 1, D), jnp.float32)
    params["ln1_b"] = jnp.zeros((LAYERS, 1, D), jnp.float32)
    params["ln2_g"] = jnp.ones((LAYERS, 1, D), jnp.float32)
    params["ln2_b"] = jnp.zeros((LAYERS, 1, D), jnp.float32)

    # text_linear_layer: Linear(D -> OUT_SIZE)
    w_txt = 0.02 * jax.random.normal(keys[6], (D, OUT_SIZE), jnp.float32)
    params["w_txt"] = w_txt.astype(jnp.bfloat16)
    params["b_txt"] = jnp.zeros((1, OUT_SIZE), jnp.float32)
    return params


# --------------------------------- forward ---------------------------------

def text_encoder_forward(params, input_ids):
    """Equivalent of TextEncoder.forward given already-tokenized input_ids.

    Returns (text_embeddings [B,S,OUT_SIZE] float32, attention_mask [B,S] bool).
    """
    B, S = input_ids.shape
    N = B * S
    attention_mask = input_ids != 0                               # bool [B,S]

    # ---- embeddings (gather = JAX glue; LayerNorm fused into the kernel) ----
    word = params["word_emb"][input_ids]                          # [B,S,D]
    pos = params["pos_emb"][jnp.arange(S)][None, :, :]            # [1,S,D]
    h_emb = (word + pos).reshape(N, D).astype(jnp.float32)

    # compact additive key-side mask bias [B,1,S] (kept f32); broadcast in-kernel
    bias = jnp.where(attention_mask, 0.0, NEG_INF).astype(jnp.float32)[:, None, :]

    kernel = functools.partial(encoder_kernel, batch=B, seq=S)

    def full(shape):
        nd = len(shape)
        return pl.BlockSpec(shape, lambda l: (0,) * nd)

    def stacked(arr):
        # [LAYERS, ...] weights: one layer's slab per grid step
        shape = arr.shape
        nd = len(shape)
        return pl.BlockSpec((1,) + shape[1:], lambda l: (l,) + (0,) * (nd - 1))

    out = pl.pallas_call(
        kernel,
        grid=(LAYERS,),
        in_specs=[
            full((N, D)),                                 # h_emb
            full((B, 1, S)),                              # mask bias
            full((1, D)), full((1, D)),                   # emb LayerNorm
            stacked(params["w_qkv"]), stacked(params["b_qkv"]),
            stacked(params["w_o"]), stacked(params["b_o"]),
            stacked(params["ln1_g"]), stacked(params["ln1_b"]),
            stacked(params["w1"]), stacked(params["b1"]),
            stacked(params["w2"]), stacked(params["b2"]),
            stacked(params["ln2_g"]), stacked(params["ln2_b"]),
            full((D, OUT_SIZE)), full((1, OUT_SIZE)),     # text_linear_layer
        ],
        out_specs=pl.BlockSpec((N, OUT_SIZE), lambda l: (0, 0)),
        out_shape=jax.ShapeDtypeStruct((N, OUT_SIZE), jnp.float32),
        scratch_shapes=[pltpu.VMEM((N, D), jnp.float32)],
        compiler_params=pltpu.CompilerParams(
            # layer axis is a sequential carry; explicit VMEM budget (tiny here,
            # re-budget for 64 MiB on v7x when scaling to real DistilBERT sizes).
            dimension_semantics=("arbitrary",),
            vmem_limit_bytes=32 * 1024 * 1024,
        ),
    )(
        h_emb, bias,
        params["emb_ln_g"], params["emb_ln_b"],
        params["w_qkv"], params["b_qkv"],
        params["w_o"], params["b_o"],
        params["ln1_g"], params["ln1_b"],
        params["w1"], params["b1"],
        params["w2"], params["b2"],
        params["ln2_g"], params["ln2_b"],
        params["w_txt"], params["b_txt"],
    )
    return out.reshape(B, S, OUT_SIZE), attention_mask


# ----------------------------------- main -----------------------------------

if __name__ == "__main__":
    key = jax.random.PRNGKey(0)
    k_ids, k_params = jax.random.split(key)

    B, S = 2, 8
    # Tokenizer is not reproducible in-kernel: take input_ids directly (0 = pad).
    input_ids = jax.random.randint(k_ids, (B, S), 1, VOCAB, dtype=jnp.int32)
    input_ids = input_ids.at[1, 5:].set(0)   # some padding in the second example

    params = init_params(k_params)

    fwd = jax.jit(text_encoder_forward)
    text_embeddings, attention_mask = fwd(params, input_ids)
    jax.block_until_ready((text_embeddings, attention_mask))

    assert text_embeddings.shape == (B, S, OUT_SIZE)
    assert text_embeddings.dtype == jnp.float32
    assert attention_mask.shape == (B, S)
    assert attention_mask.dtype == jnp.bool_
    assert bool(jnp.isfinite(text_embeddings).all())

    print("KERNEL_OK")
</pallas_src>

<mosaic_0001>
module attributes {stable_mosaic.version = 11 : i64} {
  func.func @encoder_kernel(%arg0: i32, %arg1: memref<16x128xf32, #tpu.memory_space<vmem>>, %arg2: memref<2x1x8xf32, #tpu.memory_space<vmem>>, %arg3: memref<1x128xf32, #tpu.memory_space<vmem>>, %arg4: memref<1x128xf32, #tpu.memory_space<vmem>>, %arg5: memref<1x128x384xbf16, #tpu.memory_space<vmem>>, %arg6: memref<1x1x384xf32, #tpu.memory_space<vmem>>, %arg7: memref<1x128x128xbf16, #tpu.memory_space<vmem>>, %arg8: memref<1x1x128xf32, #tpu.memory_space<vmem>>, %arg9: memref<1x1x128xf32, #tpu.memory_space<vmem>>, %arg10: memref<1x1x128xf32, #tpu.memory_space<vmem>>, %arg11: memref<1x128x256xbf16, #tpu.memory_space<vmem>>, %arg12: memref<1x1x256xf32, #tpu.memory_space<vmem>>, %arg13: memref<1x256x128xbf16, #tpu.memory_space<vmem>>, %arg14: memref<1x1x128xf32, #tpu.memory_space<vmem>>, %arg15: memref<1x1x128xf32, #tpu.memory_space<vmem>>, %arg16: memref<1x1x128xf32, #tpu.memory_space<vmem>>, %arg17: memref<128x256xbf16, #tpu.memory_space<vmem>>, %arg18: memref<1x256xf32, #tpu.memory_space<vmem>>, %arg19: memref<16x256xf32, #tpu.memory_space<vmem>>, %arg20: memref<16x128xf32, #tpu.memory_space<vmem>>) attributes {dimension_semantics = [#tpu.dimension_semantics<arbitrary>], iteration_bounds = array<i64: 2>, scalar_prefetch = 0 : i64, scratch_operands = 1 : i64, tpu.core_type = #tpu.core_type<tc>, window_params = [{pipeline_mode = #tpu.pipeline_mode<synchronous>, transform_indices = @transform_0, window_bounds = array<i64: 16, 128>}, {pipeline_mode = #tpu.pipeline_mode<synchronous>, transform_indices = @transform_1, window_bounds = array<i64: 2, 1, 8>}, {pipeline_mode = #tpu.pipeline_mode<synchronous>, transform_indices = @transform_2, window_bounds = array<i64: 1, 128>}, {pipeline_mode = #tpu.pipeline_mode<synchronous>, transform_indices = @transform_3, window_bounds = array<i64: 1, 128>}, {transform_indices = @transform_4, window_bounds = array<i64: 1, 128, 384>}, {transform_indices = @transform_5, window_bounds = array<i64: 1, 1, 384>}, {transform_indices = @transform_6, window_bounds = array<i64: 1, 128, 128>}, {transform_indices = @transform_7, window_bounds = array<i64: 1, 1, 128>}, {transform_indices = @transform_8, window_bounds = array<i64: 1, 1, 128>}, {transform_indices = @transform_9, window_bounds = array<i64: 1, 1, 128>}, {transform_indices = @transform_10, window_bounds = array<i64: 1, 128, 256>}, {transform_indices = @transform_11, window_bounds = array<i64: 1, 1, 256>}, {transform_indices = @transform_12, window_bounds = array<i64: 1, 256, 128>}, {transform_indices = @transform_13, window_bounds = array<i64: 1, 1, 128>}, {transform_indices = @transform_14, window_bounds = array<i64: 1, 1, 128>}, {transform_indices = @transform_15, window_bounds = array<i64: 1, 1, 128>}, {pipeline_mode = #tpu.pipeline_mode<synchronous>, transform_indices = @transform_16, window_bounds = array<i64: 128, 256>}, {pipeline_mode = #tpu.pipeline_mode<synchronous>, transform_indices = @transform_17, window_bounds = array<i64: 1, 256>}, {pipeline_mode = #tpu.pipeline_mode<synchronous>, transform_indices = @transform_18, window_bounds = array<i64: 16, 256>}]} {
    %c0_i32 = arith.constant 0 : i32
    %0 = arith.cmpi eq, %arg0, %c0_i32 : i32
    %1 = arith.extui %0 : i1 to i32
    %c0_i32_0 = arith.constant 0 : i32
    %2 = arith.cmpi ne, %1, %c0_i32_0 : i32
    scf.if %2 {
      %c0_85 = arith.constant 0 : index
      %c0_86 = arith.constant 0 : index
      %225 = vector.load %arg1[%c0_85, %c0_86] : memref<16x128xf32, #tpu.memory_space<vmem>>, vector<16x128xf32>
      %c0_87 = arith.constant 0 : index
      %c0_88 = arith.constant 0 : index
      %226 = vector.load %arg3[%c0_87, %c0_88] : memref<1x128xf32, #tpu.memory_space<vmem>>, vector<1x128xf32>
      %c0_89 = arith.constant 0 : index
      %c0_90 = arith.constant 0 : index
      %227 = vector.load %arg4[%c0_89, %c0_90] : memref<1x128xf32, #tpu.memory_space<vmem>>, vector<1x128xf32>
      %cst_91 = arith.constant dense<0.000000e+00> : vector<16xf32>
      %228 = vector.multi_reduction <add>, %225, %cst_91 [1] : vector<16x128xf32> to vector<16xf32>
      %229 = vector.shape_cast %228 : vector<16xf32> to vector<16x1xf32>
      %cst_92 = arith.constant 1.280000e+02 : f32
      %230 = vector.broadcast %cst_92 : f32 to vector<16x1xf32>
      %231 = arith.divf %229, %230 : vector<16x1xf32>
      %232 = vector.broadcast %231 : vector<16x1xf32> to vector<16x128xf32>
      %233 = arith.subf %225, %232 : vector<16x128xf32>
      %234 = arith.mulf %233, %233 : vector<16x128xf32>
      %cst_93 = arith.constant dense<0.000000e+00> : vector<16xf32>
      %235 = vector.multi_reduction <add>, %234, %cst_93 [1] : vector<16x128xf32> to vector<16xf32>
      %236 = vector.shape_cast %235 : vector<16xf32> to vector<16x1xf32>
      %cst_94 = arith.constant 1.280000e+02 : f32
      %237 = vector.broadcast %cst_94 : f32 to vector<16x1xf32>
      %238 = arith.divf %236, %237 : vector<16x1xf32>
      %239 = vector.broadcast %231 : vector<16x1xf32> to vector<16x128xf32>
      %240 = arith.subf %225, %239 : vector<16x128xf32>
      %cst_95 = arith.constant 9.99999996E-13 : f32
      %241 = vector.broadcast %cst_95 : f32 to vector<16x1xf32>
      %242 = arith.addf %238, %241 : vector<16x1xf32>
      %243 = math.rsqrt %242 : vector<16x1xf32>
      %244 = vector.broadcast %243 : vector<16x1xf32> to vector<16x128xf32>
      %245 = arith.mulf %240, %244 : vector<16x128xf32>
      %246 = vector.broadcast %226 : vector<1x128xf32> to vector<16x128xf32>
      %247 = arith.mulf %245, %246 : vector<16x128xf32>
      %248 = vector.broadcast %227 : vector<1x128xf32> to vector<16x128xf32>
      %249 = arith.addf %247, %248 : vector<16x128xf32>
      %c0_96 = arith.constant 0 : index
      %c0_97 = arith.constant 0 : index
      %250 = vector.load %arg20[%c0_96, %c0_97] : memref<16x128xf32, #tpu.memory_space<vmem>>, vector<16x128xf32>
      tpu.vector_store %arg20[%c0_96, %c0_97], %249 {strides = array<i32>} : memref<16x128xf32, #tpu.memory_space<vmem>>, vector<16x128xf32>,
    } else {
    }
    %c0 = arith.constant 0 : index
    %c0_1 = arith.constant 0 : index
    %3 = vector.load %arg20[%c0, %c0_1] : memref<16x128xf32, #tpu.memory_space<vmem>>, vector<16x128xf32>
    %4 = arith.truncf %3 : vector<16x128xf32> to vector<16x128xbf16>
    %c0_2 = arith.constant 0 : index
    %c0_3 = arith.constant 0 : index
    %c0_4 = arith.constant 0 : index
    %5 = vector.load %arg5[%c0_2, %c0_3, %c0_4] : memref<1x128x384xbf16, #tpu.memory_space<vmem>>, vector<1x128x384xbf16>
    %6 = vector.shape_cast %5 : vector<1x128x384xbf16> to vector<128x384xbf16>
    %cst = arith.constant dense<0.000000e+00> : vector<16x384xf32>
    %7 = tpu.matmul %4, %6, %cst {dimension_numbers = #tpu.dot_dimension_numbers<[1], [0], [0], [1], [0, 0, 1, 1], [], []>} : vector<16x128xbf16>, vector<128x384xbf16>, vector<16x384xf32> -> vector<16x384xf32>
    %c0_5 = arith.constant 0 : index
    %c0_6 = arith.constant 0 : index
    %c0_7 = arith.constant 0 : index
    %8 = vector.load %arg6[%c0_5, %c0_6, %c0_7] : memref<1x1x384xf32, #tpu.memory_space<vmem>>, vector<1x1x384xf32>
    %9 = vector.shape_cast %8 : vector<1x1x384xf32> to vector<1x384xf32>
    %10 = vector.broadcast %9 : vector<1x384xf32> to vector<16x384xf32>
    %11 = arith.addf %7, %10 : vector<16x384xf32>
    %12 = vector.extract_strided_slice %11 {offsets = [0, 0], sizes = [16, 128], strides = [1, 1]} : vector<16x384xf32> to vector<16x128xf32>
    %13 = arith.truncf %12 : vector<16x128xf32> to vector<16x128xbf16>
    %14 = vector.extract_strided_slice %11 {offsets = [0, 128], sizes = [16, 128], strides = [1, 1]} : vector<16x384xf32> to vector<16x128xf32>
    %15 = arith.truncf %14 : vector<16x128xf32> to vector<16x128xbf16>
    %16 = vector.extract_strided_slice %11 {offsets = [0, 256], sizes = [16, 128], strides = [1, 1]} : vector<16x384xf32> to vector<16x128xf32>
    %17 = arith.truncf %16 : vector<16x128xf32> to vector<16x128xbf16>
    %c0_8 = arith.constant 0 : index
    %c0_9 = arith.constant 0 : index
    %c0_10 = arith.constant 0 : index
    %18 = vector.load %arg2[%c0_8, %c0_9, %c0_10] : memref<2x1x8xf32, #tpu.memory_space<vmem>>, vector<2x1x8xf32>
    %c0_11 = arith.constant 0 : index
    %c0_12 = arith.constant 0 : index
    %c0_13 = arith.constant 0 : index
    %19 = vector.load %arg7[%c0_11, %c0_12, %c0_13] : memref<1x128x128xbf16, #tpu.memory_space<vmem>>, vector<1x128x128xbf16>
    %20 = vector.shape_cast %19 : vector<1x128x128xbf16> to vector<128x128xbf16>
    %cst_14 = arith.constant 0.000000e+00 : f32
    %21 = vector.broadcast %cst_14 : f32 to vector<16x128xf32>
    %22 = vector.extract_strided_slice %13 {offsets = [0, 0], sizes = [16, 32], strides = [1, 1]} : vector<16x128xbf16> to vector<16x32xbf16>
    %23 = vector.shape_cast %22 : vector<16x32xbf16> to vector<2x8x32xbf16>
    %24 = vector.extract_strided_slice %15 {offsets = [0, 0], sizes = [16, 32], strides = [1, 1]} : vector<16x128xbf16> to vector<16x32xbf16>
    %25 = vector.shape_cast %24 : vector<16x32xbf16> to vector<2x8x32xbf16>
    %26 = vector.extract_strided_slice %17 {offsets = [0, 0], sizes = [16, 32], strides = [1, 1]} : vector<16x128xbf16> to vector<16x32xbf16>
    %27 = vector.shape_cast %26 : vector<16x32xbf16> to vector<2x8x32xbf16>
    "tpu.trace_start"() <{level = 10 : i32, message = "bqd,bkd->bqk"}> : () -> ()
    %cst_15 = arith.constant dense<0.000000e+00> : vector<2x8x8xf32>
    %28 = tpu.matmul %23, %25, %cst_15 {dimension_numbers = #tpu.dot_dimension_numbers<[2], [2], [1], [1], [0, 0, 0, 1, 1, 1], [0], [0]>} : vector<2x8x32xbf16>, vector<2x8x32xbf16>, vector<2x8x8xf32> -> vector<2x8x8xf32>
    "tpu.trace_stop"() : () -> ()
    %cst_16 = arith.constant 0.176776692 : f32
    %29 = vector.broadcast %cst_16 : f32 to vector<2x8x8xf32>
    %30 = arith.mulf %28, %29 : vector<2x8x8xf32>
    %31 = vector.broadcast %18 : vector<2x1x8xf32> to vector<2x8x8xf32>
    %32 = arith.addf %30, %31 : vector<2x8x8xf32>
    %cst_17 = arith.constant dense<0xFF800000> : vector<2x8xf32>
    %33 = vector.multi_reduction <maximumf>, %32, %cst_17 [2] : vector<2x8x8xf32> to vector<2x8xf32>
    %34 = vector.shape_cast %33 : vector<2x8xf32> to vector<2x8x1xf32>
    %35 = vector.broadcast %34 : vector<2x8x1xf32> to vector<2x8x8xf32>
    %36 = arith.subf %32, %35 : vector<2x8x8xf32>
    %37 = math.exp %36 : vector<2x8x8xf32>
    %cst_18 = arith.constant dense<0.000000e+00> : vector<2x8xf32>
    %38 = vector.multi_reduction <add>, %37, %cst_18 [2] : vector<2x8x8xf32> to vector<2x8xf32>
    %39 = vector.shape_cast %38 : vector<2x8xf32> to vector<2x8x1xf32>
    %40 = tpu.reciprocal %39 {approx = true} : vector<2x8x1xf32> -> vector<2x8x1xf32>
    %41 = vector.broadcast %40 : vector<2x8x1xf32> to vector<2x8x8xf32>
    %42 = arith.mulf %37, %41 : vector<2x8x8xf32>
    %43 = arith.truncf %42 : vector<2x8x8xf32> to vector<2x8x8xbf16>
    "tpu.trace_start"() <{level = 10 : i32, message = "bqk,bkd->bqd"}> : () -> ()
    %cst_19 = arith.constant dense<0.000000e+00> : vector<2x8x32xf32>
    %44 = tpu.matmul %43, %27, %cst_19 {dimension_numbers = #tpu.dot_dimension_numbers<[2], [1], [1], [2], [0, 0, 0, 1, 1, 2], [0], [0]>} : vector<2x8x8xbf16>, vector<2x8x32xbf16>, vector<2x8x32xf32> -> vector<2x8x32xf32>
    "tpu.trace_stop"() : () -> ()
    %45 = vector.shape_cast %44 : vector<2x8x32xf32> to vector<16x32xf32>
    %46 = arith.truncf %45 : vector<16x32xf32> to vector<16x32xbf16>
    %47 = vector.extract_strided_slice %20 {offsets = [0, 0], sizes = [32, 128], strides = [1, 1]} : vector<128x128xbf16> to vector<32x128xbf16>
    %cst_20 = arith.constant dense<0.000000e+00> : vector<16x128xf32>
    %48 = tpu.matmul %46, %47, %cst_20 {dimension_numbers = #tpu.dot_dimension_numbers<[1], [0], [0], [1], [0, 0, 1, 1], [], []>} : vector<16x32xbf16>, vector<32x128xbf16>, vector<16x128xf32> -> vector<16x128xf32>
    %49 = arith.addf %21, %48 : vector<16x128xf32>
    %50 = vector.extract_strided_slice %13 {offsets = [0, 32], sizes = [16, 32], strides = [1, 1]} : vector<16x128xbf16> to vector<16x32xbf16>
    %51 = vector.shape_cast %50 : vector<16x32xbf16> to vector<2x8x32xbf16>
    %52 = vector.extract_strided_slice %15 {offsets = [0, 32], sizes = [16, 32], strides = [1, 1]} : vector<16x128xbf16> to vector<16x32xbf16>
    %53 = vector.shape_cast %52 : vector<16x32xbf16> to vector<2x8x32xbf16>
    %54 = vector.extract_strided_slice %17 {offsets = [0, 32], sizes = [16, 32], strides = [1, 1]} : vector<16x128xbf16> to vector<16x32xbf16>
    %55 = vector.shape_cast %54 : vector<16x32xbf16> to vector<2x8x32xbf16>
    "tpu.trace_start"() <{level = 10 : i32, message = "bqd,bkd->bqk"}> : () -> ()
    %cst_21 = arith.constant dense<0.000000e+00> : vector<2x8x8xf32>
    %56 = tpu.matmul %51, %53, %cst_21 {dimension_numbers = #tpu.dot_dimension_numbers<[2], [2], [1], [1], [0, 0, 0, 1, 1, 1], [0], [0]>} : vector<2x8x32xbf16>, vector<2x8x32xbf16>, vector<2x8x8xf32> -> vector<2x8x8xf32>
    "tpu.trace_stop"() : () -> ()
    %cst_22 = arith.constant 0.176776692 : f32
    %57 = vector.broadcast %cst_22 : f32 to vector<2x8x8xf32>
    %58 = arith.mulf %56, %57 : vector<2x8x8xf32>
    %59 = vector.broadcast %18 : vector<2x1x8xf32> to vector<2x8x8xf32>
    %60 = arith.addf %58, %59 : vector<2x8x8xf32>
    %cst_23 = arith.constant dense<0xFF800000> : vector<2x8xf32>
    %61 = vector.multi_reduction <maximumf>, %60, %cst_23 [2] : vector<2x8x8xf32> to vector<2x8xf32>
    %62 = vector.shape_cast %61 : vector<2x8xf32> to vector<2x8x1xf32>
    %63 = vector.broadcast %62 : vector<2x8x1xf32> to vector<2x8x8xf32>
    %64 = arith.subf %60, %63 : vector<2x8x8xf32>
    %65 = math.exp %64 : vector<2x8x8xf32>
    %cst_24 = arith.constant dense<0.000000e+00> : vector<2x8xf32>
    %66 = vector.multi_reduction <add>, %65, %cst_24 [2] : vector<2x8x8xf32> to vector<2x8xf32>
    %67 = vector.shape_cast %66 : vector<2x8xf32> to vector<2x8x1xf32>
    %68 = tpu.reciprocal %67 {approx = true} : vector<2x8x1xf32> -> vector<2x8x1xf32>
    %69 = vector.broadcast %68 : vector<2x8x1xf32> to vector<2x8x8xf32>
    %70 = arith.mulf %65, %69 : vector<2x8x8xf32>
    %71 = arith.truncf %70 : vector<2x8x8xf32> to vector<2x8x8xbf16>
    "tpu.trace_start"() <{level = 10 : i32, message = "bqk,bkd->bqd"}> : () -> ()
    %cst_25 = arith.constant dense<0.000000e+00> : vector<2x8x32xf32>
    %72 = tpu.matmul %71, %55, %cst_25 {dimension_numbers = #tpu.dot_dimension_numbers<[2], [1], [1], [2], [0, 0, 0, 1, 1, 2], [0], [0]>} : vector<2x8x8xbf16>, vector<2x8x32xbf16>, vector<2x8x32xf32> -> vector<2x8x32xf32>
    "tpu.trace_stop"() : () -> ()
    %73 = vector.shape_cast %72 : vector<2x8x32xf32> to vector<16x32xf32>
    %74 = arith.truncf %73 : vector<16x32xf32> to vector<16x32xbf16>
    %75 = vector.extract_strided_slice %20 {offsets = [32, 0], sizes = [32, 128], strides = [1, 1]} : vector<128x128xbf16> to vector<32x128xbf16>
    %cst_26 = arith.constant dense<0.000000e+00> : vector<16x128xf32>
    %76 = tpu.matmul %74, %75, %cst_26 {dimension_numbers = #tpu.dot_dimension_numbers<[1], [0], [0], [1], [0, 0, 1, 1], [], []>} : vector<16x32xbf16>, vector<32x128xbf16>, vector<16x128xf32> -> vector<16x128xf32>
    %77 = arith.addf %49, %76 : vector<16x128xf32>
    %78 = vector.extract_strided_slice %13 {offsets = [0, 64], sizes = [16, 32], strides = [1, 1]} : vector<16x128xbf16> to vector<16x32xbf16>
    %79 = vector.shape_cast %78 : vector<16x32xbf16> to vector<2x8x32xbf16>
    %80 = vector.extract_strided_slice %15 {offsets = [0, 64], sizes = [16, 32], strides = [1, 1]} : vector<16x128xbf16> to vector<16x32xbf16>
    %81 = vector.shape_cast %80 : vector<16x32xbf16> to vector<2x8x32xbf16>
    %82 = vector.extract_strided_slice %17 {offsets = [0, 64], sizes = [16, 32], strides = [1, 1]} : vector<16x128xbf16> to vector<16x32xbf16>
    %83 = vector.shape_cast %82 : vector<16x32xbf16> to vector<2x8x32xbf16>
    "tpu.trace_start"() <{level = 10 : i32, message = "bqd,bkd->bqk"}> : () -> ()
    %cst_27 = arith.constant dense<0.000000e+00> : vector<2x8x8xf32>
    %84 = tpu.matmul %79, %81, %cst_27 {dimension_numbers = #tpu.dot_dimension_numbers<[2], [2], [1], [1], [0, 0, 0, 1, 1, 1], [0], [0]>} : vector<2x8x32xbf16>, vector<2x8x32xbf16>, vector<2x8x8xf32> -> vector<2x8x8xf32>
    "tpu.trace_stop"() : () -> ()
    %cst_28 = arith.constant 0.176776692 : f32
    %85 = vector.broadcast %cst_28 : f32 to vector<2x8x8xf32>
    %86 = arith.mulf %84, %85 : vector<2x8x8xf32>
    %87 = vector.broadcast %18 : vector<2x1x8xf32> to vector<2x8x8xf32>
    %88 = arith.addf %86, %87 : vector<2x8x8xf32>
    %cst_29 = arith.constant dense<0xFF800000> : vector<2x8xf32>
    %89 = vector.multi_reduction <maximumf>, %88, %cst_29 [2] : vector<2x8x8xf32> to vector<2x8xf32>
    %90 = vector.shape_cast %89 : vector<2x8xf32> to vector<2x8x1xf32>
    %91 = vector.broadcast %90 : vector<2x8x1xf32> to vector<2x8x8xf32>
    %92 = arith.subf %88, %91 : vector<2x8x8xf32>
    %93 = math.exp %92 : vector<2x8x8xf32>
    %cst_30 = arith.constant dense<0.000000e+00> : vector<2x8xf32>
    %94 = vector.multi_reduction <add>, %93, %cst_30 [2] : vector<2x8x8xf32> to vector<2x8xf32>
    %95 = vector.shape_cast %94 : vector<2x8xf32> to vector<2x8x1xf32>
    %96 = tpu.reciprocal %95 {approx = true} : vector<2x8x1xf32> -> vector<2x8x1xf32>
    %97 = vector.broadcast %96 : vector<2x8x1xf32> to vector<2x8x8xf32>
    %98 = arith.mulf %93, %97 : vector<2x8x8xf32>
    %99 = arith.truncf %98 : vector<2x8x8xf32> to vector<2x8x8xbf16>
    "tpu.trace_start"() <{level = 10 : i32, message = "bqk,bkd->bqd"}> : () -> ()
    %cst_31 = arith.constant dense<0.000000e+00> : vector<2x8x32xf32>
    %100 = tpu.matmul %99, %83, %cst_31 {dimension_numbers = #tpu.dot_dimension_numbers<[2], [1], [1], [2], [0, 0, 0, 1, 1, 2], [0], [0]>} : vector<2x8x8xbf16>, vector<2x8x32xbf16>, vector<2x8x32xf32> -> vector<2x8x32xf32>
    "tpu.trace_stop"() : () -> ()
    %101 = vector.shape_cast %100 : vector<2x8x32xf32> to vector<16x32xf32>
    %102 = arith.truncf %101 : vector<16x32xf32> to vector<16x32xbf16>
    %103 = vector.extract_strided_slice %20 {offsets = [64, 0], sizes = [32, 128], strides = [1, 1]} : vector<128x128xbf16> to vector<32x128xbf16>
    %cst_32 = arith.constant dense<0.000000e+00> : vector<16x128xf32>
    %104 = tpu.matmul %102, %103, %cst_32 {dimension_numbers = #tpu.dot_dimension_numbers<[1], [0], [0], [1], [0, 0, 1, 1], [], []>} : vector<16x32xbf16>, vector<32x128xbf16>, vector<16x128xf32> -> vector<16x128xf32>
    %105 = arith.addf %77, %104 : vector<16x128xf32>
    %106 = vector.extract_strided_slice %13 {offsets = [0, 96], sizes = [16, 32], strides = [1, 1]} : vector<16x128xbf16> to vector<16x32xbf16>
    %107 = vector.shape_cast %106 : vector<16x32xbf16> to vector<2x8x32xbf16>
    %108 = vector.extract_strided_slice %15 {offsets = [0, 96], sizes = [16, 32], strides = [1, 1]} : vector<16x128xbf16> to vector<16x32xbf16>
    %109 = vector.shape_cast %108 : vector<16x32xbf16> to vector<2x8x32xbf16>
    %110 = vector.extract_strided_slice %17 {offsets = [0, 96], sizes = [16, 32], strides = [1, 1]} : vector<16x128xbf16> to vector<16x32xbf16>
    %111 = vector.shape_cast %110 : vector<16x32xbf16> to vector<2x8x32xbf16>
    "tpu.trace_start"() <{level = 10 : i32, message = "bqd,bkd->bqk"}> : () -> ()
    %cst_33 = arith.constant dense<0.000000e+00> : vector<2x8x8xf32>
    %112 = tpu.matmul %107, %109, %cst_33 {dimension_numbers = #tpu.dot_dimension_numbers<[2], [2], [1], [1], [0, 0, 0, 1, 1, 1], [0], [0]>} : vector<2x8x32xbf16>, vector<2x8x32xbf16>, vector<2x8x8xf32> -> vector<2x8x8xf32>
    "tpu.trace_stop"() : () -> ()
    %cst_34 = arith.constant 0.176776692 : f32
    %113 = vector.broadcast %cst_34 : f32 to vector<2x8x8xf32>
    %114 = arith.mulf %112, %113 : vector<2x8x8xf32>
    %115 = vector.broadcast %18 : vector<2x1x8xf32> to vector<2x8x8xf32>
    %116 = arith.addf %114, %115 : vector<2x8x8xf32>
    %cst_35 = arith.constant dense<0xFF800000> : vector<2x8xf32>
    %117 = vector.multi_reduction <maximumf>, %116, %cst_35 [2] : vector<2x8x8xf32> to vector<2x8xf32>
    %118 = vector.shape_cast %117 : vector<2x8xf32> to vector<2x8x1xf32>
    %119 = vector.broadcast %118 : vector<2x8x1xf32> to vector<2x8x8xf32>
    %120 = arith.subf %116, %119 : vector<2x8x8xf32>
    %121 = math.exp %120 : vector<2x8x8xf32>
    %cst_36 = arith.constant dense<0.000000e+00> : vector<2x8xf32>
    %122 = vector.multi_reduction <add>, %121, %cst_36 [2] : vector<2x8x8xf32> to vector<2x8xf32>
    %123 = vector.shape_cast %122 : vector<2x8xf32> to vector<2x8x1xf32>
    %124 = tpu.reciprocal %123 {approx = true} : vector<2x8x1xf32> -> vector<2x8x1xf32>
    %125 = vector.broadcast %124 : vector<2x8x1xf32> to vector<2x8x8xf32>
    %126 = arith.mulf %121, %125 : vector<2x8x8xf32>
    %127 = arith.truncf %126 : vector<2x8x8xf32> to vector<2x8x8xbf16>
    "tpu.trace_start"() <{level = 10 : i32, message = "bqk,bkd->bqd"}> : () -> ()
    %cst_37 = arith.constant dense<0.000000e+00> : vector<2x8x32xf32>
    %128 = tpu.matmul %127, %111, %cst_37 {dimension_numbers = #tpu.dot_dimension_numbers<[2], [1], [1], [2], [0, 0, 0, 1, 1, 2], [0], [0]>} : vector<2x8x8xbf16>, vector<2x8x32xbf16>, vector<2x8x32xf32> -> vector<2x8x32xf32>
    "tpu.trace_stop"() : () -> ()
    %129 = vector.shape_cast %128 : vector<2x8x32xf32> to vector<16x32xf32>
    %130 = arith.truncf %129 : vector<16x32xf32> to vector<16x32xbf16>
    %131 = vector.extract_strided_slice %20 {offsets = [96, 0], sizes = [32, 128], strides = [1, 1]} : vector<128x128xbf16> to vector<32x128xbf16>
    %cst_38 = arith.constant dense<0.000000e+00> : vector<16x128xf32>
    %132 = tpu.matmul %130, %131, %cst_38 {dimension_numbers = #tpu.dot_dimension_numbers<[1], [0], [0], [1], [0, 0, 1, 1], [], []>} : vector<16x32xbf16>, vector<32x128xbf16>, vector<16x128xf32> -> vector<16x128xf32>
    %133 = arith.addf %105, %132 : vector<16x128xf32>
    %c0_39 = arith.constant 0 : index
    %c0_40 = arith.constant 0 : index
    %c0_41 = arith.constant 0 : index
    %134 = vector.load %arg8[%c0_39, %c0_40, %c0_41] : memref<1x1x128xf32, #tpu.memory_space<vmem>>, vector<1x1x128xf32>
    %135 = vector.shape_cast %134 : vector<1x1x128xf32> to vector<1x128xf32>
    %136 = vector.broadcast %135 : vector<1x128xf32> to vector<16x128xf32>
    %137 = arith.addf %133, %136 : vector<16x128xf32>
    %138 = arith.addf %137, %3 : vector<16x128xf32>
    %c0_42 = arith.constant 0 : index
    %c0_43 = arith.constant 0 : index
    %c0_44 = arith.constant 0 : index
    %139 = vector.load %arg9[%c0_42, %c0_43, %c0_44] : memref<1x1x128xf32, #tpu.memory_space<vmem>>, vector<1x1x128xf32>
    %140 = vector.shape_cast %139 : vector<1x1x128xf32> to vector<1x128xf32>
    %c0_45 = arith.constant 0 : index
    %c0_46 = arith.constant 0 : index
    %c0_47 = arith.constant 0 : index
    %141 = vector.load %arg10[%c0_45, %c0_46, %c0_47] : memref<1x1x128xf32, #tpu.memory_space<vmem>>, vector<1x1x128xf32>
    %142 = vector.shape_cast %141 : vector<1x1x128xf32> to vector<1x128xf32>
    %cst_48 = arith.constant dense<0.000000e+00> : vector<16xf32>
    %143 = vector.multi_reduction <add>, %138, %cst_48 [1] : vector<16x128xf32> to vector<16xf32>
    %144 = vector.shape_cast %143 : vector<16xf32> to vector<16x1xf32>
    %cst_49 = arith.constant 1.280000e+02 : f32
    %145 = vector.broadcast %cst_49 : f32 to vector<16x1xf32>
    %146 = arith.divf %144, %145 : vector<16x1xf32>
    %147 = vector.broadcast %146 : vector<16x1xf32> to vector<16x128xf32>
    %148 = arith.subf %138, %147 : vector<16x128xf32>
    %149 = arith.mulf %148, %148 : vector<16x128xf32>
    %cst_50 = arith.constant dense<0.000000e+00> : vector<16xf32>
    %150 = vector.multi_reduction <add>, %149, %cst_50 [1] : vector<16x128xf32> to vector<16xf32>
    %151 = vector.shape_cast %150 : vector<16xf32> to vector<16x1xf32>
    %cst_51 = arith.constant 1.280000e+02 : f32
    %152 = vector.broadcast %cst_51 : f32 to vector<16x1xf32>
    %153 = arith.divf %151, %152 : vector<16x1xf32>
    %154 = vector.broadcast %146 : vector<16x1xf32> to vector<16x128xf32>
    %155 = arith.subf %138, %154 : vector<16x128xf32>
    %cst_52 = arith.constant 9.99999996E-13 : f32
    %156 = vector.broadcast %cst_52 : f32 to vector<16x1xf32>
    %157 = arith.addf %153, %156 : vector<16x1xf32>
    %158 = math.rsqrt %157 : vector<16x1xf32>
    %159 = vector.broadcast %158 : vector<16x1xf32> to vector<16x128xf32>
    %160 = arith.mulf %155, %159 : vector<16x128xf32>
    %161 = vector.broadcast %140 : vector<1x128xf32> to vector<16x128xf32>
    %162 = arith.mulf %160, %161 : vector<16x128xf32>
    %163 = vector.broadcast %142 : vector<1x128xf32> to vector<16x128xf32>
    %164 = arith.addf %162, %163 : vector<16x128xf32>
    %165 = arith.truncf %164 : vector<16x128xf32> to vector<16x128xbf16>
    %c0_53 = arith.constant 0 : index
    %c0_54 = arith.constant 0 : index
    %c0_55 = arith.constant 0 : index
    %166 = vector.load %arg11[%c0_53, %c0_54, %c0_55] : memref<1x128x256xbf16, #tpu.memory_space<vmem>>, vector<1x128x256xbf16>
    %167 = vector.shape_cast %166 : vector<1x128x256xbf16> to vector<128x256xbf16>
    %cst_56 = arith.constant dense<0.000000e+00> : vector<16x256xf32>
    %168 = tpu.matmul %165, %167, %cst_56 {dimension_numbers = #tpu.dot_dimension_numbers<[1], [0], [0], [1], [0, 0, 1, 1], [], []>} : vector<16x128xbf16>, vector<128x256xbf16>, vector<16x256xf32> -> vector<16x256xf32>
    %c0_57 = arith.constant 0 : index
    %c0_58 = arith.constant 0 : index
    %c0_59 = arith.constant 0 : index
    %169 = vector.load %arg12[%c0_57, %c0_58, %c0_59] : memref<1x1x256xf32, #tpu.memory_space<vmem>>, vector<1x1x256xf32>
    %170 = vector.shape_cast %169 : vector<1x1x256xf32> to vector<1x256xf32>
    %171 = vector.broadcast %170 : vector<1x256xf32> to vector<16x256xf32>
    %172 = arith.addf %168, %171 : vector<16x256xf32>
    %173 = arith.mulf %172, %172 : vector<16x256xf32>
    %174 = arith.mulf %172, %173 : vector<16x256xf32>
    %cst_60 = arith.constant 4.471500e-02 : f32
    %175 = vector.broadcast %cst_60 : f32 to vector<16x256xf32>
    %176 = arith.mulf %175, %174 : vector<16x256xf32>
    %177 = arith.addf %172, %176 : vector<16x256xf32>
    %cst_61 = arith.constant 0.797884583 : f32
    %178 = vector.broadcast %cst_61 : f32 to vector<16x256xf32>
    %179 = arith.mulf %178, %177 : vector<16x256xf32>
    %180 = math.tanh %179 : vector<16x256xf32>
    %cst_62 = arith.constant 1.000000e+00 : f32
    %181 = vector.broadcast %cst_62 : f32 to vector<16x256xf32>
    %182 = arith.addf %181, %180 : vector<16x256xf32>
    %cst_63 = arith.constant 5.000000e-01 : f32
    %183 = vector.broadcast %cst_63 : f32 to vector<16x256xf32>
    %184 = arith.mulf %183, %182 : vector<16x256xf32>
    %185 = arith.mulf %172, %184 : vector<16x256xf32>
    %186 = arith.truncf %185 : vector<16x256xf32> to vector<16x256xbf16>
    %c0_64 = arith.constant 0 : index
    %c0_65 = arith.constant 0 : index
    %c0_66 = arith.constant 0 : index
    %187 = vector.load %arg13[%c0_64, %c0_65, %c0_66] : memref<1x256x128xbf16, #tpu.memory_space<vmem>>, vector<1x256x128xbf16>
    %188 = vector.shape_cast %187 : vector<1x256x128xbf16> to vector<256x128xbf16>
    %cst_67 = arith.constant dense<0.000000e+00> : vector<16x128xf32>
    %189 = tpu.matmul %186, %188, %cst_67 {dimension_numbers = #tpu.dot_dimension_numbers<[1], [0], [0], [1], [0, 0, 1, 1], [], []>} : vector<16x256xbf16>, vector<256x128xbf16>, vector<16x128xf32> -> vector<16x128xf32>
    %c0_68 = arith.constant 0 : index
    %c0_69 = arith.constant 0 : index
    %c0_70 = arith.constant 0 : index
    %190 = vector.load %arg14[%c0_68, %c0_69, %c0_70] : memref<1x1x128xf32, #tpu.memory_space<vmem>>, vector<1x1x128xf32>
    %191 = vector.shape_cast %190 : vector<1x1x128xf32> to vector<1x128xf32>
    %192 = vector.broadcast %191 : vector<1x128xf32> to vector<16x128xf32>
    %193 = arith.addf %189, %192 : vector<16x128xf32>
    %194 = arith.addf %193, %164 : vector<16x128xf32>
    %c0_71 = arith.constant 0 : index
    %c0_72 = arith.constant 0 : index
    %c0_73 = arith.constant 0 : index
    %195 = vector.load %arg15[%c0_71, %c0_72, %c0_73] : memref<1x1x128xf32, #tpu.memory_space<vmem>>, vector<1x1x128xf32>
    %196 = vector.shape_cast %195 : vector<1x1x128xf32> to vector<1x128xf32>
    %c0_74 = arith.constant 0 : index
    %c0_75 = arith.constant 0 : index
    %c0_76 = arith.constant 0 : index
    %197 = vector.load %arg16[%c0_74, %c0_75, %c0_76] : memref<1x1x128xf32, #tpu.memory_space<vmem>>, vector<1x1x128xf32>
    %198 = vector.shape_cast %197 : vector<1x1x128xf32> to vector<1x128xf32>
    %cst_77 = arith.constant dense<0.000000e+00> : vector<16xf32>
    %199 = vector.multi_reduction <add>, %194, %cst_77 [1] : vector<16x128xf32> to vector<16xf32>
    %200 = vector.shape_cast %199 : vector<16xf32> to vector<16x1xf32>
    %cst_78 = arith.constant 1.280000e+02 : f32
    %201 = vector.broadcast %cst_78 : f32 to vector<16x1xf32>
    %202 = arith.divf %200, %201 : vector<16x1xf32>
    %203 = vector.broadcast %202 : vector<16x1xf32> to vector<16x128xf32>
    %204 = arith.subf %194, %203 : vector<16x128xf32>
    %205 = arith.mulf %204, %204 : vector<16x128xf32>
    %cst_79 = arith.constant dense<0.000000e+00> : vector<16xf32>
    %206 = vector.multi_reduction <add>, %205, %cst_79 [1] : vector<16x128xf32> to vector<16xf32>
    %207 = vector.shape_cast %206 : vector<16xf32> to vector<16x1xf32>
    %cst_80 = arith.constant 1.280000e+02 : f32
    %208 = vector.broadcast %cst_80 : f32 to vector<16x1xf32>
    %209 = arith.divf %207, %208 : vector<16x1xf32>
    %210 = vector.broadcast %202 : vector<16x1xf32> to vector<16x128xf32>
    %211 = arith.subf %194, %210 : vector<16x128xf32>
    %cst_81 = arith.constant 9.99999996E-13 : f32
    %212 = vector.broadcast %cst_81 : f32 to vector<16x1xf32>
    %213 = arith.addf %209, %212 : vector<16x1xf32>
    %214 = math.rsqrt %213 : vector<16x1xf32>
    %215 = vector.broadcast %214 : vector<16x1xf32> to vector<16x128xf32>
    %216 = arith.mulf %211, %215 : vector<16x128xf32>
    %217 = vector.broadcast %196 : vector<1x128xf32> to vector<16x128xf32>
    %218 = arith.mulf %216, %217 : vector<16x128xf32>
    %219 = vector.broadcast %198 : vector<1x128xf32> to vector<16x128xf32>
    %220 = arith.addf %218, %219 : vector<16x128xf32>
    %c0_82 = arith.constant 0 : index
    %c0_83 = arith.constant 0 : index
    %221 = vector.load %arg20[%c0_82, %c0_83] : memref<16x128xf32, #tpu.memory_space<vmem>>, vector<16x128xf32>
    tpu.vector_store %arg20[%c0_82, %c0_83], %220 {strides = array<i32>} : memref<16x128xf32, #tpu.memory_space<vmem>>, vector<16x128xf32>,
    %c1_i32 = arith.constant 1 : i32
    %222 = arith.cmpi eq, %arg0, %c1_i32 : i32
    %223 = arith.extui %222 : i1 to i32
    %c0_i32_84 = arith.constant 0 : i32
    %224 = arith.cmpi ne, %223, %c0_i32_84 : i32
    scf.if %224 {
      %225 = arith.truncf %220 : vector<16x128xf32> to vector<16x128xbf16>
      %c0_85 = arith.constant 0 : index
      %c0_86 = arith.constant 0 : index
      %226 = vector.load %arg17[%c0_85, %c0_86] : memref<128x256xbf16, #tpu.memory_space<vmem>>, vector<128x256xbf16>
      %cst_87 = arith.constant dense<0.000000e+00> : vector<16x256xf32>
      %227 = tpu.matmul %225, %226, %cst_87 {dimension_numbers = #tpu.dot_dimension_numbers<[1], [0], [0], [1], [0, 0, 1, 1], [], []>} : vector<16x128xbf16>, vector<128x256xbf16>, vector<16x256xf32> -> vector<16x256xf32>
      %c0_88 = arith.constant 0 : index
      %c0_89 = arith.constant 0 : index
      %228 = vector.load %arg18[%c0_88, %c0_89] : memref<1x256xf32, #tpu.memory_space<vmem>>, vector<1x256xf32>
      %229 = vector.broadcast %228 : vector<1x256xf32> to vector<16x256xf32>
      %230 = arith.addf %227, %229 : vector<16x256xf32>
      %c0_90 = arith.constant 0 : index
      %c0_91 = arith.constant 0 : index
      %231 = vector.load %arg19[%c0_90, %c0_91] : memref<16x256xf32, #tpu.memory_space<vmem>>, vector<16x256xf32>
      tpu.vector_store %arg19[%c0_90, %c0_91], %230 {strides = array<i32>} : memref<16x256xf32, #tpu.memory_space<vmem>>, vector<16x256xf32>,
    } else {
    }
    return
  }
  func.func @transform_0(%arg0: i32) -> (i32, i32) {
    %c0_i32 = arith.constant 0 : i32
    %c0_i32_0 = arith.constant 0 : i32
    %c0_i32_1 = arith.constant 0 : i32
    return %c0_i32, %c0_i32_0 : i32, i32
  }
  func.func @transform_1(%arg0: i32) -> (i32, i32, i32) {
    %c0_i32 = arith.constant 0 : i32
    %c0_i32_0 = arith.constant 0 : i32
    %c0_i32_1 = arith.constant 0 : i32
    %c0_i32_2 = arith.constant 0 : i32
    return %c0_i32, %c0_i32_0, %c0_i32_1 : i32, i32, i32
  }
  func.func @transform_2(%arg0: i32) -> (i32, i32) {
    %c0_i32 = arith.constant 0 : i32
    %c0_i32_0 = arith.constant 0 : i32
    %c0_i32_1 = arith.constant 0 : i32
    return %c0_i32, %c0_i32_0 : i32, i32
  }
  func.func @transform_3(%arg0: i32) -> (i32, i32) {
    %c0_i32 = arith.constant 0 : i32
    %c0_i32_0 = arith.constant 0 : i32
    %c0_i32_1 = arith.constant 0 : i32
    return %c0_i32, %c0_i32_0 : i32, i32
  }
  func.func @transform_4(%arg0: i32) -> (i32, i32, i32) {
    %c0_i32 = arith.constant 0 : i32
    %c0_i32_0 = arith.constant 0 : i32
    %c0_i32_1 = arith.constant 0 : i32
    return %arg0, %c0_i32, %c0_i32_0 : i32, i32, i32
  }
  func.func @transform_5(%arg0: i32) -> (i32, i32, i32) {
    %c0_i32 = arith.constant 0 : i32
    %c0_i32_0 = arith.constant 0 : i32
    %c0_i32_1 = arith.constant 0 : i32
    return %arg0, %c0_i32, %c0_i32_0 : i32, i32, i32
  }
  func.func @transform_6(%arg0: i32) -> (i32, i32, i32) {
    %c0_i32 = arith.constant 0 : i32
    %c0_i32_0 = arith.constant 0 : i32
    %c0_i32_1 = arith.constant 0 : i32
    return %arg0, %c0_i32, %c0_i32_0 : i32, i32, i32
  }
  func.func @transform_7(%arg0: i32) -> (i32, i32, i32) {
    %c0_i32 = arith.constant 0 : i32
    %c0_i32_0 = arith.constant 0 : i32
    %c0_i32_1 = arith.constant 0 : i32
    return %arg0, %c0_i32, %c0_i32_0 : i32, i32, i32
  }
  func.func @transform_8(%arg0: i32) -> (i32, i32, i32) {
    %c0_i32 = arith.constant 0 : i32
    %c0_i32_0 = arith.constant 0 : i32
    %c0_i32_1 = arith.constant 0 : i32
    return %arg0, %c0_i32, %c0_i32_0 : i32, i32, i32
  }
  func.func @transform_9(%arg0: i32) -> (i32, i32, i32) {
    %c0_i32 = arith.constant 0 : i32
    %c0_i32_0 = arith.constant 0 : i32
    %c0_i32_1 = arith.constant 0 : i32
    return %arg0, %c0_i32, %c0_i32_0 : i32, i32, i32
  }
  func.func @transform_10(%arg0: i32) -> (i32, i32, i32) {
    %c0_i32 = arith.constant 0 : i32
    %c0_i32_0 = arith.constant 0 : i32
    %c0_i32_1 = arith.constant 0 : i32
    return %arg0, %c0_i32, %c0_i32_0 : i32, i32, i32
  }
  func.func @transform_11(%arg0: i32) -> (i32, i32, i32) {
    %c0_i32 = arith.constant 0 : i32
    %c0_i32_0 = arith.constant 0 : i32
    %c0_i32_1 = arith.constant 0 : i32
    return %arg0, %c0_i32, %c0_i32_0 : i32, i32, i32
  }
  func.func @transform_12(%arg0: i32) -> (i32, i32, i32) {
    %c0_i32 = arith.constant 0 : i32
    %c0_i32_0 = arith.constant 0 : i32
    %c0_i32_1 = arith.constant 0 : i32
    return %arg0, %c0_i32, %c0_i32_0 : i32, i32, i32
  }
  func.func @transform_13(%arg0: i32) -> (i32, i32, i32) {
    %c0_i32 = arith.constant 0 : i32
    %c0_i32_0 = arith.constant 0 : i32
    %c0_i32_1 = arith.constant 0 : i32
    return %arg0, %c0_i32, %c0_i32_0 : i32, i32, i32
  }
  func.func @transform_14(%arg0: i32) -> (i32, i32, i32) {
    %c0_i32 = arith.constant 0 : i32
    %c0_i32_0 = arith.constant 0 : i32
    %c0_i32_1 = arith.constant 0 : i32
    return %arg0, %c0_i32, %c0_i32_0 : i32, i32, i32
  }
  func.func @transform_15(%arg0: i32) -> (i32, i32, i32) {
    %c0_i32 = arith.constant 0 : i32
    %c0_i32_0 = arith.constant 0 : i32
    %c0_i32_1 = arith.constant 0 : i32
    return %arg0, %c0_i32, %c0_i32_0 : i32, i32, i32
  }
  func.func @transform_16(%arg0: i32) -> (i32, i32) {
    %c0_i32 = arith.constant 0 : i32
    %c0_i32_0 = arith.constant 0 : i32
    %c0_i32_1 = arith.constant 0 : i32
    return %c0_i32, %c0_i32_0 : i32, i32
  }
  func.func @transform_17(%arg0: i32) -> (i32, i32) {
    %c0_i32 = arith.constant 0 : i32
    %c0_i32_0 = arith.constant 0 : i32
    %c0_i32_1 = arith.constant 0 : i32
    return %c0_i32, %c0_i32_0 : i32, i32
  }
  func.func @transform_18(%arg0: i32) -> (i32, i32) {
    %c0_i32 = arith.constant 0 : i32
    %c0_i32_0 = arith.constant 0 : i32
    %c0_i32_1 = arith.constant 0 : i32
    return %c0_i32, %c0_i32_0 : i32, i32
  }
}

</mosaic_0001>

<llo_original>
// kernel: text_encoder_forward.1
$region0: #{text_encoder_forward.1}
  #allocation0 [shape = 'u32[]', space=smem, size = 0x4, offset = 0x4, fixed_abs, tag = 'smem constant byte address 0x4 - core index']
  #allocation1 [shape = 'u32[144,128]{1,0:T(1,128)}', space=vmem, size = 0x12000, scoped, tag = 'internal scratch']
  #allocation2 [shape = 'f32[16,128]{1,0:T(8,128)}', space=vmem, size = 0x2000, scoped, tag = 'scratch operand']
  %s0 = inlined_call_operand.vmem [shape: f32[16,128], index: 0, kind: input, shape index: {}]
  %s1 = inlined_call_operand.vmem [shape: f32[2,1,8], index: 1, kind: input, shape index: {}]
  %s2 = inlined_call_operand.vmem [shape: f32[1,128], index: 2, kind: input, shape index: {}]
  %s3 = inlined_call_operand.vmem [shape: f32[1,128], index: 3, kind: input, shape index: {}]
  %s4 = inlined_call_operand.hbm [shape: bf16[2,128,384], index: 4, kind: input, shape index: {}]
  %s5 = inlined_call_operand.vmem [shape: f32[2,1,384], index: 5, kind: input, shape index: {}]
  %s6 = inlined_call_operand.hbm [shape: bf16[2,128,128], index: 6, kind: input, shape index: {}]
  %s7 = inlined_call_operand.vmem [shape: f32[2,1,128], index: 7, kind: input, shape index: {}]
  %s8 = inlined_call_operand.vmem [shape: f32[2,1,128], index: 8, kind: input, shape index: {}]
  %s9 = inlined_call_operand.vmem [shape: f32[2,1,128], index: 9, kind: input, shape index: {}]
  %s10 = inlined_call_operand.vmem [shape: bf16[2,128,256], index: 10, kind: input, shape index: {}]
  %s11 = inlined_call_operand.vmem [shape: f32[2,1,256], index: 11, kind: input, shape index: {}]
  %s12 = inlined_call_operand.hbm [shape: bf16[2,256,128], index: 12, kind: input, shape index: {}]
  %s13 = inlined_call_operand.vmem [shape: f32[2,1,128], index: 13, kind: input, shape index: {}]
  %s14 = inlined_call_operand.vmem [shape: f32[2,1,128], index: 14, kind: input, shape index: {}]
  %s15 = inlined_call_operand.vmem [shape: f32[2,1,128], index: 15, kind: input, shape index: {}]
  %s16 = inlined_call_operand.hbm [shape: bf16[128,256], index: 16, kind: input, shape index: {}]
  %s17 = inlined_call_operand.vmem [shape: f32[1,256], index: 17, kind: input, shape index: {}]
  %s18 = inlined_call_operand.hbm [shape: f32[16,256], index: 18, kind: output, shape index: {}]
  %s19 = sld [smem:[#allocation0]]
  $region129: #{text_encoder_forward.1} parent=0
    _
  %s21 = ssub.s32 1, %s19
  %s22 = scalar_select 0, %s21, %s19
  $region1: #{text_encoder_forward.1} parent=0
    #allocation3 [shape = 'u8[196608]{0}', space=vmem, size = 0x30000, scoped, tag = 'input window, operand 4']
    #allocation4 [shape = 's32[2]{0}', space=sflag, size = 0x8, scoped, tag = 'scoped memory for text_encoder_forward.1']
    #allocation5 [shape = 's32[2]{0}', space=sflag, size = 0x8, scoped, tag = 'scoped memory for text_encoder_forward.1']
    #allocation6 [shape = 'u8[65536]{0}', space=vmem, size = 0x10000, scoped, tag = 'input window, operand 6']
    #allocation7 [shape = 's32[2]{0}', space=sflag, size = 0x8, scoped, tag = 'scoped memory for text_encoder_forward.1']
    #allocation8 [shape = 'u8[131072]{0}', space=vmem, size = 0x20000, scoped, tag = 'input window, operand 12']
    #allocation9 [shape = 'u8[65536]{0}', space=vmem, size = 0x10000, scoped, tag = 'input window, operand 16, single buffered']
    #allocation10 [shape = 's32[1]{0}', space=sflag, size = 0x4, scoped, tag = 'scoped memory for text_encoder_forward.1']
    #allocation11 [shape = 'u8[16384]{0}', space=vmem, size = 0x4000, scoped, tag = 'output window, operand 0, single buffered']
    %23 = vsyncpa [#allocation4], 0
    %s24 = scalar_lea.sflag [#allocation4], 1
    %25 = vsyncpa %s24, 0
    %26 = vsyncpa [#allocation7], 0
    %s27 = scalar_lea.sflag [#allocation7], 1
    %28 = vsyncpa %s27, 0
    %29 = vsyncpa [#allocation10], 0
    %30 = vsyncpa [#allocation5], 0
    loop: start=0, step=1, limit=4
    $region2: #{text_encoder_forward.1} parent=1 // loop_pre_header
      _
    $region3: #{text_encoder_forward.1} parent=1 // loop_header
      %s32 = sphi 0, %s36
      %p33 = scmp.ge.s32.totalorder %s32, 4
      %s40 = sphi 0, %s40
      %s42 = sphi 0, %s40
      %s43 = sphi 0, %s42
      %s57 = sphi 0, %s43
      %s61 = sphi 0, %s61
      %s63 = sphi 0, %s61
      %s64 = sphi 0, %s63
      %s78 = sphi 0, %s64
      %s82 = sphi 0, %s82
      %s84 = sphi 0, %s82
      %s85 = sphi 0, %s84
      %s99 = sphi 0, %s85
      %s103 = sphi 0, %s103
      %s105 = sphi 0, %s103
      %s106 = sphi 0, %s105
      %s120 = sphi 0, %s106
      %s126 = sphi 0, %s128
      %s129 = sphi 0, %s126
      %s130 = sphi 0, %s129
      %s146 = sphi 0, %s130
      %s152 = sphi 0, %s154
      %s155 = sphi 0, %s152
      %s156 = sphi 0, %s155
      %s172 = sphi 0, %s156
      %s178 = sphi 0, %s180
      %s181 = sphi 0, %s178
      %s182 = sphi 0, %s181
      %s198 = sphi 0, %s182
      %s204 = sphi 0, %s206
      %s207 = sphi 0, %s204
      %s208 = sphi 0, %s207
      %s224 = sphi 0, %s208
      %s230 = sphi 0, %s232
      %s233 = sphi 0, %s230
      %s234 = sphi 0, %s233
      %s250 = sphi 0, %s234
      %s256 = sphi 0, %s258
      %s259 = sphi 0, %s256
      %s260 = sphi 0, %s259
      %s276 = sphi 0, %s260
      %s282 = sphi 0, %s284
      %s285 = sphi 0, %s282
      %s286 = sphi 0, %s285
      %s302 = sphi 0, %s286
      %s308 = sphi 0, %s310
      %s311 = sphi 0, %s308
      %s312 = sphi 0, %s311
      %s328 = sphi 0, %s312
      %s334 = sphi 0, %s336
      %s337 = sphi 0, %s334
      %s338 = sphi 0, %s337
      %s354 = sphi 0, %s338
      %s360 = sphi 0, %s362
      %s363 = sphi 0, %s360
      %s364 = sphi 0, %s363
      %s380 = sphi 0, %s364
      %s386 = sphi 0, %s388
      %s389 = sphi 0, %s386
      %s390 = sphi 0, %s389
      %s406 = sphi 0, %s390
      %s412 = sphi 0, %s414
      %s415 = sphi 0, %s412
      %s416 = sphi 0, %s415
      %s432 = sphi 0, %s416
      %s436 = sphi 0, %s436
      %s438 = sphi 0, %s436
      %s439 = sphi 0, %s438
      %s453 = sphi 0, %s439
      %s457 = sphi 0, %s457
      %s459 = sphi 0, %s457
      %s460 = sphi 0, %s459
      %s474 = sphi 0, %s460
      %s478 = sphi 0, %s478
      %s480 = sphi 0, %s478
      %s481 = sphi 0, %s480
      %s495 = sphi 0, %s481
    $region4: #{text_encoder_forward.1} parent=1 // loop_header_branch
      %35 = sbr.rel (%p33) target = $region8
    $region5: #{text_encoder_forward.1} parent=1 // loop_body
      %s37 = ssub.s32 %s32, 1
      %s38 = ssub.s32 %s32, 2
      %s39 = sadd.s32 %s32, 1
      %s41 = sadd.s32 %s40, 1
      %p44 = scmp.eq.s32.totalorder %s32, 1
      %p45 = scmp.ne.s32.totalorder %s40, %s42
      %p46 = scmp.eq.s32.totalorder %s32, 0
      %p47 = por %p45, %p46
      %p48 = scmp.ne.s32.totalorder %s40, %s42
      %p49 = scmp.eq.s32.totalorder %s37, 1
      %p50 = por %p48, %p49
      %p51 = scmp.ne.s32.totalorder %s42, %s43
      %p52 = scmp.eq.s32.totalorder %s37, 0
      %p53 = por %p51, %p52
      %p54 = scmp.ne.s32.totalorder %s42, %s43
      %p55 = scmp.eq.s32.totalorder %s38, 1
      %p56 = por %p54, %p55
      %p58 = scmp.ne.s32.totalorder %s43, %s57
      %p59 = scmp.eq.s32.totalorder %s38, 0
      %p60 = por %p58, %p59
      %s62 = sadd.s32 %s61, 1
      %p65 = scmp.eq.s32.totalorder %s32, 1
      %p66 = scmp.ne.s32.totalorder %s61, %s63
      %p67 = scmp.eq.s32.totalorder %s32, 0
      %p68 = por %p66, %p67
      %p69 = scmp.ne.s32.totalorder %s61, %s63
      %p70 = scmp.eq.s32.totalorder %s37, 1
      %p71 = por %p69, %p70
      %p72 = scmp.ne.s32.totalorder %s63, %s64
      %p73 = scmp.eq.s32.totalorder %s37, 0
      %p74 = por %p72, %p73
      %p75 = scmp.ne.s32.totalorder %s63, %s64
      %p76 = scmp.eq.s32.totalorder %s38, 1
      %p77 = por %p75, %p76
      %p79 = scmp.ne.s32.totalorder %s64, %s78
      %p80 = scmp.eq.s32.totalorder %s38, 0
      %p81 = por %p79, %p80
      %s83 = sadd.s32 %s82, 1
      %p86 = scmp.eq.s32.totalorder %s32, 1
      %p87 = scmp.ne.s32.totalorder %s82, %s84
      %p88 = scmp.eq.s32.totalorder %s32, 0
      %p89 = por %p87, %p88
      %p90 = scmp.ne.s32.totalorder %s82, %s84
      %p91 = scmp.eq.s32.totalorder %s37, 1
      %p92 = por %p90, %p91
      %p93 = scmp.ne.s32.totalorder %s84, %s85
      %p94 = scmp.eq.s32.totalorder %s37, 0
      %p95 = por %p93, %p94
      %p96 = scmp.ne.s32.totalorder %s84, %s85
      %p97 = scmp.eq.s32.totalorder %s38, 1
      %p98 = por %p96, %p97
      %p100 = scmp.ne.s32.totalorder %s85, %s99
      %p101 = scmp.eq.s32.totalorder %s38, 0
      %p102 = por %p100, %p101
      %s104 = sadd.s32 %s103, 1
      %p107 = scmp.eq.s32.totalorder %s32, 1
      %p108 = scmp.ne.s32.totalorder %s103, %s105
      %p109 = scmp.eq.s32.totalorder %s32, 0
      %p110 = por %p108, %p109
      %p111 = scmp.ne.s32.totalorder %s103, %s105
      %p112 = scmp.eq.s32.totalorder %s37, 1
      %p113 = por %p111, %p112
      %p114 = scmp.ne.s32.totalorder %s105, %s106
      %p115 = scmp.eq.s32.totalorder %s37, 0
      %p116 = por %p114, %p115
      %p117 = scmp.ne.s32.totalorder %s105, %s106
      %p118 = scmp.eq.s32.totalorder %s38, 1
      %p119 = por %p117, %p118
      %p121 = scmp.ne.s32.totalorder %s106, %s120
      %p122 = scmp.eq.s32.totalorder %s38, 0
      %p123 = por %p121, %p122
      %s124 = ssub.s32 %s32, %s39
      %p125 = scmp.eq.s32.totalorder %s124, 0
      %s127 = sadd.s32 %s126, 1
      %s128 = scalar_select %p125, %s126, %s127
      %p131 = pneg %p125
      %p132 = scmp.eq.s32.totalorder %s32, 1
      %p133 = por %p131, %p132
      %p134 = scmp.ne.s32.totalorder %s126, %s129
      %p135 = scmp.eq.s32.totalorder %s32, 0
      %p136 = por %p134, %p135
      %p137 = scmp.ne.s32.totalorder %s126, %s129
      %p138 = scmp.eq.s32.totalorder %s37, 1
      %p139 = por %p137, %p138
      %p140 = scmp.ne.s32.totalorder %s129, %s130
      %p141 = scmp.eq.s32.totalorder %s37, 0
      %p142 = por %p140, %p141
      %p143 = scmp.ne.s32.totalorder %s129, %s130
      %p144 = scmp.eq.s32.totalorder %s38, 1
      %p145 = por %p143, %p144
      %p147 = scmp.ne.s32.totalorder %s130, %s146
      %p148 = scmp.eq.s32.totalorder %s38, 0
      %p149 = por %p147, %p148
      %s150 = ssub.s32 %s32, %s39
      %p151 = scmp.eq.s32.totalorder %s150, 0
      %s153 = sadd.s32 %s152, 1
      %s154 = scalar_select %p151, %s152, %s153
      %p157 = pneg %p151
      %p158 = scmp.eq.s32.totalorder %s32, 1
      %p159 = por %p157, %p158
      %p160 = scmp.ne.s32.totalorder %s152, %s155
      %p161 = scmp.eq.s32.totalorder %s32, 0
      %p162 = por %p160, %p161
      %p163 = scmp.ne.s32.totalorder %s152, %s155
      %p164 = scmp.eq.s32.totalorder %s37, 1
      %p165 = por %p163, %p164
      %p166 = scmp.ne.s32.totalorder %s155, %s156
      %p167 = scmp.eq.s32.totalorder %s37, 0
      %p168 = por %p166, %p167
      %p169 = scmp.ne.s32.totalorder %s155, %s156
      %p170 = scmp.eq.s32.totalorder %s38, 1
      %p171 = por %p169, %p170
      %p173 = scmp.ne.s32.totalorder %s156, %s172
      %p174 = scmp.eq.s32.totalorder %s38, 0
      %p175 = por %p173, %p174
      %s176 = ssub.s32 %s32, %s39
      %p177 = scmp.eq.s32.totalorder %s176, 0
      %s179 = sadd.s32 %s178, 1
      %s180 = scalar_select %p177, %s178, %s179
      %p183 = pneg %p177
      %p184 = scmp.eq.s32.totalorder %s32, 1
      %p185 = por %p183, %p184
      %p186 = scmp.ne.s32.totalorder %s178, %s181
      %p187 = scmp.eq.s32.totalorder %s32, 0
      %p188 = por %p186, %p187
      %p189 = scmp.ne.s32.totalorder %s178, %s181
      %p190 = scmp.eq.s32.totalorder %s37, 1
      %p191 = por %p189, %p190
      %p192 = scmp.ne.s32.totalorder %s181, %s182
      %p193 = scmp.eq.s32.totalorder %s37, 0
      %p194 = por %p192, %p193
      %p195 = scmp.ne.s32.totalorder %s181, %s182
      %p196 = scmp.eq.s32.totalorder %s38, 1
      %p197 = por %p195, %p196
      %p199 = scmp.ne.s32.totalorder %s182, %s198
      %p200 = scmp.eq.s32.totalorder %s38, 0
      %p201 = por %p199, %p200
      %s202 = ssub.s32 %s32, %s39
      %p203 = scmp.eq.s32.totalorder %s202, 0
      %s205 = sadd.s32 %s204, 1
      %s206 = scalar_select %p203, %s204, %s205
      %p209 = pneg %p203
      %p210 = scmp.eq.s32.totalorder %s32, 1
      %p211 = por %p209, %p210
      %p212 = scmp.ne.s32.totalorder %s204, %s207
      %p213 = scmp.eq.s32.totalorder %s32, 0
      %p214 = por %p212, %p213
      %p215 = scmp.ne.s32.totalorder %s204, %s207
      %p216 = scmp.eq.s32.totalorder %s37, 1
      %p217 = por %p215, %p216
      %p218 = scmp.ne.s32.totalorder %s207, %s208
      %p219 = scmp.eq.s32.totalorder %s37, 0
      %p220 = por %p218, %p219
      %p221 = scmp.ne.s32.totalorder %s207, %s208
      %p222 = scmp.eq.s32.totalorder %s38, 1
      %p223 = por %p221, %p222
      %p225 = scmp.ne.s32.totalorder %s208, %s224
      %p226 = scmp.eq.s32.totalorder %s38, 0
      %p227 = por %p225, %p226
      %s228 = ssub.s32 %s32, %s39
      %p229 = scmp.eq.s32.totalorder %s228, 0
      %s231 = sadd.s32 %s230, 1
      %s232 = scalar_select %p229, %s230, %s231
      %p235 = pneg %p229
      %p236 = scmp.eq.s32.totalorder %s32, 1
      %p237 = por %p235, %p236
      %p238 = scmp.ne.s32.totalorder %s230, %s233
      %p239 = scmp.eq.s32.totalorder %s32, 0
      %p240 = por %p238, %p239
      %p241 = scmp.ne.s32.totalorder %s230, %s233
      %p242 = scmp.eq.s32.totalorder %s37, 1
      %p243 = por %p241, %p242
      %p244 = scmp.ne.s32.totalorder %s233, %s234
      %p245 = scmp.eq.s32.totalorder %s37, 0
      %p246 = por %p244, %p245
      %p247 = scmp.ne.s32.totalorder %s233, %s234
      %p248 = scmp.eq.s32.totalorder %s38, 1
      %p249 = por %p247, %p248
      %p251 = scmp.ne.s32.totalorder %s234, %s250
      %p252 = scmp.eq.s32.totalorder %s38, 0
      %p253 = por %p251, %p252
      %s254 = ssub.s32 %s32, %s39
      %p255 = scmp.eq.s32.totalorder %s254, 0
      %s257 = sadd.s32 %s256, 1
      %s258 = scalar_select %p255, %s256, %s257
      %p261 = pneg %p255
      %p262 = scmp.eq.s32.totalorder %s32, 1
      %p263 = por %p261, %p262
      %p264 = scmp.ne.s32.totalorder %s256, %s259
      %p265 = scmp.eq.s32.totalorder %s32, 0
      %p266 = por %p264, %p265
      %p267 = scmp.ne.s32.totalorder %s256, %s259
      %p268 = scmp.eq.s32.totalorder %s37, 1
      %p269 = por %p267, %p268
      %p270 = scmp.ne.s32.totalorder %s259, %s260
      %p271 = scmp.eq.s32.totalorder %s37, 0
      %p272 = por %p270, %p271
      %p273 = scmp.ne.s32.totalorder %s259, %s260
      %p274 = scmp.eq.s32.totalorder %s38, 1
      %p275 = por %p273, %p274
      %p277 = scmp.ne.s32.totalorder %s260, %s276
      %p278 = scmp.eq.s32.totalorder %s38, 0
      %p279 = por %p277, %p278
      %s280 = ssub.s32 %s32, %s39
      %p281 = scmp.eq.s32.totalorder %s280, 0
      %s283 = sadd.s32 %s282, 1
      %s284 = scalar_select %p281, %s282, %s283
      %p287 = pneg %p281
      %p288 = scmp.eq.s32.totalorder %s32, 1
      %p289 = por %p287, %p288
      %p290 = scmp.ne.s32.totalorder %s282, %s285
      %p291 = scmp.eq.s32.totalorder %s32, 0
      %p292 = por %p290, %p291
      %p293 = scmp.ne.s32.totalorder %s282, %s285
      %p294 = scmp.eq.s32.totalorder %s37, 1
      %p295 = por %p293, %p294
      %p296 = scmp.ne.s32.totalorder %s285, %s286
      %p297 = scmp.eq.s32.totalorder %s37, 0
      %p298 = por %p296, %p297
      %p299 = scmp.ne.s32.totalorder %s285, %s286
      %p300 = scmp.eq.s32.totalorder %s38, 1
      %p301 = por %p299, %p300
      %p303 = scmp.ne.s32.totalorder %s286, %s302
      %p304 = scmp.eq.s32.totalorder %s38, 0
      %p305 = por %p303, %p304
      %s306 = ssub.s32 %s32, %s39
      %p307 = scmp.eq.s32.totalorder %s306, 0
      %s309 = sadd.s32 %s308, 1
      %s310 = scalar_select %p307, %s308, %s309
      %p313 = pneg %p307
      %p314 = scmp.eq.s32.totalorder %s32, 1
      %p315 = por %p313, %p314
      %p316 = scmp.ne.s32.totalorder %s308, %s311
      %p317 = scmp.eq.s32.totalorder %s32, 0
      %p318 = por %p316, %p317
      %p319 = scmp.ne.s32.totalorder %s308, %s311
      %p320 = scmp.eq.s32.totalorder %s37, 1
      %p321 = por %p319, %p320
      %p322 = scmp.ne.s32.totalorder %s311, %s312
      %p323 = scmp.eq.s32.totalorder %s37, 0
      %p324 = por %p322, %p323
      %p325 = scmp.ne.s32.totalorder %s311, %s312
      %p326 = scmp.eq.s32.totalorder %s38, 1
      %p327 = por %p325, %p326
      %p329 = scmp.ne.s32.totalorder %s312, %s328
      %p330 = scmp.eq.s32.totalorder %s38, 0
      %p331 = por %p329, %p330
      %s332 = ssub.s32 %s32, %s39
      %p333 = scmp.eq.s32.totalorder %s332, 0
      %s335 = sadd.s32 %s334, 1
      %s336 = scalar_select %p333, %s334, %s335
      %p339 = pneg %p333
      %p340 = scmp.eq.s32.totalorder %s32, 1
      %p341 = por %p339, %p340
      %p342 = scmp.ne.s32.totalorder %s334, %s337
      %p343 = scmp.eq.s32.totalorder %s32, 0
      %p344 = por %p342, %p343
      %p345 = scmp.ne.s32.totalorder %s334, %s337
      %p346 = scmp.eq.s32.totalorder %s37, 1
      %p347 = por %p345, %p346
      %p348 = scmp.ne.s32.totalorder %s337, %s338
      %p349 = scmp.eq.s32.totalorder %s37, 0
      %p350 = por %p348, %p349
      %p351 = scmp.ne.s32.totalorder %s337, %s338
      %p352 = scmp.eq.s32.totalorder %s38, 1
      %p353 = por %p351, %p352
      %p355 = scmp.ne.s32.totalorder %s338, %s354
      %p356 = scmp.eq.s32.totalorder %s38, 0
      %p357 = por %p355, %p356
      %s358 = ssub.s32 %s32, %s39
      %p359 = scmp.eq.s32.totalorder %s358, 0
      %s361 = sadd.s32 %s360, 1
      %s362 = scalar_select %p359, %s360, %s361
      %p365 = pneg %p359
      %p366 = scmp.eq.s32.totalorder %s32, 1
      %p367 = por %p365, %p366
      %p368 = scmp.ne.s32.totalorder %s360, %s363
      %p369 = scmp.eq.s32.totalorder %s32, 0
      %p370 = por %p368, %p369
      %p371 = scmp.ne.s32.totalorder %s360, %s363
      %p372 = scmp.eq.s32.totalorder %s37, 1
      %p373 = por %p371, %p372
      %p374 = scmp.ne.s32.totalorder %s363, %s364
      %p375 = scmp.eq.s32.totalorder %s37, 0
      %p376 = por %p374, %p375
      %p377 = scmp.ne.s32.totalorder %s363, %s364
      %p378 = scmp.eq.s32.totalorder %s38, 1
      %p379 = por %p377, %p378
      %p381 = scmp.ne.s32.totalorder %s364, %s380
      %p382 = scmp.eq.s32.totalorder %s38, 0
      %p383 = por %p381, %p382
      %s384 = ssub.s32 %s32, %s39
      %p385 = scmp.eq.s32.totalorder %s384, 0
      %s387 = sadd.s32 %s386, 1
      %s388 = scalar_select %p385, %s386, %s387
      %p391 = pneg %p385
      %p392 = scmp.eq.s32.totalorder %s32, 1
      %p393 = por %p391, %p392
      %p394 = scmp.ne.s32.totalorder %s386, %s389
      %p395 = scmp.eq.s32.totalorder %s32, 0
      %p396 = por %p394, %p395
      %p397 = scmp.ne.s32.totalorder %s386, %s389
      %p398 = scmp.eq.s32.totalorder %s37, 1
      %p399 = por %p397, %p398
      %p400 = scmp.ne.s32.totalorder %s389, %s390
      %p401 = scmp.eq.s32.totalorder %s37, 0
      %p402 = por %p400, %p401
      %p403 = scmp.ne.s32.totalorder %s389, %s390
      %p404 = scmp.eq.s32.totalorder %s38, 1
      %p405 = por %p403, %p404
      %p407 = scmp.ne.s32.totalorder %s390, %s406
      %p408 = scmp.eq.s32.totalorder %s38, 0
      %p409 = por %p407, %p408
      %s410 = ssub.s32 %s32, %s39
      %p411 = scmp.eq.s32.totalorder %s410, 0
      %s413 = sadd.s32 %s412, 1
      %s414 = scalar_select %p411, %s412, %s413
      %p417 = pneg %p411
      %p418 = scmp.eq.s32.totalorder %s32, 1
      %p419 = por %p417, %p418
      %p420 = scmp.ne.s32.totalorder %s412, %s415
      %p421 = scmp.eq.s32.totalorder %s32, 0
      %p422 = por %p420, %p421
      %p423 = scmp.ne.s32.totalorder %s412, %s415
      %p424 = scmp.eq.s32.totalorder %s37, 1
      %p425 = por %p423, %p424
      %p426 = scmp.ne.s32.totalorder %s415, %s416
      %p427 = scmp.eq.s32.totalorder %s37, 0
      %p428 = por %p426, %p427
      %p429 = scmp.ne.s32.totalorder %s415, %s416
      %p430 = scmp.eq.s32.totalorder %s38, 1
      %p431 = por %p429, %p430
      %p433 = scmp.ne.s32.totalorder %s416, %s432
      %p434 = scmp.eq.s32.totalorder %s38, 0
      %p435 = por %p433, %p434
      %s437 = sadd.s32 %s436, 1
      %p440 = scmp.eq.s32.totalorder %s32, 1
      %p441 = scmp.ne.s32.totalorder %s436, %s438
      %p442 = scmp.eq.s32.totalorder %s32, 0
      %p443 = por %p441, %p442
      %p444 = scmp.ne.s32.totalorder %s436, %s438
      %p445 = scmp.eq.s32.totalorder %s37, 1
      %p446 = por %p444, %p445
      %p447 = scmp.ne.s32.totalorder %s438, %s439
      %p448 = scmp.eq.s32.totalorder %s37, 0
      %p449 = por %p447, %p448
      %p450 = scmp.ne.s32.totalorder %s438, %s439
      %p451 = scmp.eq.s32.totalorder %s38, 1
      %p452 = por %p450, %p451
      %p454 = scmp.ne.s32.totalorder %s439, %s453
      %p455 = scmp.eq.s32.totalorder %s38, 0
      %p456 = por %p454, %p455
      %s458 = sadd.s32 %s457, 1
      %p461 = scmp.eq.s32.totalorder %s32, 1
      %p462 = scmp.ne.s32.totalorder %s457, %s459
      %p463 = scmp.eq.s32.totalorder %s32, 0
      %p464 = por %p462, %p463
      %p465 = scmp.ne.s32.totalorder %s457, %s459
      %p466 = scmp.eq.s32.totalorder %s37, 1
      %p467 = por %p465, %p466
      %p468 = scmp.ne.s32.totalorder %s459, %s460
      %p469 = scmp.eq.s32.totalorder %s37, 0
      %p470 = por %p468, %p469
      %p471 = scmp.ne.s32.totalorder %s459, %s460
      %p472 = scmp.eq.s32.totalorder %s38, 1
      %p473 = por %p471, %p472
      %p475 = scmp.ne.s32.totalorder %s460, %s474
      %p476 = scmp.eq.s32.totalorder %s38, 0
      %p477 = por %p475, %p476
      %s479 = sadd.s32 %s478, 1
      %p482 = scmp.eq.s32.totalorder %s32, 1
      %p483 = scmp.ne.s32.totalorder %s478, %s480
      %p484 = scmp.eq.s32.totalorder %s32, 0
      %p485 = por %p483, %p484
      %p486 = scmp.ne.s32.totalorder %s478, %s480
      %p487 = scmp.eq.s32.totalorder %s37, 1
      %p488 = por %p486, %p487
      %p489 = scmp.ne.s32.totalorder %s480, %s481
      %p490 = scmp.eq.s32.totalorder %s37, 0
      %p491 = por %p489, %p490
      %p492 = scmp.ne.s32.totalorder %s480, %s481
      %p493 = scmp.eq.s32.totalorder %s38, 1
      %p494 = por %p492, %p493
      %p496 = scmp.ne.s32.totalorder %s481, %s495
      %p497 = scmp.eq.s32.totalorder %s38, 0
      %p498 = por %p496, %p497
      %p499 = scmp.le.s32.totalorder 1, %s32
      %p500 = scmp.lt.s32.totalorder %s32, 3
      %p501 = pnand %p499, %p500
      %p502 = pneg %p501
      // Predicated region
      $region9: #{text_encoder_forward.1} parent=5 // pred_check
        _
      $region10: #{text_encoder_forward.1} parent=5 // pred_check_branch
        %504 = sbr.rel (%p501) target = $region12
      $region11: #{text_encoder_forward.1} parent=5 // pred_region
        %s505 = ssub.s32 %s32, 1
        // Predicated region
        $region13: #{text_encoder_forward.1} parent=11 // pred_check
          %p506 = pneg %p53
        $region14: #{text_encoder_forward.1} parent=11 // pred_check_branch
          %508 = sbr.rel (%p506) target = $region16
        $region15: #{text_encoder_forward.1} parent=11 // pred_region
          _
        $region16: #{text_encoder_forward.1} parent=11 // pred_fallthru
          _
        // Predicated region
        $region17: #{text_encoder_forward.1} parent=11 // pred_check
          %p509 = pneg %p74
        $region18: #{text_encoder_forward.1} parent=11 // pred_check_branch
          %511 = sbr.rel (%p509) target = $region20
        $region19: #{text_encoder_forward.1} parent=11 // pred_region
          _
        $region20: #{text_encoder_forward.1} parent=11 // pred_fallthru
          _
        // Predicated region
        $region21: #{text_encoder_forward.1} parent=11 // pred_check
          %p512 = pneg %p95
        $region22: #{text_encoder_forward.1} parent=11 // pred_check_branch
          %514 = sbr.rel (%p512) target = $region24
        $region23: #{text_encoder_forward.1} parent=11 // pred_region
          _
        $region24: #{text_encoder_forward.1} parent=11 // pred_fallthru
          _
        // Predicated region
        $region25: #{text_encoder_forward.1} parent=11 // pred_check
          %p515 = pneg %p116
        $region26: #{text_encoder_forward.1} parent=11 // pred_check_branch
          %517 = sbr.rel (%p515) target = $region28
        $region27: #{text_encoder_forward.1} parent=11 // pred_region
          _
        $region28: #{text_encoder_forward.1} parent=11 // pred_fallthru
          _
        // Predicated region
        $region29: #{text_encoder_forward.1} parent=11 // pred_check
          %p518 = pneg %p449
        $region30: #{text_encoder_forward.1} parent=11 // pred_check_branch
          %520 = sbr.rel (%p518) target = $region32
        $region31: #{text_encoder_forward.1} parent=11 // pred_region
          %s522 = ssub.s32 2048, 2048
          %523 = vsyncadd [#allocation10], %s522
          %s524 = sshll.u32 [#allocation9], 4
          %s525 = int_to_ptr.vmem [resolvable:$true] %s524
          %530 = dma.hbm_to_vmem [thread:$0]  %s16, 2048, %s525, [#allocation10], 128, 128, 8
        $region32: #{text_encoder_forward.1} parent=11 // pred_fallthru
          _
        // Predicated region
        $region33: #{text_encoder_forward.1} parent=11 // pred_check
          %p531 = pneg %p470
        $region34: #{text_encoder_forward.1} parent=11 // pred_check_branch
          %533 = sbr.rel (%p531) target = $region36
        $region35: #{text_encoder_forward.1} parent=11 // pred_region
          _
        $region36: #{text_encoder_forward.1} parent=11 // pred_fallthru
          _
      $region12: #{text_encoder_forward.1} parent=5 // pred_fallthru
        _
      %p534 = scmp.lt.s32.totalorder %s32, 2
      // Predicated region
      $region37: #{text_encoder_forward.1} parent=5 // pred_check
        %p535 = pneg %p534
      $region38: #{text_encoder_forward.1} parent=5 // pred_check_branch
        %537 = sbr.rel (%p535) target = $region40
      $region39: #{text_encoder_forward.1} parent=5 // pred_region
        // Predicated region
        $region41: #{text_encoder_forward.1} parent=39 // pred_check
          %p538 = pneg %p136
        $region42: #{text_encoder_forward.1} parent=39 // pred_check_branch
          %540 = sbr.rel (%p538) target = $region44
        $region43: #{text_encoder_forward.1} parent=39 // pred_region
          %s541 = sand.u32 %s126, 1
          %s542 = scalar_lea.sflag [#allocation4], %s541
          %s543 = sand.u32 %s126, 1
          %s544 = smul.addr %s543, 192
          %s545 = scalar_lea.vmem [#allocation3], %s544
          %s547 = ssub.s32 3072, 3072
          %548 = vsyncadd %s542, %s547
          %s549 = smul.addr %s32, 48
          %s550 = smul.addr %s549, 64
          %s551 = scalar_lea.hbm %s4, %s550
          %s552 = sshll.u32 %s545, 4
          %s553 = int_to_ptr.vmem [resolvable:$true] %s552
          %558 = dma.hbm_to_vmem [thread:$0]  %s551, 3072, %s553, %s542, 192, 192, 12
        $region44: #{text_encoder_forward.1} parent=39 // pred_fallthru
          _
        // Predicated region
        $region45: #{text_encoder_forward.1} parent=39 // pred_check
          %p559 = pneg %p162
        $region46: #{text_encoder_forward.1} parent=39 // pred_check_branch
          %561 = sbr.rel (%p559) target = $region48
        $region47: #{text_encoder_forward.1} parent=39 // pred_region
          %p562 = scmp.lt.s32.totalorder %s32, 1
          %s563 = scalar_select %p562, %s32, 1
          %s564 = smul.addr %s563, 3
          %s565 = scalar_lea.vmem %s5, %s564
        $region48: #{text_encoder_forward.1} parent=39 // pred_fallthru
          _
        // Predicated region
        $region49: #{text_encoder_forward.1} parent=39 // pred_check
          %p566 = pneg %p188
        $region50: #{text_encoder_forward.1} parent=39 // pred_check_branch
          %568 = sbr.rel (%p566) target = $region52
        $region51: #{text_encoder_forward.1} parent=39 // pred_region
          %s569 = sand.u32 %s32, 1
          %s570 = scalar_lea.sflag [#allocation7], %s569
          %s571 = sand.u32 %s178, 1
          %s572 = smul.addr %s571, 64
          %s573 = scalar_lea.vmem [#allocation6], %s572
          %s575 = ssub.s32 1024, 1024
          %576 = vsyncadd %s570, %s575
          %s577 = smul.addr %s32, 16
          %s578 = smul.addr %s577, 64
          %s579 = scalar_lea.hbm %s6, %s578
          %s580 = sshll.u32 %s573, 4
          %s581 = int_to_ptr.vmem [resolvable:$true] %s580
          %586 = dma.hbm_to_vmem [thread:$0]  %s579, 1024, %s581, %s570, 64, 64, 4
        $region52: #{text_encoder_forward.1} parent=39 // pred_fallthru
          _
        // Predicated region
        $region53: #{text_encoder_forward.1} parent=39 // pred_check
          %p587 = pneg %p214
        $region54: #{text_encoder_forward.1} parent=39 // pred_check_branch
          %589 = sbr.rel (%p587) target = $region56
        $region55: #{text_encoder_forward.1} parent=39 // pred_region
          %p590 = scmp.lt.s32.totalorder %s32, 1
          %s591 = scalar_select %p590, %s32, 1
          %s592 = scalar_lea.vmem %s7, %s591
        $region56: #{text_encoder_forward.1} parent=39 // pred_fallthru
          _
        // Predicated region
        $region57: #{text_encoder_forward.1} parent=39 // pred_check
          %p593 = pneg %p240
        $region58: #{text_encoder_forward.1} parent=39 // pred_check_branch
          %595 = sbr.rel (%p593) target = $region60
        $region59: #{text_encoder_forward.1} parent=39 // pred_region
          %p596 = scmp.lt.s32.totalorder %s32, 1
          %s597 = scalar_select %p596, %s32, 1
          %s598 = scalar_lea.vmem %s8, %s597
        $region60: #{text_encoder_forward.1} parent=39 // pred_fallthru
          _
        // Predicated region
        $region61: #{text_encoder_forward.1} parent=39 // pred_check
          %p599 = pneg %p266
        $region62: #{text_encoder_forward.1} parent=39 // pred_check_branch
          %601 = sbr.rel (%p599) target = $region64
        $region63: #{text_encoder_forward.1} parent=39 // pred_region
          %p602 = scmp.lt.s32.totalorder %s32, 1
          %s603 = scalar_select %p602, %s32, 1
          %s604 = scalar_lea.vmem %s9, %s603
        $region64: #{text_encoder_forward.1} parent=39 // pred_fallthru
          _
        // Predicated region
        $region65: #{text_encoder_forward.1} parent=39 // pred_check
          %p605 = pneg %p292
        $region66: #{text_encoder_forward.1} parent=39 // pred_check_branch
          %607 = sbr.rel (%p605) target = $region68
        $region67: #{text_encoder_forward.1} parent=39 // pred_region
          %p608 = scmp.lt.s32.totalorder %s32, 1
          %s609 = scalar_select %p608, %s32, 1
          %s610 = smul.addr %s609, 32
          %s611 = smul.addr %s610, 4
          %s612 = scalar_lea.vmem %s10, %s611
        $region68: #{text_encoder_forward.1} parent=39 // pred_fallthru
          _
        // Predicated region
        $region69: #{text_encoder_forward.1} parent=39 // pred_check
          %p613 = pneg %p318
        $region70: #{text_encoder_forward.1} parent=39 // pred_check_branch
          %615 = sbr.rel (%p613) target = $region72
        $region71: #{text_encoder_forward.1} parent=39 // pred_region
          %p616 = scmp.lt.s32.totalorder %s32, 1
          %s617 = scalar_select %p616, %s32, 1
          %s618 = smul.addr %s617, 2
          %s619 = scalar_lea.vmem %s11, %s618
        $region72: #{text_encoder_forward.1} parent=39 // pred_fallthru
          _
        // Predicated region
        $region73: #{text_encoder_forward.1} parent=39 // pred_check
          %p620 = pneg %p344
        $region74: #{text_encoder_forward.1} parent=39 // pred_check_branch
          %622 = sbr.rel (%p620) target = $region76
        $region75: #{text_encoder_forward.1} parent=39 // pred_region
          %s623 = sand.u32 %s32, 1
          %s624 = scalar_lea.sflag [#allocation7], %s623
          %s625 = sand.u32 %s334, 1
          %s626 = smul.addr %s625, 128
          %s627 = scalar_lea.vmem [#allocation8], %s626
          %s629 = ssub.s32 2048, 2048
          %630 = vsyncadd %s624, %s629
          %s631 = smul.addr %s32, 32
          %s632 = smul.addr %s631, 64
          %s633 = scalar_lea.hbm %s12, %s632
          %s634 = sshll.u32 %s627, 4
          %s635 = int_to_ptr.vmem [resolvable:$true] %s634
          %640 = dma.hbm_to_vmem [thread:$0]  %s633, 2048, %s635, %s624, 64, 64, 4
        $region76: #{text_encoder_forward.1} parent=39 // pred_fallthru
          _
        // Predicated region
        $region77: #{text_encoder_forward.1} parent=39 // pred_check
          %p641 = pneg %p370
        $region78: #{text_encoder_forward.1} parent=39 // pred_check_branch
          %643 = sbr.rel (%p641) target = $region80
        $region79: #{text_encoder_forward.1} parent=39 // pred_region
          %p644 = scmp.lt.s32.totalorder %s32, 1
          %s645 = scalar_select %p644, %s32, 1
          %s646 = scalar_lea.vmem %s13, %s645
        $region80: #{text_encoder_forward.1} parent=39 // pred_fallthru
          _
        // Predicated region
        $region81: #{text_encoder_forward.1} parent=39 // pred_check
          %p647 = pneg %p396
        $region82: #{text_encoder_forward.1} parent=39 // pred_check_branch
          %649 = sbr.rel (%p647) target = $region84
        $region83: #{text_encoder_forward.1} parent=39 // pred_region
          %p650 = scmp.lt.s32.totalorder %s32, 1
          %s651 = scalar_select %p650, %s32, 1
          %s652 = scalar_lea.vmem %s14, %s651
        $region84: #{text_encoder_forward.1} parent=39 // pred_fallthru
          _
        // Predicated region
        $region85: #{text_encoder_forward.1} parent=39 // pred_check
          %p653 = pneg %p422
        $region86: #{text_encoder_forward.1} parent=39 // pred_check_branch
          %655 = sbr.rel (%p653) target = $region88
        $region87: #{text_encoder_forward.1} parent=39 // pred_region
          %p656 = scmp.lt.s32.totalorder %s32, 1
          %s657 = scalar_select %p656, %s32, 1
          %s658 = scalar_lea.vmem %s15, %s657
        $region88: #{text_encoder_forward.1} parent=39 // pred_fallthru
          _
      $region40: #{text_encoder_forward.1} parent=5 // pred_fallthru
        _
      %p659 = scmp.le.s32.totalorder 1, %s32
      %p660 = scmp.lt.s32.totalorder %s32, 3
      %p661 = pnand %p659, %p660
      %p662 = pneg %p661
      // Predicated region
      $region89: #{text_encoder_forward.1} parent=5 // pred_check
        _
      $region90: #{text_encoder_forward.1} parent=5 // pred_check_branch
        %664 = sbr.rel (%p661) target = $region92
      $region91: #{text_encoder_forward.1} parent=5 // pred_region
        %s665 = ssub.s32 %s32, 1
        %s666 = sand.u32 %s129, 1
        %s667 = scalar_lea.sflag [#allocation4], %s666
        %s668 = sand.u32 %s129, 1
        %s669 = smul.addr %s668, 192
        %s670 = scalar_lea.vmem [#allocation3], %s669
        // Predicated region
        $region93: #{text_encoder_forward.1} parent=91 // pred_check
          %p671 = pneg %p142
        $region94: #{text_encoder_forward.1} parent=91 // pred_check_branch
          %673 = sbr.rel (%p671) target = $region96
        $region95: #{text_encoder_forward.1} parent=91 // pred_region
          %674 = dma.done %s667, 3072
        $region96: #{text_encoder_forward.1} parent=91 // pred_fallthru
          _
        %s675 = sand.u32 %s37, 1
        %s676 = scalar_lea.sflag [#allocation7], %s675
        %s677 = sand.u32 %s181, 1
        %s678 = smul.addr %s677, 64
        %s679 = scalar_lea.vmem [#allocation6], %s678
        // Predicated region
        $region97: #{text_encoder_forward.1} parent=91 // pred_check
          %p680 = pneg %p194
        $region98: #{text_encoder_forward.1} parent=91 // pred_check_branch
          %682 = sbr.rel (%p680) target = $region100
        $region99: #{text_encoder_forward.1} parent=91 // pred_region
          %683 = dma.done %s676, 1024
        $region100: #{text_encoder_forward.1} parent=91 // pred_fallthru
          _
        %s684 = sand.u32 %s37, 1
        %s685 = scalar_lea.sflag [#allocation7], %s684
        %s686 = sand.u32 %s337, 1
        %s687 = smul.addr %s686, 128
        %s688 = scalar_lea.vmem [#allocation8], %s687
        // Predicated region
        $region101: #{text_encoder_forward.1} parent=91 // pred_check
          %p689 = pneg %p350
        $region102: #{text_encoder_forward.1} parent=91 // pred_check_branch
          %691 = sbr.rel (%p689) target = $region104
        $region103: #{text_encoder_forward.1} parent=91 // pred_region
          %692 = dma.done %s685, 2048
        $region104: #{text_encoder_forward.1} parent=91 // pred_fallthru
          _
        // Predicated region
        $region105: #{text_encoder_forward.1} parent=91 // pred_check
          %p693 = pneg %p449
        $region106: #{text_encoder_forward.1} parent=91 // pred_check_branch
          %695 = sbr.rel (%p693) target = $region108
        $region107: #{text_encoder_forward.1} parent=91 // pred_region
          %696 = dma.done [#allocation10], 2048
        $region108: #{text_encoder_forward.1} parent=91 // pred_fallthru
          _
        %p697 = pneg %p53
        %p698 = pneg %p50
        %p699 = pneg %p74
        %p700 = pneg %p71
        %p701 = pneg %p95
        %p702 = pneg %p92
        %p703 = pneg %p116
        %p704 = pneg %p113
        %s705 = sand.u32 %s129, 1
        %s706 = scalar_lea.sflag [#allocation4], %s705
        %s707 = sand.u32 %s129, 1
        %s708 = smul.addr %s707, 192
        %s709 = scalar_lea.vmem [#allocation3], %s708
        %p710 = pneg %p142
        %p711 = pneg %p139
        %p712 = scmp.lt.s32.totalorder %s37, 1
        %s713 = scalar_select %p712, %s37, 1
        %s714 = smul.addr %s713, 3
        %s715 = scalar_lea.vmem %s5, %s714
        %p716 = pneg %p168
        %p717 = pneg %p165
        %s718 = sand.u32 %s37, 1
        %s719 = scalar_lea.sflag [#allocation7], %s718
        %s720 = sand.u32 %s181, 1
        %s721 = smul.addr %s720, 64
        %s722 = scalar_lea.vmem [#allocation6], %s721
        %p723 = pneg %p194
        %p724 = pneg %p191
        %p725 = scmp.lt.s32.totalorder %s37, 1
        %s726 = scalar_select %p725, %s37, 1
        %s727 = scalar_lea.vmem %s7, %s726
        %p728 = pneg %p220
        %p729 = pneg %p217
        %p730 = scmp.lt.s32.totalorder %s37, 1
        %s731 = scalar_select %p730, %s37, 1
        %s732 = scalar_lea.vmem %s8, %s731
        %p733 = pneg %p246
        %p734 = pneg %p243
        %p735 = scmp.lt.s32.totalorder %s37, 1
        %s736 = scalar_select %p735, %s37, 1
        %s737 = scalar_lea.vmem %s9, %s736
        %p738 = pneg %p272
        %p739 = pneg %p269
        %p740 = scmp.lt.s32.totalorder %s37, 1
        %s741 = scalar_select %p740, %s37, 1
        %s742 = smul.addr %s741, 32
        %s743 = smul.addr %s742, 4
        %s744 = scalar_lea.vmem %s10, %s743
        %p745 = pneg %p298
        %p746 = pneg %p295
        %p747 = scmp.lt.s32.totalorder %s37, 1
        %s748 = scalar_select %p747, %s37, 1
        %s749 = smul.addr %s748, 2
        %s750 = scalar_lea.vmem %s11, %s749
        %p751 = pneg %p324
        %p752 = pneg %p321
        %s753 = sand.u32 %s37, 1
        %s754 = scalar_lea.sflag [#allocation7], %s753
        %s755 = sand.u32 %s337, 1
        %s756 = smul.addr %s755, 128
        %s757 = scalar_lea.vmem [#allocation8], %s756
        %p758 = pneg %p350
        %p759 = pneg %p347
        %p760 = scmp.lt.s32.totalorder %s37, 1
        %s761 = scalar_select %p760, %s37, 1
        %s762 = scalar_lea.vmem %s13, %s761
        %p763 = pneg %p376
        %p764 = pneg %p373
        %p765 = scmp.lt.s32.totalorder %s37, 1
        %s766 = scalar_select %p765, %s37, 1
        %s767 = scalar_lea.vmem %s14, %s766
        %p768 = pneg %p402
        %p769 = pneg %p399
        %p770 = scmp.lt.s32.totalorder %s37, 1
        %s771 = scalar_select %p770, %s37, 1
        %s772 = scalar_lea.vmem %s15, %s771
        %p773 = pneg %p428
        %p774 = pneg %p425
        %p775 = pneg %p449
        %p776 = pneg %p446
        %p777 = pneg %p470
        %p778 = pneg %p467
        %p779 = pneg %p491
        %p780 = pneg %p488
        %p781 = scmp.lt.s32.totalorder %s37, 1
        %s782 = scalar_select %p781, %s37, 1
        %s783 = smul.addr %s782, 3
        %s784 = scalar_lea.vmem %s5, %s783
        %p785 = scmp.lt.s32.totalorder %s37, 1
        %s786 = scalar_select %p785, %s37, 1
        %s787 = scalar_lea.vmem %s7, %s786
        %p788 = scmp.lt.s32.totalorder %s37, 1
        %s789 = scalar_select %p788, %s37, 1
        %s790 = scalar_lea.vmem %s8, %s789
        %p791 = scmp.lt.s32.totalorder %s37, 1
        %s792 = scalar_select %p791, %s37, 1
        %s793 = scalar_lea.vmem %s9, %s792
        %p794 = scmp.lt.s32.totalorder %s37, 1
        %s795 = scalar_select %p794, %s37, 1
        %s796 = smul.addr %s795, 32
        %s797 = smul.addr %s796, 4
        %s798 = scalar_lea.vmem %s10, %s797
        %p799 = scmp.lt.s32.totalorder %s37, 1
        %s800 = scalar_select %p799, %s37, 1
        %s801 = smul.addr %s800, 2
        %s802 = scalar_lea.vmem %s11, %s801
        %p803 = scmp.lt.s32.totalorder %s37, 1
        %s804 = scalar_select %p803, %s37, 1
        %s805 = scalar_lea.vmem %s13, %s804
        %p806 = scmp.lt.s32.totalorder %s37, 1
        %s807 = scalar_select %p806, %s37, 1
        %s808 = scalar_lea.vmem %s14, %s807
        %p809 = scmp.lt.s32.totalorder %s37, 1
        %s810 = scalar_select %p809, %s37, 1
        %s811 = scalar_lea.vmem %s15, %s810
        %p813 = scmp.eq.s32.totalorder %s37, 0
        // Predicated region
        $region109: #{text_encoder_forward.1} parent=91 // pred_check
          %p814 = pneg %p813
        $region110: #{text_encoder_forward.1} parent=91 // pred_check_branch
          %816 = sbr.rel (%p814) target = $region112
        $region111: #{text_encoder_forward.1} parent=91 // pred_region
          %v817 = vld [vmem:[%s0] sm:$0xff]
          %v818 = vld [vmem:[%s0 + $0x8] sm:$0xff]
          %v819 = vld [vmem:[%s2] sm:$0x1]
          %v820 = vld [vmem:[%s3] sm:$0x1]
          %821 = vadd.xlane.f32.xlu0 %v817
          %v822 = vpop.xlane.xlu0 %821
          %823 = vadd.xlane.f32.xlu0 %v818
          %v824 = vpop.xlane.xlu0 %823
          %v825 = vrcp.pop 128.0
          %v826 = vmul.f32 %v822, %v825
          %v827 = vmul.f32 %v824, %v825
          %v828 = vsub.f32 %v817, %v826
          %v829 = vsub.f32 %v818, %v827
          %v830 = vmul.f32 %v828, %v828
          %v831 = vmul.f32 %v829, %v829
          %832 = vadd.xlane.f32.xlu0 %v830
          %v833 = vpop.xlane.xlu0 %832
          %834 = vadd.xlane.f32.xlu0 %v831
          %v835 = vpop.xlane.xlu0 %834
          %v836 = vmul.f32 %v833, %v825
          %v837 = vmul.f32 %v835, %v825
          %v838 = vadd.f32 %v836, 1e-12
          %v839 = vadd.f32 %v837, 1e-12
          %v840 = vrsqrt.pop %v838
          %v841 = vrsqrt.pop %v839
          %v842 = vmul.f32 %v828, %v840
          %v843 = vmul.f32 %v829, %v841
          %v845 = vlaneseq
          %v846 = vshrl.u32 %v845, 7
          %v847 = vsub.s32 0, %v846
          %v848 = vrot.slane %v819, %v847
          %v850 = vmul.f32 %v842, %v848
          %v851 = vmul.f32 %v843, %v848
          %v853 = vlaneseq
          %v854 = vshrl.u32 %v853, 7
          %v855 = vsub.s32 0, %v854
          %v856 = vrot.slane %v820, %v855
          %v858 = vadd.f32 %v850, %v856
          %v859 = vadd.f32 %v851, %v856
          %860 = vst [vmem:[#allocation2] sm:$0xff] %v858
          %861 = vst [vmem:[#allocation2 + $0x8] sm:$0xff] %v859
        $region112: #{text_encoder_forward.1} parent=91 // pred_fallthru
          _
        %v862 = vld [vmem:[#allocation2] sm:$0xff]
        %v863 = vld [vmem:[#allocation2 + $0x8] sm:$0xff]
        %v864 = vpack.c.bf16 %v863, %v862
        %v865 = vld [vmem:[%s670] sm:$0xff]
        %v866 = vld [vmem:[%s670 + $0x8] sm:$0xf]
        %v867 = vld [vmem:[%s670 + $0xc] sm:$0xff]
        %v868 = vld [vmem:[%s670 + $0x14] sm:$0xf]
        %v869 = vld [vmem:[%s670 + $0x18] sm:$0xff]
        %v870 = vld [vmem:[%s670 + $0x20] sm:$0xf]
        %v871 = vld [vmem:[%s670 + $0x24] sm:$0xff]
        %v872 = vld [vmem:[%s670 + $0x2c] sm:$0xf]
        %v873 = vld [vmem:[%s670 + $0x30] sm:$0xff]
        %v874 = vld [vmem:[%s670 + $0x38] sm:$0xf]
        %v875 = vld [vmem:[%s670 + $0x3c] sm:$0xff]
        %v876 = vld [vmem:[%s670 + $0x44] sm:$0xf]
        %v877 = vld [vmem:[%s670 + $0x48] sm:$0xff]
        %v878 = vld [vmem:[%s670 + $0x50] sm:$0xf]
        %v879 = vld [vmem:[%s670 + $0x54] sm:$0xff]
        %v880 = vld [vmem:[%s670 + $0x5c] sm:$0xf]
        %v881 = vld [vmem:[%s670 + $0x60] sm:$0xff]
        %v882 = vld [vmem:[%s670 + $0x68] sm:$0xf]
        %v883 = vld [vmem:[%s670 + $0x6c] sm:$0xff]
        %v884 = vld [vmem:[%s670 + $0x74] sm:$0xf]
        %v885 = vld [vmem:[%s670 + $0x78] sm:$0xff]
        %v886 = vld [vmem:[%s670 + $0x80] sm:$0xf]
        %v887 = vld [vmem:[%s670 + $0x84] sm:$0xff]
        %v888 = vld [vmem:[%s670 + $0x8c] sm:$0xf]
        %v889 = vld [vmem:[%s670 + $0x90] sm:$0xff]
        %v890 = vld [vmem:[%s670 + $0x98] sm:$0xf]
        %v891 = vld [vmem:[%s670 + $0x9c] sm:$0xff]
        %v892 = vld [vmem:[%s670 + $0xa4] sm:$0xf]
        %v893 = vld [vmem:[%s670 + $0xa8] sm:$0xff]
        %v894 = vld [vmem:[%s670 + $0xb0] sm:$0xf]
        %v895 = vld [vmem:[%s670 + $0xb4] sm:$0xff]
        %v896 = vld [vmem:[%s670 + $0xbc] sm:$0xf]
        %v897 = vld [vmem:[%s784] sm:$0x7]
        %v899 = vlaneseq
        %v900 = vshrl.u32 %v899, 7
        %v901 = vsub.s32 0, %v900
        %v902 = vrot.slane %v897, %v901
        %v903 = vlaneseq
        %v904 = vshrl.u32 %v903, 7
        %v905 = vsub.s32 1, %v904
        %v906 = vrot.slane %v897, %v905
        %v907 = vlaneseq
        %v908 = vshrl.u32 %v907, 7
        %v909 = vsub.s32 2, %v908
        %v910 = vrot.slane %v897, %v909
        %v946 = vunpack.c.l.b16 %v865
        %v947 = vunpack.c.h.b16 %v865
        %v948 = vunpack.c.l.b16 %v866
        %v949 = vunpack.c.l.b16 %v867
        %v950 = vunpack.c.h.b16 %v867
        %v951 = vunpack.c.l.b16 %v868
        %v952 = vunpack.c.l.b16 %v869
        %v953 = vunpack.c.h.b16 %v869
        %v954 = vunpack.c.l.b16 %v870
        %v955 = vunpack.c.l.b16 %v871
        %v956 = vunpack.c.h.b16 %v871
        %v957 = vunpack.c.l.b16 %v872
        %v958 = vunpack.c.l.b16 %v873
        %v959 = vunpack.c.h.b16 %v873
        %v960 = vunpack.c.l.b16 %v874
        %v961 = vunpack.c.l.b16 %v875
        %v962 = vunpack.c.h.b16 %v875
        %v963 = vunpack.c.l.b16 %v876
        %v964 = vunpack.c.l.b16 %v877
        %v965 = vunpack.c.h.b16 %v877
        %v966 = vunpack.c.l.b16 %v878
        %v967 = vunpack.c.l.b16 %v879
        %v968 = vunpack.c.h.b16 %v879
        %v969 = vunpack.c.l.b16 %v880
        %v970 = vunpack.c.l.b16 %v881
        %v971 = vunpack.c.h.b16 %v881
        %v972 = vunpack.c.l.b16 %v882
        %v973 = vunpack.c.l.b16 %v883
        %v974 = vunpack.c.h.b16 %v883
        %v975 = vunpack.c.l.b16 %v884
        %v976 = vunpack.c.l.b16 %v885
        %v977 = vunpack.c.h.b16 %v885
        %v978 = vunpack.c.l.b16 %v886
        %v979 = vunpack.c.l.b16 %v887
        %v980 = vunpack.c.h.b16 %v887
        %v981 = vunpack.c.l.b16 %v888
        %v982 = vunpack.c.l.b16 %v889
        %v983 = vunpack.c.h.b16 %v889
        %v984 = vunpack.c.l.b16 %v890
        %v985 = vunpack.c.l.b16 %v891
        %v986 = vunpack.c.h.b16 %v891
        %v987 = vunpack.c.l.b16 %v892
        %v988 = vunpack.c.l.b16 %v893
        %v989 = vunpack.c.h.b16 %v893
        %v990 = vunpack.c.l.b16 %v894
        %v991 = vunpack.c.l.b16 %v895
        %v992 = vunpack.c.h.b16 %v895
        %v993 = vunpack.c.l.b16 %v896
        %v994 = vpack.c.b16 %v949, %v946
        %v995 = vpack.c.b16 %v950, %v947
        %v996 = vpack.c.b16 %v951, %v948
        %v997 = vpack.c.b16 %v955, %v952
        %v998 = vpack.c.b16 %v956, %v953
        %v999 = vpack.c.b16 %v957, %v954
        %v1000 = vpack.c.b16 %v961, %v958
        %v1001 = vpack.c.b16 %v962, %v959
        %v1002 = vpack.c.b16 %v963, %v960
        %v1003 = vpack.c.b16 %v967, %v964
        %v1004 = vpack.c.b16 %v968, %v965
        %v1005 = vpack.c.b16 %v969, %v966
        %v1006 = vpack.c.b16 %v973, %v970
        %v1007 = vpack.c.b16 %v974, %v971
        %v1008 = vpack.c.b16 %v975, %v972
        %v1009 = vpack.c.b16 %v979, %v976
        %v1010 = vpack.c.b16 %v980, %v977
        %v1011 = vpack.c.b16 %v981, %v978
        %v1012 = vpack.c.b16 %v985, %v982
        %v1013 = vpack.c.b16 %v986, %v983
        %v1014 = vpack.c.b16 %v987, %v984
        %v1015 = vpack.c.b16 %v991, %v988
        %v1016 = vpack.c.b16 %v992, %v989
        %v1017 = vpack.c.b16 %v993, %v990
        %1042 = vmatprep.subr.bf16.mxu0 %v995
        %1043 = vmatpush1.bf16.msra.mxu0 %v994
        %1044 = vmatprep.subr.bf16.mxu0 %v998
        %1045 = vmatpush1.bf16.msra.mxu0 %v997
        %1046 = vmatprep.subr.bf16.mxu0 %v1001
        %1047 = vmatpush1.bf16.msra.mxu0 %v1000
        %1048 = vmatprep.subr.bf16.mxu0 %v1004
        %1049 = vmatpush1.bf16.msra.mxu0 %v1003
        %1050 = vmatprep.subr.bf16.mxu0 %v1007
        %1051 = vmatpush1.bf16.msra.mxu0 %v1006
        %1052 = vmatprep.subr.bf16.mxu0 %v1010
        %1053 = vmatpush1.bf16.msra.mxu0 %v1009
        %1054 = vmatprep.subr.bf16.mxu0 %v1013
        %1055 = vmatpush1.bf16.msra.mxu0 %v1012
        %1056 = vmatprep.subr.bf16.mxu0 %v1016
        %1057 = vmatpush1.bf16.msra.mxu0 %v1015
        %1058 = vmatprep.subr.bf16.mxu0 0
        %1059 = vmatpush1.bf16.msra.mxu0 0
        %1060 = vmatprep.subr.bf16.mxu0 0
        %1061 = vmatpush1.bf16.msra.mxu0 0
        %1062 = vmatprep.subr.bf16.mxu0 0
        %1063 = vmatpush1.bf16.msra.mxu0 0
        %1064 = vmatprep.subr.bf16.mxu0 0
        %1065 = vmatpush1.bf16.msra.mxu0 0
        %1066 = vmatprep.subr.bf16.mxu0 0
        %1067 = vmatpush1.bf16.msra.mxu0 0
        %1068 = vmatprep.subr.bf16.mxu0 0
        %1069 = vmatpush1.bf16.msra.mxu0 0
        %1070 = vmatprep.subr.bf16.mxu0 0
        %1071 = vmatpush1.bf16.msra.mxu0 0
        %1072 = vmatprep.subr.bf16.mxu0 0
        %1073 = vmatpush1.bf16.msra.mxu0 0
        %1074 = vmatprep.mubr.bf16.mxu0 0
        %1075 = vmatmul.mubr.bf16.gmra.mrb[0].mxu0 %v864
        %v1076 = vpop.f32.mrb[0].mxu0
        %v1077 = vadd.f32 %v902, %v1076
        %v1078 = vpop.f32.mrb[0].mxu0
        %v1079 = vadd.f32 %v906, %v1078
        %v1080 = vpop.f32.mrb[0].mxu0
        %v1081 = vadd.f32 %v902, %v1080
        %v1082 = vpop.f32.mrb[0].mxu0
        %v1083 = vadd.f32 %v906, %v1082
        %1084 = vdwg.mxu0
        %1085 = vmatprep.subr.bf16.mxu0 0
        %1086 = vmatpush1.bf16.msra.mxu0 %v996
        %1087 = vmatprep.subr.bf16.mxu0 0
        %1088 = vmatpush1.bf16.msra.mxu0 %v999
        %1089 = vmatprep.subr.bf16.mxu0 0
        %1090 = vmatpush1.bf16.msra.mxu0 %v1002
        %1091 = vmatprep.subr.bf16.mxu0 0
        %1092 = vmatpush1.bf16.msra.mxu0 %v1005
        %1093 = vmatprep.subr.bf16.mxu0 0
        %1094 = vmatpush1.bf16.msra.mxu0 %v1008
        %1095 = vmatprep.subr.bf16.mxu0 0
        %1096 = vmatpush1.bf16.msra.mxu0 %v1011
        %1097 = vmatprep.subr.bf16.mxu0 0
        %1098 = vmatpush1.bf16.msra.mxu0 %v1014
        %1099 = vmatprep.subr.bf16.mxu0 0
        %1100 = vmatpush1.bf16.msra.mxu0 %v1017
        %1101 = vmatprep.subr.bf16.mxu0 0
        %1102 = vmatpush1.bf16.msra.mxu0 0
        %1103 = vmatprep.subr.bf16.mxu0 0
        %1104 = vmatpush1.bf16.msra.mxu0 0
        %1105 = vmatprep.subr.bf16.mxu0 0
        %1106 = vmatpush1.bf16.msra.mxu0 0
        %1107 = vmatprep.subr.bf16.mxu0 0
        %1108 = vmatpush1.bf16.msra.mxu0 0
        %1109 = vmatprep.subr.bf16.mxu0 0
        %1110 = vmatpush1.bf16.msra.mxu0 0
        %1111 = vmatprep.subr.bf16.mxu0 0
        %1112 = vmatpush1.bf16.msra.mxu0 0
        %1113 = vmatprep.subr.bf16.mxu0 0
        %1114 = vmatpush1.bf16.msra.mxu0 0
        %1115 = vmatprep.subr.bf16.mxu0 0
        %1116 = vmatpush1.bf16.msra.mxu0 0
        %1117 = vmatprep.mubr.bf16.mxu0 0
        %1118 = vmatmul.mubr.bf16.gmra.mrb[0].mxu0 %v864
        %v1119 = vpop.f32.mrb[0].mxu0
        %v1120 = vadd.f32 %v910, %v1119
        %v1121 = vpop.f32.mrb[0].mxu0
        %v1122 = vpop.f32.mrb[0].mxu0
        %v1123 = vadd.f32 %v910, %v1122
        %v1124 = vpop.f32.mrb[0].mxu0
        %1125 = vdwg.mxu0
        %v1126 = vpack.c.bf16 %v1081, %v1077
        %v1127 = vpack.c.bf16 %v1083, %v1079
        %v1128 = vpack.c.bf16 %v1123, %v1120
        %v1129 = vld [vmem:[%s1] sm:$0x1]
        %v1130 = vld [vmem:[%s1 + $0x1] sm:$0x1]
        %v1131 = vld [vmem:[%s679] sm:$0xf]
        %v1132 = vld [vmem:[%s679 + $0x4] sm:$0xf]
        %v1133 = vld [vmem:[%s679 + $0x8] sm:$0xf]
        %v1134 = vld [vmem:[%s679 + $0xc] sm:$0xf]
        %v1135 = vld [vmem:[%s679 + $0x10] sm:$0xf]
        %v1136 = vld [vmem:[%s679 + $0x14] sm:$0xf]
        %v1137 = vld [vmem:[%s679 + $0x18] sm:$0xf]
        %v1138 = vld [vmem:[%s679 + $0x1c] sm:$0xf]
        %v1139 = vld [vmem:[%s679 + $0x20] sm:$0xf]
        %v1140 = vld [vmem:[%s679 + $0x24] sm:$0xf]
        %v1141 = vld [vmem:[%s679 + $0x28] sm:$0xf]
        %v1142 = vld [vmem:[%s679 + $0x2c] sm:$0xf]
        %v1143 = vld [vmem:[%s679 + $0x30] sm:$0xf]
        %v1144 = vld [vmem:[%s679 + $0x34] sm:$0xf]
        %v1145 = vld [vmem:[%s679 + $0x38] sm:$0xf]
        %v1146 = vld [vmem:[%s679 + $0x3c] sm:$0xf]
        %v1148 = vunpack.c.l.b16 %v1126
        %v1149 = vunpack.c.h.b16 %v1126
        %v1150 = vpack.c.b16 %v1148, %v1148
        %v1151 = vpack.c.b16 %v1149, %v1149
        %v1153 = vunpack.c.l.b16 %v1127
        %v1154 = vunpack.c.h.b16 %v1127
        %v1155 = vpack.c.b16 %v1153, %v1153
        %v1156 = vpack.c.b16 %v1154, %v1154
        %v1158 = vunpack.c.l.b16 %v1128
        %v1159 = vunpack.c.h.b16 %v1128
        %v1160 = vpack.c.b16 %v1158, %v1158
        %v1161 = vpack.c.b16 %v1159, %v1159
        %vm1162 = vcmask 261120
        %v1164 = vsel %vm1162, %v1150, 0
        %v1167 = vsel %vm1162, %v1155, 0
        %1169 = vmatprep.subr.bf16.mxu0 0
        %1170 = vmatpush1.bf16.xpose.msra.mxu0 %v1167
        %1171 = vmatprep.subr.bf16.mxu0 0
        %1172 = vmatpush1.bf16.xpose.msra.mxu0 0
        %1173 = vmatprep.subr.bf16.mxu0 0
        %1174 = vmatpush1.bf16.xpose.msra.mxu0 0
        %1175 = vmatprep.subr.bf16.mxu0 0
        %1176 = vmatpush1.bf16.xpose.msra.mxu0 0
        %1177 = vmatprep.subr.bf16.mxu0 0
        %1178 = vmatpush1.bf16.xpose.msra.mxu0 0
        %1179 = vmatprep.subr.bf16.mxu0 0
        %1180 = vmatpush1.bf16.xpose.msra.mxu0 0
        %1181 = vmatprep.subr.bf16.mxu0 0
        %1182 = vmatpush1.bf16.xpose.msra.mxu0 0
        %1183 = vmatprep.subr.bf16.mxu0 0
        %1184 = vmatpush1.bf16.xpose.msra.mxu0 0
        %1185 = vmatprep.subr.bf16.mxu0 0
        %1186 = vmatpush1.bf16.xpose.msra.mxu0 0
        %1187 = vmatprep.subr.bf16.mxu0 0
        %1188 = vmatpush1.bf16.xpose.msra.mxu0 0
        %1189 = vmatprep.subr.bf16.mxu0 0
        %1190 = vmatpush1.bf16.xpose.msra.mxu0 0
        %1191 = vmatprep.subr.bf16.mxu0 0
        %1192 = vmatpush1.bf16.xpose.msra.mxu0 0
        %1193 = vmatprep.subr.bf16.mxu0 0
        %1194 = vmatpush1.bf16.xpose.msra.mxu0 0
        %1195 = vmatprep.subr.bf16.mxu0 0
        %1196 = vmatpush1.bf16.xpose.msra.mxu0 0
        %1197 = vmatprep.subr.bf16.mxu0 0
        %1198 = vmatpush1.bf16.xpose.msra.mxu0 0
        %1199 = vmatprep.subr.bf16.mxu0 0
        %1200 = vmatpush1.bf16.xpose.msra.mxu0 0
        %1201 = vmatprep.mubr.bf16.mxu0 0
        %1202 = vmatmul.mubr.bf16.gmra.mrb[0].mxu0 %v1164
        %v1203 = vpop.f32.mrb[0].mxu0
        %v1204 = vadd.f32 0.0, %v1203
        %v1205 = vpop.f32.mrb[0].mxu0
        %v1206 = vpop.f32.mrb[0].mxu0
        %v1207 = vpop.f32.mrb[0].mxu0
        %1208 = vdwg.mxu0
        %v1210 = vsel %vm1162, %v1151, 0
        %v1213 = vsel %vm1162, %v1156, 0
        %1215 = vmatprep.subr.bf16.mxu0 0
        %1216 = vmatpush1.bf16.xpose.msra.mxu0 %v1213
        %1217 = vmatprep.subr.bf16.mxu0 0
        %1218 = vmatpush1.bf16.xpose.msra.mxu0 0
        %1219 = vmatprep.subr.bf16.mxu0 0
        %1220 = vmatpush1.bf16.xpose.msra.mxu0 0
        %1221 = vmatprep.subr.bf16.mxu0 0
        %1222 = vmatpush1.bf16.xpose.msra.mxu0 0
        %1223 = vmatprep.subr.bf16.mxu0 0
        %1224 = vmatpush1.bf16.xpose.msra.mxu0 0
        %1225 = vmatprep.subr.bf16.mxu0 0
        %1226 = vmatpush1.bf16.xpose.msra.mxu0 0
        %1227 = vmatprep.subr.bf16.mxu0 0
        %1228 = vmatpush1.bf16.xpose.msra.mxu0 0
        %1229 = vmatprep.subr.bf16.mxu0 0
        %1230 = vmatpush1.bf16.xpose.msra.mxu0 0
        %1231 = vmatprep.subr.bf16.mxu0 0
        %1232 = vmatpush1.bf16.xpose.msra.mxu0 0
        %1233 = vmatprep.subr.bf16.mxu0 0
        %1234 = vmatpush1.bf16.xpose.msra.mxu0 0
        %1235 = vmatprep.subr.bf16.mxu0 0
        %1236 = vmatpush1.bf16.xpose.msra.mxu0 0
        %1237 = vmatprep.subr.bf16.mxu0 0
        %1238 = vmatpush1.bf16.xpose.msra.mxu0 0
        %1239 = vmatprep.subr.bf16.mxu0 0
        %1240 = vmatpush1.bf16.xpose.msra.mxu0 0
        %1241 = vmatprep.subr.bf16.mxu0 0
        %1242 = vmatpush1.bf16.xpose.msra.mxu0 0
        %1243 = vmatprep.subr.bf16.mxu0 0
        %1244 = vmatpush1.bf16.xpose.msra.mxu0 0
        %1245 = vmatprep.subr.bf16.mxu0 0
        %1246 = vmatpush1.bf16.xpose.msra.mxu0 0
        %1247 = vmatprep.mubr.bf16.mxu0 0
        %1248 = vmatmul.mubr.bf16.gmra.mrb[0].mxu0 %v1210
        %v1249 = vpop.f32.mrb[0].mxu0
        %v1250 = vadd.f32 0.0, %v1249
        %v1251 = vpop.f32.mrb[0].mxu0
        %v1252 = vpop.f32.mrb[0].mxu0
        %v1253 = vpop.f32.mrb[0].mxu0
        %1254 = vdwg.mxu0
        %v1255 = vmul.f32 %v1204, 0.17677669
        %v1256 = vmul.f32 %v1250, 0.17677669
        %v1259 = vlaneseq
        %v1260 = vshrl.u32 %v1259, 7
        %v1261 = vsub.s32 0, %v1260
        %v1262 = vrot.slane %v1129, %v1261
        %v1263 = vlaneseq
        %v1264 = vshrl.u32 %v1263, 7
        %v1265 = vsub.s32 0, %v1264
        %v1266 = vrot.slane %v1130, %v1265
        %v1269 = vadd.f32 %v1255, %v1262
        %v1270 = vadd.f32 %v1256, %v1266
        %vm1271 = vcmask 64512
        %v1272 = vsel %vm1271, %v1269, -inf
        %1273 = vmax.xlane.f32.xlu0 %v1272
        %v1274 = vpop.xlane.xlu0 %1273
        %v1275 = vsel %vm1271, %v1270, -inf
        %1276 = vmax.xlane.f32.xlu0 %v1275
        %v1277 = vpop.xlane.xlu0 %1276
        %v1278 = vsub.f32 %v1269, %v1274
        %v1279 = vsub.f32 %v1270, %v1277
        %v1280 = vmul.f32 %v1278, 1.442695
        %v1281 = vpow.pop %v1280
        %v1282 = vmul.f32 %v1279, 1.442695
        %v1283 = vpow.pop %v1282
        %v1284 = vsel %vm1271, %v1281, 0.0
        %1285 = vadd.xlane.f32.xlu0 %v1284
        %v1286 = vpop.xlane.xlu0 %1285
        %v1287 = vsel %vm1271, %v1283, 0.0
        %1288 = vadd.xlane.f32.xlu0 %v1287
        %v1289 = vpop.xlane.xlu0 %1288
        %v1290 = vrcp.pop %v1286
        %v1291 = vrcp.pop %v1289
        %v1292 = vmul.f32 %v1281, %v1290
        %v1293 = vmul.f32 %v1283, %v1291
        %v1294 = vpack.c.bf16 %v1292, %v1292
        %v1295 = vpack.c.bf16 %v1293, %v1293
        %v1297 = vsel %vm1271, %v1294, 0
        %vm1299 = vcmask 1043456
        %v1301 = vsel %vm1299, %v1160, 0
        %1303 = vmatprep.subr.bf16.mxu0 0
        %1304 = vmatpush1.bf16.msra.mxu0 %v1301
        %1305 = vmatprep.subr.bf16.mxu0 0
        %1306 = vmatpush1.bf16.msra.mxu0 0
        %1307 = vmatprep.subr.bf16.mxu0 0
        %1308 = vmatpush1.bf16.msra.mxu0 0
        %1309 = vmatprep.subr.bf16.mxu0 0
        %1310 = vmatpush1.bf16.msra.mxu0 0
        %1311 = vmatprep.subr.bf16.mxu0 0
        %1312 = vmatpush1.bf16.msra.mxu0 0
        %1313 = vmatprep.subr.bf16.mxu0 0
        %1314 = vmatpush1.bf16.msra.mxu0 0
        %1315 = vmatprep.subr.bf16.mxu0 0
        %1316 = vmatpush1.bf16.msra.mxu0 0
        %1317 = vmatprep.subr.bf16.mxu0 0
        %1318 = vmatpush1.bf16.msra.mxu0 0
        %1319 = vmatprep.subr.bf16.mxu0 0
        %1320 = vmatpush1.bf16.msra.mxu0 0
        %1321 = vmatprep.subr.bf16.mxu0 0
        %1322 = vmatpush1.bf16.msra.mxu0 0
        %1323 = vmatprep.subr.bf16.mxu0 0
        %1324 = vmatpush1.bf16.msra.mxu0 0
        %1325 = vmatprep.subr.bf16.mxu0 0
        %1326 = vmatpush1.bf16.msra.mxu0 0
        %1327 = vmatprep.subr.bf16.mxu0 0
        %1328 = vmatpush1.bf16.msra.mxu0 0
        %1329 = vmatprep.subr.bf16.mxu0 0
        %1330 = vmatpush1.bf16.msra.mxu0 0
        %1331 = vmatprep.subr.bf16.mxu0 0
        %1332 = vmatpush1.bf16.msra.mxu0 0
        %1333 = vmatprep.subr.bf16.mxu0 0
        %1334 = vmatpush1.bf16.msra.mxu0 0
        %1335 = vmatprep.mubr.bf16.mxu0 0
        %1336 = vmatmul.mubr.bf16.gmra.mrb[0].mxu0 %v1297
        %v1337 = vpop.f32.mrb[0].mxu0
        %v1338 = vadd.f32 0.0, %v1337
        %v1339 = vpop.f32.mrb[0].mxu0
        %v1340 = vpop.f32.mrb[0].mxu0
        %v1341 = vpop.f32.mrb[0].mxu0
        %1342 = vdwg.mxu0
        %v1344 = vsel %vm1271, %v1295, 0
        %v1347 = vsel %vm1299, %v1161, 0
        %1349 = vmatprep.subr.bf16.mxu0 0
        %1350 = vmatpush1.bf16.msra.mxu0 %v1347
        %1351 = vmatprep.subr.bf16.mxu0 0
        %1352 = vmatpush1.bf16.msra.mxu0 0
        %1353 = vmatprep.subr.bf16.mxu0 0
        %1354 = vmatpush1.bf16.msra.mxu0 0
        %1355 = vmatprep.subr.bf16.mxu0 0
        %1356 = vmatpush1.bf16.msra.mxu0 0
        %1357 = vmatprep.subr.bf16.mxu0 0
        %1358 = vmatpush1.bf16.msra.mxu0 0
        %1359 = vmatprep.subr.bf16.mxu0 0
        %1360 = vmatpush1.bf16.msra.mxu0 0
        %1361 = vmatprep.subr.bf16.mxu0 0
        %1362 = vmatpush1.bf16.msra.mxu0 0
        %1363 = vmatprep.subr.bf16.mxu0 0
        %1364 = vmatpush1.bf16.msra.mxu0 0
        %1365 = vmatprep.subr.bf16.mxu0 0
        %1366 = vmatpush1.bf16.msra.mxu0 0
        %1367 = vmatprep.subr.bf16.mxu0 0
        %1368 = vmatpush1.bf16.msra.mxu0 0
        %1369 = vmatprep.subr.bf16.mxu0 0
        %1370 = vmatpush1.bf16.msra.mxu0 0
        %1371 = vmatprep.subr.bf16.mxu0 0
        %1372 = vmatpush1.bf16.msra.mxu0 0
        %1373 = vmatprep.subr.bf16.mxu0 0
        %1374 = vmatpush1.bf16.msra.mxu0 0
        %1375 = vmatprep.subr.bf16.mxu0 0
        %1376 = vmatpush1.bf16.msra.mxu0 0
        %1377 = vmatprep.subr.bf16.mxu0 0
        %1378 = vmatpush1.bf16.msra.mxu0 0
        %1379 = vmatprep.subr.bf16.mxu0 0
        %1380 = vmatpush1.bf16.msra.mxu0 0
        %1381 = vmatprep.mubr.bf16.mxu0 0
        %1382 = vmatmul.mubr.bf16.gmra.mrb[0].mxu0 %v1344
        %v1383 = vpop.f32.mrb[0].mxu0
        %v1384 = vadd.f32 0.0, %v1383
        %v1385 = vpop.f32.mrb[0].mxu0
        %v1386 = vpop.f32.mrb[0].mxu0
        %v1387 = vpop.f32.mrb[0].mxu0
        %1388 = vdwg.mxu0
        %v1389 = vpack.c.bf16 %v1384, %v1338
        %1390 = vrot.lane.b32.xlu0 %v1150, 96
        %v1391 = vpop.permute.xlu0 %1390
        %1392 = vrot.lane.b32.xlu0 %v1155, 96
        %v1393 = vpop.permute.xlu0 %1392
        %v1395 = vsel %vm1162, %v1391, 0
        %v1398 = vsel %vm1162, %v1393, 0
        %1400 = vmatprep.subr.bf16.mxu0 0
        %1401 = vmatpush1.bf16.xpose.msra.mxu0 %v1398
        %1402 = vmatprep.subr.bf16.mxu0 0
        %1403 = vmatpush1.bf16.xpose.msra.mxu0 0
        %1404 = vmatprep.subr.bf16.mxu0 0
        %1405 = vmatpush1.bf16.xpose.msra.mxu0 0
        %1406 = vmatprep.subr.bf16.mxu0 0
        %1407 = vmatpush1.bf16.xpose.msra.mxu0 0
        %1408 = vmatprep.subr.bf16.mxu0 0
        %1409 = vmatpush1.bf16.xpose.msra.mxu0 0
        %1410 = vmatprep.subr.bf16.mxu0 0
        %1411 = vmatpush1.bf16.xpose.msra.mxu0 0
        %1412 = vmatprep.subr.bf16.mxu0 0
        %1413 = vmatpush1.bf16.xpose.msra.mxu0 0
        %1414 = vmatprep.subr.bf16.mxu0 0
        %1415 = vmatpush1.bf16.xpose.msra.mxu0 0
        %1416 = vmatprep.subr.bf16.mxu0 0
        %1417 = vmatpush1.bf16.xpose.msra.mxu0 0
        %1418 = vmatprep.subr.bf16.mxu0 0
        %1419 = vmatpush1.bf16.xpose.msra.mxu0 0
        %1420 = vmatprep.subr.bf16.mxu0 0
        %1421 = vmatpush1.bf16.xpose.msra.mxu0 0
        %1422 = vmatprep.subr.bf16.mxu0 0
        %1423 = vmatpush1.bf16.xpose.msra.mxu0 0
        %1424 = vmatprep.subr.bf16.mxu0 0
        %1425 = vmatpush1.bf16.xpose.msra.mxu0 0
        %1426 = vmatprep.subr.bf16.mxu0 0
        %1427 = vmatpush1.bf16.xpose.msra.mxu0 0
        %1428 = vmatprep.subr.bf16.mxu0 0
        %1429 = vmatpush1.bf16.xpose.msra.mxu0 0
        %1430 = vmatprep.subr.bf16.mxu0 0
        %1431 = vmatpush1.bf16.xpose.msra.mxu0 0
        %1432 = vmatprep.mubr.bf16.mxu0 0
        %1433 = vmatmul.mubr.bf16.gmra.mrb[0].mxu0 %v1395
        %v1434 = vpop.f32.mrb[0].mxu0
        %v1435 = vadd.f32 0.0, %v1434
        %v1436 = vpop.f32.mrb[0].mxu0
        %v1437 = vpop.f32.mrb[0].mxu0
        %v1438 = vpop.f32.mrb[0].mxu0
        %1439 = vdwg.mxu0
        %1440 = vrot.lane.b32.xlu0 %v1151, 96
        %v1441 = vpop.permute.xlu0 %1440
        %1442 = vrot.lane.b32.xlu0 %v1156, 96
        %v1443 = vpop.permute.xlu0 %1442
        %v1445 = vsel %vm1162, %v1441, 0
        %v1448 = vsel %vm1162, %v1443, 0
        %1450 = vmatprep.subr.bf16.mxu0 0
        %1451 = vmatpush1.bf16.xpose.msra.mxu0 %v1448
        %1452 = vmatprep.subr.bf16.mxu0 0
        %1453 = vmatpush1.bf16.xpose.msra.mxu0 0
        %1454 = vmatprep.subr.bf16.mxu0 0
        %1455 = vmatpush1.bf16.xpose.msra.mxu0 0
        %1456 = vmatprep.subr.bf16.mxu0 0
        %1457 = vmatpush1.bf16.xpose.msra.mxu0 0
        %1458 = vmatprep.subr.bf16.mxu0 0
        %1459 = vmatpush1.bf16.xpose.msra.mxu0 0
        %1460 = vmatprep.subr.bf16.mxu0 0
        %1461 = vmatpush1.bf16.xpose.msra.mxu0 0
        %1462 = vmatprep.subr.bf16.mxu0 0
        %1463 = vmatpush1.bf16.xpose.msra.mxu0 0
        %1464 = vmatprep.subr.bf16.mxu0 0
        %1465 = vmatpush1.bf16.xpose.msra.mxu0 0
        %1466 = vmatprep.subr.bf16.mxu0 0
        %1467 = vmatpush1.bf16.xpose.msra.mxu0 0
        %1468 = vmatprep.subr.bf16.mxu0 0
        %1469 = vmatpush1.bf16.xpose.msra.mxu0 0
        %1470 = vmatprep.subr.bf16.mxu0 0
        %1471 = vmatpush1.bf16.xpose.msra.mxu0 0
        %1472 = vmatprep.subr.bf16.mxu0 0
        %1473 = vmatpush1.bf16.xpose.msra.mxu0 0
        %1474 = vmatprep.subr.bf16.mxu0 0
        %1475 = vmatpush1.bf16.xpose.msra.mxu0 0
        %1476 = vmatprep.subr.bf16.mxu0 0
        %1477 = vmatpush1.bf16.xpose.msra.mxu0 0
        %1478 = vmatprep.subr.bf16.mxu0 0
        %1479 = vmatpush1.bf16.xpose.msra.mxu0 0
        %1480 = vmatprep.subr.bf16.mxu0 0
        %1481 = vmatpush1.bf16.xpose.msra.mxu0 0
        %1482 = vmatprep.mubr.bf16.mxu0 0
        %1483 = vmatmul.mubr.bf16.gmra.mrb[0].mxu0 %v1445
        %v1484 = vpop.f32.mrb[0].mxu0
        %v1485 = vadd.f32 0.0, %v1484
        %v1486 = vpop.f32.mrb[0].mxu0
        %v1487 = vpop.f32.mrb[0].mxu0
        %v1488 = vpop.f32.mrb[0].mxu0
        %1489 = vdwg.mxu0
        %v1490 = vmul.f32 %v1435, 0.17677669
        %v1491 = vmul.f32 %v1485, 0.17677669
        %v1492 = vadd.f32 %v1490, %v1262
        %v1493 = vadd.f32 %v1491, %v1266
        %v1494 = vsel %vm1271, %v1492, -inf
        %1495 = vmax.xlane.f32.xlu0 %v1494
        %v1496 = vpop.xlane.xlu0 %1495
        %v1497 = vsel %vm1271, %v1493, -inf
        %1498 = vmax.xlane.f32.xlu0 %v1497
        %v1499 = vpop.xlane.xlu0 %1498
        %v1500 = vsub.f32 %v1492, %v1496
        %v1501 = vsub.f32 %v1493, %v1499
        %v1502 = vmul.f32 %v1500, 1.442695
        %v1503 = vpow.pop %v1502
        %v1504 = vmul.f32 %v1501, 1.442695
        %v1505 = vpow.pop %v1504
        %v1506 = vsel %vm1271, %v1503, 0.0
        %1507 = vadd.xlane.f32.xlu0 %v1506
        %v1508 = vpop.xlane.xlu0 %1507
        %v1509 = vsel %vm1271, %v1505, 0.0
        %1510 = vadd.xlane.f32.xlu0 %v1509
        %v1511 = vpop.xlane.xlu0 %1510
        %v1512 = vrcp.pop %v1508
        %v1513 = vrcp.pop %v1511
        %v1514 = vmul.f32 %v1503, %v1512
        %v1515 = vmul.f32 %v1505, %v1513
        %v1516 = vpack.c.bf16 %v1514, %v1514
        %v1517 = vpack.c.bf16 %v1515, %v1515
        %1518 = vrot.lane.b32.xlu0 %v1160, 96
        %v1519 = vpop.permute.xlu0 %1518
        %v1521 = vsel %vm1271, %v1516, 0
        %v1524 = vsel %vm1299, %v1519, 0
        %1526 = vmatprep.subr.bf16.mxu0 0
        %1527 = vmatpush1.bf16.msra.mxu0 %v1524
        %1528 = vmatprep.subr.bf16.mxu0 0
        %1529 = vmatpush1.bf16.msra.mxu0 0
        %1530 = vmatprep.subr.bf16.mxu0 0
        %1531 = vmatpush1.bf16.msra.mxu0 0
        %1532 = vmatprep.subr.bf16.mxu0 0
        %1533 = vmatpush1.bf16.msra.mxu0 0
        %1534 = vmatprep.subr.bf16.mxu0 0
        %1535 = vmatpush1.bf16.msra.mxu0 0
        %1536 = vmatprep.subr.bf16.mxu0 0
        %1537 = vmatpush1.bf16.msra.mxu0 0
        %1538 = vmatprep.subr.bf16.mxu0 0
        %1539 = vmatpush1.bf16.msra.mxu0 0
        %1540 = vmatprep.subr.bf16.mxu0 0
        %1541 = vmatpush1.bf16.msra.mxu0 0
        %1542 = vmatprep.subr.bf16.mxu0 0
        %1543 = vmatpush1.bf16.msra.mxu0 0
        %1544 = vmatprep.subr.bf16.mxu0 0
        %1545 = vmatpush1.bf16.msra.mxu0 0
        %1546 = vmatprep.subr.bf16.mxu0 0
        %1547 = vmatpush1.bf16.msra.mxu0 0
        %1548 = vmatprep.subr.bf16.mxu0 0
        %1549 = vmatpush1.bf16.msra.mxu0 0
        %1550 = vmatprep.subr.bf16.mxu0 0
        %1551 = vmatpush1.bf16.msra.mxu0 0
        %1552 = vmatprep.subr.bf16.mxu0 0
        %1553 = vmatpush1.bf16.msra.mxu0 0
        %1554 = vmatprep.subr.bf16.mxu0 0
        %1555 = vmatpush1.bf16.msra.mxu0 0
        %1556 = vmatprep.subr.bf16.mxu0 0
        %1557 = vmatpush1.bf16.msra.mxu0 0
        %1558 = vmatprep.mubr.bf16.mxu0 0
        %1559 = vmatmul.mubr.bf16.gmra.mrb[0].mxu0 %v1521
        %v1560 = vpop.f32.mrb[0].mxu0
        %v1561 = vadd.f32 0.0, %v1560
        %v1562 = vpop.f32.mrb[0].mxu0
        %v1563 = vpop.f32.mrb[0].mxu0
        %v1564 = vpop.f32.mrb[0].mxu0
        %1565 = vdwg.mxu0
        %1566 = vrot.lane.b32.xlu0 %v1161, 96
        %v1567 = vpop.permute.xlu0 %1566
        %v1569 = vsel %vm1271, %v1517, 0
        %v1572 = vsel %vm1299, %v1567, 0
        %1574 = vmatprep.subr.bf16.mxu0 0
        %1575 = vmatpush1.bf16.msra.mxu0 %v1572
        %1576 = vmatprep.subr.bf16.mxu0 0
        %1577 = vmatpush1.bf16.msra.mxu0 0
        %1578 = vmatprep.subr.bf16.mxu0 0
        %1579 = vmatpush1.bf16.msra.mxu0 0
        %1580 = vmatprep.subr.bf16.mxu0 0
        %1581 = vmatpush1.bf16.msra.mxu0 0
        %1582 = vmatprep.subr.bf16.mxu0 0
        %1583 = vmatpush1.bf16.msra.mxu0 0
        %1584 = vmatprep.subr.bf16.mxu0 0
        %1585 = vmatpush1.bf16.msra.mxu0 0
        %1586 = vmatprep.subr.bf16.mxu0 0
        %1587 = vmatpush1.bf16.msra.mxu0 0
        %1588 = vmatprep.subr.bf16.mxu0 0
        %1589 = vmatpush1.bf16.msra.mxu0 0
        %1590 = vmatprep.subr.bf16.mxu0 0
        %1591 = vmatpush1.bf16.msra.mxu0 0
        %1592 = vmatprep.subr.bf16.mxu0 0
        %1593 = vmatpush1.bf16.msra.mxu0 0
        %1594 = vmatprep.subr.bf16.mxu0 0
        %1595 = vmatpush1.bf16.msra.mxu0 0
        %1596 = vmatprep.subr.bf16.mxu0 0
        %1597 = vmatpush1.bf16.msra.mxu0 0
        %1598 = vmatprep.subr.bf16.mxu0 0
        %1599 = vmatpush1.bf16.msra.mxu0 0
        %1600 = vmatprep.subr.bf16.mxu0 0
        %1601 = vmatpush1.bf16.msra.mxu0 0
        %1602 = vmatprep.subr.bf16.mxu0 0
        %1603 = vmatpush1.bf16.msra.mxu0 0
        %1604 = vmatprep.subr.bf16.mxu0 0
        %1605 = vmatpush1.bf16.msra.mxu0 0
        %1606 = vmatprep.mubr.bf16.mxu0 0
        %1607 = vmatmul.mubr.bf16.gmra.mrb[0].mxu0 %v1569
        %v1608 = vpop.f32.mrb[0].mxu0
        %v1609 = vadd.f32 0.0, %v1608
        %v1610 = vpop.f32.mrb[0].mxu0
        %v1611 = vpop.f32.mrb[0].mxu0
        %v1612 = vpop.f32.mrb[0].mxu0
        %1613 = vdwg.mxu0
        %v1614 = vpack.c.bf16 %v1609, %v1561
        %v1619 = vunpack.c.l.b16 %v1135
        %v1620 = vunpack.c.l.b16 %v1136
        %v1621 = vunpack.c.l.b16 %v1137
        %v1622 = vunpack.c.l.b16 %v1138
        %v1623 = vpack.c.b16 %v1620, %v1619
        %v1624 = vpack.c.b16 %v1622, %v1621
        %v1628 = vsel %vm1162, %v1614, 0
        %1630 = vmatprep.subr.bf16.mxu0 0
        %1631 = vmatpush1.bf16.msra.mxu0 %v1623
        %1632 = vmatprep.subr.bf16.mxu0 0
        %1633 = vmatpush1.bf16.msra.mxu0 %v1624
        %1634 = vmatprep.subr.bf16.mxu0 0
        %1635 = vmatpush1.bf16.msra.mxu0 0
        %1636 = vmatprep.subr.bf16.mxu0 0
        %1637 = vmatpush1.bf16.msra.mxu0 0
        %1638 = vmatprep.subr.bf16.mxu0 0
        %1639 = vmatpush1.bf16.msra.mxu0 0
        %1640 = vmatprep.subr.bf16.mxu0 0
        %1641 = vmatpush1.bf16.msra.mxu0 0
        %1642 = vmatprep.subr.bf16.mxu0 0
        %1643 = vmatpush1.bf16.msra.mxu0 0
        %1644 = vmatprep.subr.bf16.mxu0 0
        %1645 = vmatpush1.bf16.msra.mxu0 0
        %1646 = vmatprep.subr.bf16.mxu0 0
        %1647 = vmatpush1.bf16.msra.mxu0 0
        %1648 = vmatprep.subr.bf16.mxu0 0
        %1649 = vmatpush1.bf16.msra.mxu0 0
        %1650 = vmatprep.subr.bf16.mxu0 0
        %1651 = vmatpush1.bf16.msra.mxu0 0
        %1652 = vmatprep.subr.bf16.mxu0 0
        %1653 = vmatpush1.bf16.msra.mxu0 0
        %1654 = vmatprep.subr.bf16.mxu0 0
        %1655 = vmatpush1.bf16.msra.mxu0 0
        %1656 = vmatprep.subr.bf16.mxu0 0
        %1657 = vmatpush1.bf16.msra.mxu0 0
        %1658 = vmatprep.subr.bf16.mxu0 0
        %1659 = vmatpush1.bf16.msra.mxu0 0
        %1660 = vmatprep.subr.bf16.mxu0 0
        %1661 = vmatpush1.bf16.msra.mxu0 0
        %1662 = vmatprep.mubr.bf16.mxu0 0
        %1663 = vmatmul.mubr.bf16.gmra.mrb[0].mxu0 %v1628
        %v1664 = vpop.f32.mrb[0].mxu0
        %v1665 = vadd.f32 0.0, %v1664
        %v1666 = vpop.f32.mrb[0].mxu0
        %v1667 = vpop.f32.mrb[0].mxu0
        %v1668 = vadd.f32 0.0, %v1667
        %v1669 = vpop.f32.mrb[0].mxu0
        %1670 = vdwg.mxu0
        %v1675 = vunpack.c.l.b16 %v1131
        %v1676 = vunpack.c.l.b16 %v1132
        %v1677 = vunpack.c.l.b16 %v1133
        %v1678 = vunpack.c.l.b16 %v1134
        %v1679 = vpack.c.b16 %v1676, %v1675
        %v1680 = vpack.c.b16 %v1678, %v1677
        %v1684 = vsel %vm1162, %v1389, 0
        %1686 = vmatprep.subr.bf16.mxu0 0
        %1687 = vmatpush1.bf16.msra.mxu0 %v1679
        %1688 = vmatprep.subr.bf16.mxu0 0
        %1689 = vmatpush1.bf16.msra.mxu0 %v1680
        %1690 = vmatprep.subr.bf16.mxu0 0
        %1691 = vmatpush1.bf16.msra.mxu0 0
        %1692 = vmatprep.subr.bf16.mxu0 0
        %1693 = vmatpush1.bf16.msra.mxu0 0
        %1694 = vmatprep.subr.bf16.mxu0 0
        %1695 = vmatpush1.bf16.msra.mxu0 0
        %1696 = vmatprep.subr.bf16.mxu0 0
        %1697 = vmatpush1.bf16.msra.mxu0 0
        %1698 = vmatprep.subr.bf16.mxu0 0
        %1699 = vmatpush1.bf16.msra.mxu0 0
        %1700 = vmatprep.subr.bf16.mxu0 0
        %1701 = vmatpush1.bf16.msra.mxu0 0
        %1702 = vmatprep.subr.bf16.mxu0 0
        %1703 = vmatpush1.bf16.msra.mxu0 0
        %1704 = vmatprep.subr.bf16.mxu0 0
        %1705 = vmatpush1.bf16.msra.mxu0 0
        %1706 = vmatprep.subr.bf16.mxu0 0
        %1707 = vmatpush1.bf16.msra.mxu0 0
        %1708 = vmatprep.subr.bf16.mxu0 0
        %1709 = vmatpush1.bf16.msra.mxu0 0
        %1710 = vmatprep.subr.bf16.mxu0 0
        %1711 = vmatpush1.bf16.msra.mxu0 0
        %1712 = vmatprep.subr.bf16.mxu0 0
        %1713 = vmatpush1.bf16.msra.mxu0 0
        %1714 = vmatprep.subr.bf16.mxu0 0
        %1715 = vmatpush1.bf16.msra.mxu0 0
        %1716 = vmatprep.subr.bf16.mxu0 0
        %1717 = vmatpush1.bf16.msra.mxu0 0
        %1718 = vmatprep.mubr.bf16.mxu0 0
        %1719 = vmatmul.mubr.bf16.gmra.mrb[0].mxu0 %v1684
        %v1720 = vpop.f32.mrb[0].mxu0
        %v1721 = vadd.f32 %v1665, %v1720
        %v1722 = vpop.f32.mrb[0].mxu0
        %v1723 = vpop.f32.mrb[0].mxu0
        %v1724 = vadd.f32 %v1668, %v1723
        %v1725 = vpop.f32.mrb[0].mxu0
        %1726 = vdwg.mxu0
        %1727 = vrot.lane.b32.xlu0 %v1150, 64
        %v1728 = vpop.permute.xlu0 %1727
        %1729 = vrot.lane.b32.xlu0 %v1155, 64
        %v1730 = vpop.permute.xlu0 %1729
        %v1732 = vsel %vm1162, %v1728, 0
        %v1735 = vsel %vm1162, %v1730, 0
        %1737 = vmatprep.subr.bf16.mxu0 0
        %1738 = vmatpush1.bf16.xpose.msra.mxu0 %v1735
        %1739 = vmatprep.subr.bf16.mxu0 0
        %1740 = vmatpush1.bf16.xpose.msra.mxu0 0
        %1741 = vmatprep.subr.bf16.mxu0 0
        %1742 = vmatpush1.bf16.xpose.msra.mxu0 0
        %1743 = vmatprep.subr.bf16.mxu0 0
        %1744 = vmatpush1.bf16.xpose.msra.mxu0 0
        %1745 = vmatprep.subr.bf16.mxu0 0
        %1746 = vmatpush1.bf16.xpose.msra.mxu0 0
        %1747 = vmatprep.subr.bf16.mxu0 0
        %1748 = vmatpush1.bf16.xpose.msra.mxu0 0
        %1749 = vmatprep.subr.bf16.mxu0 0
        %1750 = vmatpush1.bf16.xpose.msra.mxu0 0
        %1751 = vmatprep.subr.bf16.mxu0 0
        %1752 = vmatpush1.bf16.xpose.msra.mxu0 0
        %1753 = vmatprep.subr.bf16.mxu0 0
        %1754 = vmatpush1.bf16.xpose.msra.mxu0 0
        %1755 = vmatprep.subr.bf16.mxu0 0
        %1756 = vmatpush1.bf16.xpose.msra.mxu0 0
        %1757 = vmatprep.subr.bf16.mxu0 0
        %1758 = vmatpush1.bf16.xpose.msra.mxu0 0
        %1759 = vmatprep.subr.bf16.mxu0 0
        %1760 = vmatpush1.bf16.xpose.msra.mxu0 0
        %1761 = vmatprep.subr.bf16.mxu0 0
        %1762 = vmatpush1.bf16.xpose.msra.mxu0 0
        %1763 = vmatprep.subr.bf16.mxu0 0
        %1764 = vmatpush1.bf16.xpose.msra.mxu0 0
        %1765 = vmatprep.subr.bf16.mxu0 0
        %1766 = vmatpush1.bf16.xpose.msra.mxu0 0
        %1767 = vmatprep.subr.bf16.mxu0 0
        %1768 = vmatpush1.bf16.xpose.msra.mxu0 0
        %1769 = vmatprep.mubr.bf16.mxu0 0
        %1770 = vmatmul.mubr.bf16.gmra.mrb[0].mxu0 %v1732
        %v1771 = vpop.f32.mrb[0].mxu0
        %v1772 = vadd.f32 0.0, %v1771
        %v1773 = vpop.f32.mrb[0].mxu0
        %v1774 = vpop.f32.mrb[0].mxu0
        %v1775 = vpop.f32.mrb[0].mxu0
        %1776 = vdwg.mxu0
        %1777 = vrot.lane.b32.xlu0 %v1151, 64
        %v1778 = vpop.permute.xlu0 %1777
        %1779 = vrot.lane.b32.xlu0 %v1156, 64
        %v1780 = vpop.permute.xlu0 %1779
        %v1782 = vsel %vm1162, %v1778, 0
        %v1785 = vsel %vm1162, %v1780, 0
        %1787 = vmatprep.subr.bf16.mxu0 0
        %1788 = vmatpush1.bf16.xpose.msra.mxu0 %v1785
        %1789 = vmatprep.subr.bf16.mxu0 0
        %1790 = vmatpush1.bf16.xpose.msra.mxu0 0
        %1791 = vmatprep.subr.bf16.mxu0 0
        %1792 = vmatpush1.bf16.xpose.msra.mxu0 0
        %1793 = vmatprep.subr.bf16.mxu0 0
        %1794 = vmatpush1.bf16.xpose.msra.mxu0 0
        %1795 = vmatprep.subr.bf16.mxu0 0
        %1796 = vmatpush1.bf16.xpose.msra.mxu0 0
        %1797 = vmatprep.subr.bf16.mxu0 0
        %1798 = vmatpush1.bf16.xpose.msra.mxu0 0
        %1799 = vmatprep.subr.bf16.mxu0 0
        %1800 = vmatpush1.bf16.xpose.msra.mxu0 0
        %1801 = vmatprep.subr.bf16.mxu0 0
        %1802 = vmatpush1.bf16.xpose.msra.mxu0 0
        %1803 = vmatprep.subr.bf16.mxu0 0
        %1804 = vmatpush1.bf16.xpose.msra.mxu0 0
        %1805 = vmatprep.subr.bf16.mxu0 0
        %1806 = vmatpush1.bf16.xpose.msra.mxu0 0
        %1807 = vmatprep.subr.bf16.mxu0 0
        %1808 = vmatpush1.bf16.xpose.msra.mxu0 0
        %1809 = vmatprep.subr.bf16.mxu0 0
        %1810 = vmatpush1.bf16.xpose.msra.mxu0 0
        %1811 = vmatprep.subr.bf16.mxu0 0
        %1812 = vmatpush1.bf16.xpose.msra.mxu0 0
        %1813 = vmatprep.subr.bf16.mxu0 0
        %1814 = vmatpush1.bf16.xpose.msra.mxu0 0
        %1815 = vmatprep.subr.bf16.mxu0 0
        %1816 = vmatpush1.bf16.xpose.msra.mxu0 0
        %1817 = vmatprep.subr.bf16.mxu0 0
        %1818 = vmatpush1.bf16.xpose.msra.mxu0 0
        %1819 = vmatprep.mubr.bf16.mxu0 0
        %1820 = vmatmul.mubr.bf16.gmra.mrb[0].mxu0 %v1782
        %v1821 = vpop.f32.mrb[0].mxu0
        %v1822 = vadd.f32 0.0, %v1821
        %v1823 = vpop.f32.mrb[0].mxu0
        %v1824 = vpop.f32.mrb[0].mxu0
        %v1825 = vpop.f32.mrb[0].mxu0
        %1826 = vdwg.mxu0
        %v1827 = vmul.f32 %v1772, 0.17677669
        %v1828 = vmul.f32 %v1822, 0.17677669
        %v1829 = vadd.f32 %v1827, %v1262
        %v1830 = vadd.f32 %v1828, %v1266
        %v1831 = vsel %vm1271, %v1829, -inf
        %1832 = vmax.xlane.f32.xlu0 %v1831
        %v1833 = vpop.xlane.xlu0 %1832
        %v1834 = vsel %vm1271, %v1830, -inf
        %1835 = vmax.xlane.f32.xlu0 %v1834
        %v1836 = vpop.xlane.xlu0 %1835
        %v1837 = vsub.f32 %v1829, %v1833
        %v1838 = vsub.f32 %v1830, %v1836
        %v1839 = vmul.f32 %v1837, 1.442695
        %v1840 = vpow.pop %v1839
        %v1841 = vmul.f32 %v1838, 1.442695
        %v1842 = vpow.pop %v1841
        %v1843 = vsel %vm1271, %v1840, 0.0
        %1844 = vadd.xlane.f32.xlu0 %v1843
        %v1845 = vpop.xlane.xlu0 %1844
        %v1846 = vsel %vm1271, %v1842, 0.0
        %1847 = vadd.xlane.f32.xlu0 %v1846
        %v1848 = vpop.xlane.xlu0 %1847
        %v1849 = vrcp.pop %v1845
        %v1850 = vrcp.pop %v1848
        %v1851 = vmul.f32 %v1840, %v1849
        %v1852 = vmul.f32 %v1842, %v1850
        %v1853 = vpack.c.bf16 %v1851, %v1851
        %v1854 = vpack.c.bf16 %v1852, %v1852
        %1855 = vrot.lane.b32.xlu0 %v1160, 64
        %v1856 = vpop.permute.xlu0 %1855
        %v1858 = vsel %vm1271, %v1853, 0
        %v1861 = vsel %vm1299, %v1856, 0
        %1863 = vmatprep.subr.bf16.mxu0 0
        %1864 = vmatpush1.bf16.msra.mxu0 %v1861
        %1865 = vmatprep.subr.bf16.mxu0 0
        %1866 = vmatpush1.bf16.msra.mxu0 0
        %1867 = vmatprep.subr.bf16.mxu0 0
        %1868 = vmatpush1.bf16.msra.mxu0 0
        %1869 = vmatprep.subr.bf16.mxu0 0
        %1870 = vmatpush1.bf16.msra.mxu0 0
        %1871 = vmatprep.subr.bf16.mxu0 0
        %1872 = vmatpush1.bf16.msra.mxu0 0
        %1873 = vmatprep.subr.bf16.mxu0 0
        %1874 = vmatpush1.bf16.msra.mxu0 0
        %1875 = vmatprep.subr.bf16.mxu0 0
        %1876 = vmatpush1.bf16.msra.mxu0 0
        %1877 = vmatprep.subr.bf16.mxu0 0
        %1878 = vmatpush1.bf16.msra.mxu0 0
        %1879 = vmatprep.subr.bf16.mxu0 0
        %1880 = vmatpush1.bf16.msra.mxu0 0
        %1881 = vmatprep.subr.bf16.mxu0 0
        %1882 = vmatpush1.bf16.msra.mxu0 0
        %1883 = vmatprep.subr.bf16.mxu0 0
        %1884 = vmatpush1.bf16.msra.mxu0 0
        %1885 = vmatprep.subr.bf16.mxu0 0
        %1886 = vmatpush1.bf16.msra.mxu0 0
        %1887 = vmatprep.subr.bf16.mxu0 0
        %1888 = vmatpush1.bf16.msra.mxu0 0
        %1889 = vmatprep.subr.bf16.mxu0 0
        %1890 = vmatpush1.bf16.msra.mxu0 0
        %1891 = vmatprep.subr.bf16.mxu0 0
        %1892 = vmatpush1.bf16.msra.mxu0 0
        %1893 = vmatprep.subr.bf16.mxu0 0
        %1894 = vmatpush1.bf16.msra.mxu0 0
        %1895 = vmatprep.mubr.bf16.mxu0 0
        %1896 = vmatmul.mubr.bf16.gmra.mrb[0].mxu0 %v1858
        %v1897 = vpop.f32.mrb[0].mxu0
        %v1898 = vadd.f32 0.0, %v1897
        %v1899 = vpop.f32.mrb[0].mxu0
        %v1900 = vpop.f32.mrb[0].mxu0
        %v1901 = vpop.f32.mrb[0].mxu0
        %1902 = vdwg.mxu0
        %1903 = vrot.lane.b32.xlu0 %v1161, 64
        %v1904 = vpop.permute.xlu0 %1903
        %v1906 = vsel %vm1271, %v1854, 0
        %v1909 = vsel %vm1299, %v1904, 0
        %1911 = vmatprep.subr.bf16.mxu0 0
        %1912 = vmatpush1.bf16.msra.mxu0 %v1909
        %1913 = vmatprep.subr.bf16.mxu0 0
        %1914 = vmatpush1.bf16.msra.mxu0 0
        %1915 = vmatprep.subr.bf16.mxu0 0
        %1916 = vmatpush1.bf16.msra.mxu0 0
        %1917 = vmatprep.subr.bf16.mxu0 0
        %1918 = vmatpush1.bf16.msra.mxu0 0
        %1919 = vmatprep.subr.bf16.mxu0 0
        %1920 = vmatpush1.bf16.msra.mxu0 0
        %1921 = vmatprep.subr.bf16.mxu0 0
        %1922 = vmatpush1.bf16.msra.mxu0 0
        %1923 = vmatprep.subr.bf16.mxu0 0
        %1924 = vmatpush1.bf16.msra.mxu0 0
        %1925 = vmatprep.subr.bf16.mxu0 0
        %1926 = vmatpush1.bf16.msra.mxu0 0
        %1927 = vmatprep.subr.bf16.mxu0 0
        %1928 = vmatpush1.bf16.msra.mxu0 0
        %1929 = vmatprep.subr.bf16.mxu0 0
        %1930 = vmatpush1.bf16.msra.mxu0 0
        %1931 = vmatprep.subr.bf16.mxu0 0
        %1932 = vmatpush1.bf16.msra.mxu0 0
        %1933 = vmatprep.subr.bf16.mxu0 0
        %1934 = vmatpush1.bf16.msra.mxu0 0
        %1935 = vmatprep.subr.bf16.mxu0 0
        %1936 = vmatpush1.bf16.msra.mxu0 0
        %1937 = vmatprep.subr.bf16.mxu0 0
        %1938 = vmatpush1.bf16.msra.mxu0 0
        %1939 = vmatprep.subr.bf16.mxu0 0
        %1940 = vmatpush1.bf16.msra.mxu0 0
        %1941 = vmatprep.subr.bf16.mxu0 0
        %1942 = vmatpush1.bf16.msra.mxu0 0
        %1943 = vmatprep.mubr.bf16.mxu0 0
        %1944 = vmatmul.mubr.bf16.gmra.mrb[0].mxu0 %v1906
        %v1945 = vpop.f32.mrb[0].mxu0
        %v1946 = vadd.f32 0.0, %v1945
        %v1947 = vpop.f32.mrb[0].mxu0
        %v1948 = vpop.f32.mrb[0].mxu0
        %v1949 = vpop.f32.mrb[0].mxu0
        %1950 = vdwg.mxu0
        %v1951 = vpack.c.bf16 %v1946, %v1898
        %v1956 = vunpack.c.l.b16 %v1139
        %v1957 = vunpack.c.l.b16 %v1140
        %v1958 = vunpack.c.l.b16 %v1141
        %v1959 = vunpack.c.l.b16 %v1142
        %v1960 = vpack.c.b16 %v1957, %v1956
        %v1961 = vpack.c.b16 %v1959, %v1958
        %v1965 = vsel %vm1162, %v1951, 0
        %1967 = vmatprep.subr.bf16.mxu0 0
        %1968 = vmatpush1.bf16.msra.mxu0 %v1960
        %1969 = vmatprep.subr.bf16.mxu0 0
        %1970 = vmatpush1.bf16.msra.mxu0 %v1961
        %1971 = vmatprep.subr.bf16.mxu0 0
        %1972 = vmatpush1.bf16.msra.mxu0 0
        %1973 = vmatprep.subr.bf16.mxu0 0
        %1974 = vmatpush1.bf16.msra.mxu0 0
        %1975 = vmatprep.subr.bf16.mxu0 0
        %1976 = vmatpush1.bf16.msra.mxu0 0
        %1977 = vmatprep.subr.bf16.mxu0 0
        %1978 = vmatpush1.bf16.msra.mxu0 0
        %1979 = vmatprep.subr.bf16.mxu0 0
        %1980 = vmatpush1.bf16.msra.mxu0 0
        %1981 = vmatprep.subr.bf16.mxu0 0
        %1982 = vmatpush1.bf16.msra.mxu0 0
        %1983 = vmatprep.subr.bf16.mxu0 0
        %1984 = vmatpush1.bf16.msra.mxu0 0
        %1985 = vmatprep.subr.bf16.mxu0 0
        %1986 = vmatpush1.bf16.msra.mxu0 0
        %1987 = vmatprep.subr.bf16.mxu0 0
        %1988 = vmatpush1.bf16.msra.mxu0 0
        %1989 = vmatprep.subr.bf16.mxu0 0
        %1990 = vmatpush1.bf16.msra.mxu0 0
        %1991 = vmatprep.subr.bf16.mxu0 0
        %1992 = vmatpush1.bf16.msra.mxu0 0
        %1993 = vmatprep.subr.bf16.mxu0 0
        %1994 = vmatpush1.bf16.msra.mxu0 0
        %1995 = vmatprep.subr.bf16.mxu0 0
        %1996 = vmatpush1.bf16.msra.mxu0 0
        %1997 = vmatprep.subr.bf16.mxu0 0
        %1998 = vmatpush1.bf16.msra.mxu0 0
        %1999 = vmatprep.mubr.bf16.mxu0 0
        %2000 = vmatmul.mubr.bf16.gmra.mrb[0].mxu0 %v1965
        %v2001 = vpop.f32.mrb[0].mxu0
        %v2002 = vadd.f32 0.0, %v2001
        %v2003 = vpop.f32.mrb[0].mxu0
        %v2004 = vpop.f32.mrb[0].mxu0
        %v2005 = vadd.f32 0.0, %v2004
        %v2006 = vpop.f32.mrb[0].mxu0
        %2007 = vdwg.mxu0
        %v2008 = vadd.f32 %v1721, %v2002
        %v2009 = vadd.f32 %v1724, %v2005
        %2010 = vrot.lane.b32.xlu0 %v1150, 32
        %v2011 = vpop.permute.xlu0 %2010
        %2012 = vrot.lane.b32.xlu0 %v1155, 32
        %v2013 = vpop.permute.xlu0 %2012
        %v2015 = vsel %vm1162, %v2011, 0
        %v2018 = vsel %vm1162, %v2013, 0
        %2020 = vmatprep.subr.bf16.mxu0 0
        %2021 = vmatpush1.bf16.xpose.msra.mxu0 %v2018
        %2022 = vmatprep.subr.bf16.mxu0 0
        %2023 = vmatpush1.bf16.xpose.msra.mxu0 0
        %2024 = vmatprep.subr.bf16.mxu0 0
        %2025 = vmatpush1.bf16.xpose.msra.mxu0 0
        %2026 = vmatprep.subr.bf16.mxu0 0
        %2027 = vmatpush1.bf16.xpose.msra.mxu0 0
        %2028 = vmatprep.subr.bf16.mxu0 0
        %2029 = vmatpush1.bf16.xpose.msra.mxu0 0
        %2030 = vmatprep.subr.bf16.mxu0 0
        %2031 = vmatpush1.bf16.xpose.msra.mxu0 0
        %2032 = vmatprep.subr.bf16.mxu0 0
        %2033 = vmatpush1.bf16.xpose.msra.mxu0 0
        %2034 = vmatprep.subr.bf16.mxu0 0
        %2035 = vmatpush1.bf16.xpose.msra.mxu0 0
        %2036 = vmatprep.subr.bf16.mxu0 0
        %2037 = vmatpush1.bf16.xpose.msra.mxu0 0
        %2038 = vmatprep.subr.bf16.mxu0 0
        %2039 = vmatpush1.bf16.xpose.msra.mxu0 0
        %2040 = vmatprep.subr.bf16.mxu0 0
        %2041 = vmatpush1.bf16.xpose.msra.mxu0 0
        %2042 = vmatprep.subr.bf16.mxu0 0
        %2043 = vmatpush1.bf16.xpose.msra.mxu0 0
        %2044 = vmatprep.subr.bf16.mxu0 0
        %2045 = vmatpush1.bf16.xpose.msra.mxu0 0
        %2046 = vmatprep.subr.bf16.mxu0 0
        %2047 = vmatpush1.bf16.xpose.msra.mxu0 0
        %2048 = vmatprep.subr.bf16.mxu0 0
        %2049 = vmatpush1.bf16.xpose.msra.mxu0 0
        %2050 = vmatprep.subr.bf16.mxu0 0
        %2051 = vmatpush1.bf16.xpose.msra.mxu0 0
        %2052 = vmatprep.mubr.bf16.mxu0 0
        %2053 = vmatmul.mubr.bf16.gmra.mrb[0].mxu0 %v2015
        %v2054 = vpop.f32.mrb[0].mxu0
        %v2055 = vadd.f32 0.0, %v2054
        %v2056 = vpop.f32.mrb[0].mxu0
        %v2057 = vpop.f32.mrb[0].mxu0
        %v2058 = vpop.f32.mrb[0].mxu0
        %2059 = vdwg.mxu0
        %2060 = vrot.lane.b32.xlu0 %v1151, 32
        %v2061 = vpop.permute.xlu0 %2060
        %2062 = vrot.lane.b32.xlu0 %v1156, 32
        %v2063 = vpop.permute.xlu0 %2062
        %v2065 = vsel %vm1162, %v2061, 0
        %v2068 = vsel %vm1162, %v2063, 0
        %2070 = vmatprep.subr.bf16.mxu0 0
        %2071 = vmatpush1.bf16.xpose.msra.mxu0 %v2068
        %2072 = vmatprep.subr.bf16.mxu0 0
        %2073 = vmatpush1.bf16.xpose.msra.mxu0 0
        %2074 = vmatprep.subr.bf16.mxu0 0
        %2075 = vmatpush1.bf16.xpose.msra.mxu0 0
        %2076 = vmatprep.subr.bf16.mxu0 0
        %2077 = vmatpush1.bf16.xpose.msra.mxu0 0
        %2078 = vmatprep.subr.bf16.mxu0 0
        %2079 = vmatpush1.bf16.xpose.msra.mxu0 0
        %2080 = vmatprep.subr.bf16.mxu0 0
        %2081 = vmatpush1.bf16.xpose.msra.mxu0 0
        %2082 = vmatprep.subr.bf16.mxu0 0
        %2083 = vmatpush1.bf16.xpose.msra.mxu0 0
        %2084 = vmatprep.subr.bf16.mxu0 0
        %2085 = vmatpush1.bf16.xpose.msra.mxu0 0
        %2086 = vmatprep.subr.bf16.mxu0 0
        %2087 = vmatpush1.bf16.xpose.msra.mxu0 0
        %2088 = vmatprep.subr.bf16.mxu0 0
        %2089 = vmatpush1.bf16.xpose.msra.mxu0 0
        %2090 = vmatprep.subr.bf16.mxu0 0
        %2091 = vmatpush1.bf16.xpose.msra.mxu0 0
        %2092 = vmatprep.subr.bf16.mxu0 0
        %2093 = vmatpush1.bf16.xpose.msra.mxu0 0
        %2094 = vmatprep.subr.bf16.mxu0 0
        %2095 = vmatpush1.bf16.xpose.msra.mxu0 0
        %2096 = vmatprep.subr.bf16.mxu0 0
        %2097 = vmatpush1.bf16.xpose.msra.mxu0 0
        %2098 = vmatprep.subr.bf16.mxu0 0
        %2099 = vmatpush1.bf16.xpose.msra.mxu0 0
        %2100 = vmatprep.subr.bf16.mxu0 0
        %2101 = vmatpush1.bf16.xpose.msra.mxu0 0
        %2102 = vmatprep.mubr.bf16.mxu0 0
        %2103 = vmatmul.mubr.bf16.gmra.mrb[0].mxu0 %v2065
        %v2104 = vpop.f32.mrb[0].mxu0
        %v2105 = vadd.f32 0.0, %v2104
        %v2106 = vpop.f32.mrb[0].mxu0
        %v2107 = vpop.f32.mrb[0].mxu0
        %v2108 = vpop.f32.mrb[0].mxu0
        %2109 = vdwg.mxu0
        %v2110 = vmul.f32 %v2055, 0.17677669
        %v2111 = vmul.f32 %v2105, 0.17677669
        %v2112 = vadd.f32 %v2110, %v1262
        %v2113 = vadd.f32 %v2111, %v1266
        %v2114 = vsel %vm1271, %v2112, -inf
        %2115 = vmax.xlane.f32.xlu0 %v2114
        %v2116 = vpop.xlane.xlu0 %2115
        %v2117 = vsel %vm1271, %v2113, -inf
        %2118 = vmax.xlane.f32.xlu0 %v2117
        %v2119 = vpop.xlane.xlu0 %2118
        %v2120 = vsub.f32 %v2112, %v2116
        %v2121 = vsub.f32 %v2113, %v2119
        %v2122 = vmul.f32 %v2120, 1.442695
        %v2123 = vpow.pop %v2122
        %v2124 = vmul.f32 %v2121, 1.442695
        %v2125 = vpow.pop %v2124
        %v2126 = vsel %vm1271, %v2123, 0.0
        %2127 = vadd.xlane.f32.xlu0 %v2126
        %v2128 = vpop.xlane.xlu0 %2127
        %v2129 = vsel %vm1271, %v2125, 0.0
        %2130 = vadd.xlane.f32.xlu0 %v2129
        %v2131 = vpop.xlane.xlu0 %2130
        %v2132 = vrcp.pop %v2128
        %v2133 = vrcp.pop %v2131
        %v2134 = vmul.f32 %v2123, %v2132
        %v2135 = vmul.f32 %v2125, %v2133
        %v2136 = vpack.c.bf16 %v2134, %v2134
        %v2137 = vpack.c.bf16 %v2135, %v2135
        %2138 = vrot.lane.b32.xlu0 %v1160, 32
        %v2139 = vpop.permute.xlu0 %2138
        %v2141 = vsel %vm1271, %v2136, 0
        %v2144 = vsel %vm1299, %v2139, 0
        %2146 = vmatprep.subr.bf16.mxu0 0
        %2147 = vmatpush1.bf16.msra.mxu0 %v2144
        %2148 = vmatprep.subr.bf16.mxu0 0
        %2149 = vmatpush1.bf16.msra.mxu0 0
        %2150 = vmatprep.subr.bf16.mxu0 0
        %2151 = vmatpush1.bf16.msra.mxu0 0
        %2152 = vmatprep.subr.bf16.mxu0 0
        %2153 = vmatpush1.bf16.msra.mxu0 0
        %2154 = vmatprep.subr.bf16.mxu0 0
        %2155 = vmatpush1.bf16.msra.mxu0 0
        %2156 = vmatprep.subr.bf16.mxu0 0
        %2157 = vmatpush1.bf16.msra.mxu0 0
        %2158 = vmatprep.subr.bf16.mxu0 0
        %2159 = vmatpush1.bf16.msra.mxu0 0
        %2160 = vmatprep.subr.bf16.mxu0 0
        %2161 = vmatpush1.bf16.msra.mxu0 0
        %2162 = vmatprep.subr.bf16.mxu0 0
        %2163 = vmatpush1.bf16.msra.mxu0 0
        %2164 = vmatprep.subr.bf16.mxu0 0
        %2165 = vmatpush1.bf16.msra.mxu0 0
        %2166 = vmatprep.subr.bf16.mxu0 0
        %2167 = vmatpush1.bf16.msra.mxu0 0
        %2168 = vmatprep.subr.bf16.mxu0 0
        %2169 = vmatpush1.bf16.msra.mxu0 0
        %2170 = vmatprep.subr.bf16.mxu0 0
        %2171 = vmatpush1.bf16.msra.mxu0 0
        %2172 = vmatprep.subr.bf16.mxu0 0
        %2173 = vmatpush1.bf16.msra.mxu0 0
        %2174 = vmatprep.subr.bf16.mxu0 0
        %2175 = vmatpush1.bf16.msra.mxu0 0
        %2176 = vmatprep.subr.bf16.mxu0 0
        %2177 = vmatpush1.bf16.msra.mxu0 0
        %2178 = vmatprep.mubr.bf16.mxu0 0
        %2179 = vmatmul.mubr.bf16.gmra.mrb[0].mxu0 %v2141
        %v2180 = vpop.f32.mrb[0].mxu0
        %v2181 = vadd.f32 0.0, %v2180
        %v2182 = vpop.f32.mrb[0].mxu0
        %v2183 = vpop.f32.mrb[0].mxu0
        %v2184 = vpop.f32.mrb[0].mxu0
        %2185 = vdwg.mxu0
        %2186 = vrot.lane.b32.xlu0 %v1161, 32
        %v2187 = vpop.permute.xlu0 %2186
        %v2189 = vsel %vm1271, %v2137, 0
        %v2192 = vsel %vm1299, %v2187, 0
        %2194 = vmatprep.subr.bf16.mxu0 0
        %2195 = vmatpush1.bf16.msra.mxu0 %v2192
        %2196 = vmatprep.subr.bf16.mxu0 0
        %2197 = vmatpush1.bf16.msra.mxu0 0
        %2198 = vmatprep.subr.bf16.mxu0 0
        %2199 = vmatpush1.bf16.msra.mxu0 0
        %2200 = vmatprep.subr.bf16.mxu0 0
        %2201 = vmatpush1.bf16.msra.mxu0 0
        %2202 = vmatprep.subr.bf16.mxu0 0
        %2203 = vmatpush1.bf16.msra.mxu0 0
        %2204 = vmatprep.subr.bf16.mxu0 0
        %2205 = vmatpush1.bf16.msra.mxu0 0
        %2206 = vmatprep.subr.bf16.mxu0 0
        %2207 = vmatpush1.bf16.msra.mxu0 0
        %2208 = vmatprep.subr.bf16.mxu0 0
        %2209 = vmatpush1.bf16.msra.mxu0 0
        %2210 = vmatprep.subr.bf16.mxu0 0
        %2211 = vmatpush1.bf16.msra.mxu0 0
        %2212 = vmatprep.subr.bf16.mxu0 0
        %2213 = vmatpush1.bf16.msra.mxu0 0
        %2214 = vmatprep.subr.bf16.mxu0 0
        %2215 = vmatpush1.bf16.msra.mxu0 0
        %2216 = vmatprep.subr.bf16.mxu0 0
        %2217 = vmatpush1.bf16.msra.mxu0 0
        %2218 = vmatprep.subr.bf16.mxu0 0
        %2219 = vmatpush1.bf16.msra.mxu0 0
        %2220 = vmatprep.subr.bf16.mxu0 0
        %2221 = vmatpush1.bf16.msra.mxu0 0
        %2222 = vmatprep.subr.bf16.mxu0 0
        %2223 = vmatpush1.bf16.msra.mxu0 0
        %2224 = vmatprep.subr.bf16.mxu0 0
        %2225 = vmatpush1.bf16.msra.mxu0 0
        %2226 = vmatprep.mubr.bf16.mxu0 0
        %2227 = vmatmul.mubr.bf16.gmra.mrb[0].mxu0 %v2189
        %v2228 = vpop.f32.mrb[0].mxu0
        %v2229 = vadd.f32 0.0, %v2228
        %v2230 = vpop.f32.mrb[0].mxu0
        %v2231 = vpop.f32.mrb[0].mxu0
        %v2232 = vpop.f32.mrb[0].mxu0
        %2233 = vdwg.mxu0
        %v2234 = vpack.c.bf16 %v2229, %v2181
        %v2239 = vunpack.c.l.b16 %v1143
        %v2240 = vunpack.c.l.b16 %v1144
        %v2241 = vunpack.c.l.b16 %v1145
        %v2242 = vunpack.c.l.b16 %v1146
        %v2243 = vpack.c.b16 %v2240, %v2239
        %v2244 = vpack.c.b16 %v2242, %v2241
        %v2248 = vsel %vm1162, %v2234, 0
        %2250 = vmatprep.subr.bf16.mxu0 0
        %2251 = vmatpush1.bf16.msra.mxu0 %v2243
        %2252 = vmatprep.subr.bf16.mxu0 0
        %2253 = vmatpush1.bf16.msra.mxu0 %v2244
        %2254 = vmatprep.subr.bf16.mxu0 0
        %2255 = vmatpush1.bf16.msra.mxu0 0
        %2256 = vmatprep.subr.bf16.mxu0 0
        %2257 = vmatpush1.bf16.msra.mxu0 0
        %2258 = vmatprep.subr.bf16.mxu0 0
        %2259 = vmatpush1.bf16.msra.mxu0 0
        %2260 = vmatprep.subr.bf16.mxu0 0
        %2261 = vmatpush1.bf16.msra.mxu0 0
        %2262 = vmatprep.subr.bf16.mxu0 0
        %2263 = vmatpush1.bf16.msra.mxu0 0
        %2264 = vmatprep.subr.bf16.mxu0 0
        %2265 = vmatpush1.bf16.msra.mxu0 0
        %2266 = vmatprep.subr.bf16.mxu0 0
        %2267 = vmatpush1.bf16.msra.mxu0 0
        %2268 = vmatprep.subr.bf16.mxu0 0
        %2269 = vmatpush1.bf16.msra.mxu0 0
        %2270 = vmatprep.subr.bf16.mxu0 0
        %2271 = vmatpush1.bf16.msra.mxu0 0
        %2272 = vmatprep.subr.bf16.mxu0 0
        %2273 = vmatpush1.bf16.msra.mxu0 0
        %2274 = vmatprep.subr.bf16.mxu0 0
        %2275 = vmatpush1.bf16.msra.mxu0 0
        %2276 = vmatprep.subr.bf16.mxu0 0
        %2277 = vmatpush1.bf16.msra.mxu0 0
        %2278 = vmatprep.subr.bf16.mxu0 0
        %2279 = vmatpush1.bf16.msra.mxu0 0
        %2280 = vmatprep.subr.bf16.mxu0 0
        %2281 = vmatpush1.bf16.msra.mxu0 0
        %2282 = vmatprep.mubr.bf16.mxu0 0
        %2283 = vmatmul.mubr.bf16.gmra.mrb[0].mxu0 %v2248
        %v2284 = vpop.f32.mrb[0].mxu0
        %v2285 = vadd.f32 0.0, %v2284
        %v2286 = vpop.f32.mrb[0].mxu0
        %v2287 = vpop.f32.mrb[0].mxu0
        %v2288 = vadd.f32 0.0, %v2287
        %v2289 = vpop.f32.mrb[0].mxu0
        %2290 = vdwg.mxu0
        %v2291 = vadd.f32 %v2008, %v2285
        %v2292 = vadd.f32 %v2009, %v2288
        %v2293 = vld [vmem:[%s787] sm:$0x1]
        %v2295 = vlaneseq
        %v2296 = vshrl.u32 %v2295, 7
        %v2297 = vsub.s32 0, %v2296
        %v2298 = vrot.slane %v2293, %v2297
        %v2300 = vadd.f32 %v2291, %v2298
        %v2301 = vadd.f32 %v2292, %v2298
        %v2302 = vadd.f32 %v2300, %v862
        %v2303 = vadd.f32 %v2301, %v863
        %v2304 = vld [vmem:[%s790] sm:$0x1]
        %v2305 = vld [vmem:[%s793] sm:$0x1]
        %2306 = vadd.xlane.f32.xlu0 %v2302
        %v2307 = vpop.xlane.xlu0 %2306
        %2308 = vadd.xlane.f32.xlu0 %v2303
        %v2309 = vpop.xlane.xlu0 %2308
        %v2310 = vrcp.pop 128.0
        %v2311 = vmul.f32 %v2307, %v2310
        %v2312 = vmul.f32 %v2309, %v2310
        %v2313 = vsub.f32 %v2302, %v2311
        %v2314 = vsub.f32 %v2303, %v2312
        %v2315 = vmul.f32 %v2313, %v2313
        %v2316 = vmul.f32 %v2314, %v2314
        %2317 = vadd.xlane.f32.xlu0 %v2315
        %v2318 = vpop.xlane.xlu0 %2317
        %2319 = vadd.xlane.f32.xlu0 %v2316
        %v2320 = vpop.xlane.xlu0 %2319
        %v2321 = vmul.f32 %v2318, %v2310
        %v2322 = vmul.f32 %v2320, %v2310
        %v2323 = vadd.f32 %v2321, 1e-12
        %v2324 = vadd.f32 %v2322, 1e-12
        %v2325 = vrsqrt.pop %v2323
        %v2326 = vrsqrt.pop %v2324
        %v2327 = vmul.f32 %v2313, %v2325
        %v2328 = vmul.f32 %v2314, %v2326
        %v2330 = vlaneseq
        %v2331 = vshrl.u32 %v2330, 7
        %v2332 = vsub.s32 0, %v2331
        %v2333 = vrot.slane %v2304, %v2332
        %v2335 = vmul.f32 %v2327, %v2333
        %v2336 = vmul.f32 %v2328, %v2333
        %v2338 = vlaneseq
        %v2339 = vshrl.u32 %v2338, 7
        %v2340 = vsub.s32 0, %v2339
        %v2341 = vrot.slane %v2305, %v2340
        %v2343 = vadd.f32 %v2335, %v2341
        %v2344 = vadd.f32 %v2336, %v2341
        %v2345 = vpack.c.bf16 %v2344, %v2343
        %v2346 = vld [vmem:[%s798] sm:$0xff]
        %v2347 = vld [vmem:[%s798 + $0x8] sm:$0xff]
        %v2348 = vld [vmem:[%s798 + $0x10] sm:$0xff]
        %v2349 = vld [vmem:[%s798 + $0x18] sm:$0xff]
        %v2350 = vld [vmem:[%s798 + $0x20] sm:$0xff]
        %v2351 = vld [vmem:[%s798 + $0x28] sm:$0xff]
        %v2352 = vld [vmem:[%s798 + $0x30] sm:$0xff]
        %v2353 = vld [vmem:[%s798 + $0x38] sm:$0xff]
        %v2354 = vld [vmem:[%s798 + $0x40] sm:$0xff]
        %v2355 = vld [vmem:[%s798 + $0x48] sm:$0xff]
        %v2356 = vld [vmem:[%s798 + $0x50] sm:$0xff]
        %v2357 = vld [vmem:[%s798 + $0x58] sm:$0xff]
        %v2358 = vld [vmem:[%s798 + $0x60] sm:$0xff]
        %v2359 = vld [vmem:[%s798 + $0x68] sm:$0xff]
        %v2360 = vld [vmem:[%s798 + $0x70] sm:$0xff]
        %v2361 = vld [vmem:[%s798 + $0x78] sm:$0xff]
        %v2362 = vld [vmem:[%s802] sm:$0x3]
        %v2364 = vlaneseq
        %v2365 = vshrl.u32 %v2364, 7
        %v2366 = vsub.s32 0, %v2365
        %v2367 = vrot.slane %v2362, %v2366
        %v2368 = vlaneseq
        %v2369 = vshrl.u32 %v2368, 7
        %v2370 = vsub.s32 1, %v2369
        %v2371 = vrot.slane %v2362, %v2370
        %v2390 = vunpack.c.l.b16 %v2346
        %v2391 = vunpack.c.h.b16 %v2346
        %v2392 = vunpack.c.l.b16 %v2347
        %v2393 = vunpack.c.h.b16 %v2347
        %v2394 = vunpack.c.l.b16 %v2348
        %v2395 = vunpack.c.h.b16 %v2348
        %v2396 = vunpack.c.l.b16 %v2349
        %v2397 = vunpack.c.h.b16 %v2349
        %v2398 = vunpack.c.l.b16 %v2350
        %v2399 = vunpack.c.h.b16 %v2350
        %v2400 = vunpack.c.l.b16 %v2351
        %v2401 = vunpack.c.h.b16 %v2351
        %v2402 = vunpack.c.l.b16 %v2352
        %v2403 = vunpack.c.h.b16 %v2352
        %v2404 = vunpack.c.l.b16 %v2353
        %v2405 = vunpack.c.h.b16 %v2353
        %v2406 = vunpack.c.l.b16 %v2354
        %v2407 = vunpack.c.h.b16 %v2354
        %v2408 = vunpack.c.l.b16 %v2355
        %v2409 = vunpack.c.h.b16 %v2355
        %v2410 = vunpack.c.l.b16 %v2356
        %v2411 = vunpack.c.h.b16 %v2356
        %v2412 = vunpack.c.l.b16 %v2357
        %v2413 = vunpack.c.h.b16 %v2357
        %v2414 = vunpack.c.l.b16 %v2358
        %v2415 = vunpack.c.h.b16 %v2358
        %v2416 = vunpack.c.l.b16 %v2359
        %v2417 = vunpack.c.h.b16 %v2359
        %v2418 = vunpack.c.l.b16 %v2360
        %v2419 = vunpack.c.h.b16 %v2360
        %v2420 = vunpack.c.l.b16 %v2361
        %v2421 = vunpack.c.h.b16 %v2361
        %v2422 = vpack.c.b16 %v2392, %v2390
        %v2423 = vpack.c.b16 %v2393, %v2391
        %v2424 = vpack.c.b16 %v2396, %v2394
        %v2425 = vpack.c.b16 %v2397, %v2395
        %v2426 = vpack.c.b16 %v2400, %v2398
        %v2427 = vpack.c.b16 %v2401, %v2399
        %v2428 = vpack.c.b16 %v2404, %v2402
        %v2429 = vpack.c.b16 %v2405, %v2403
        %v2430 = vpack.c.b16 %v2408, %v2406
        %v2431 = vpack.c.b16 %v2409, %v2407
        %v2432 = vpack.c.b16 %v2412, %v2410
        %v2433 = vpack.c.b16 %v2413, %v2411
        %v2434 = vpack.c.b16 %v2416, %v2414
        %v2435 = vpack.c.b16 %v2417, %v2415
        %v2436 = vpack.c.b16 %v2420, %v2418
        %v2437 = vpack.c.b16 %v2421, %v2419
        %2454 = vmatprep.subr.bf16.mxu0 %v2423
        %2455 = vmatpush1.bf16.msra.mxu0 %v2422
        %2456 = vmatprep.subr.bf16.mxu0 %v2425
        %2457 = vmatpush1.bf16.msra.mxu0 %v2424
        %2458 = vmatprep.subr.bf16.mxu0 %v2427
        %2459 = vmatpush1.bf16.msra.mxu0 %v2426
        %2460 = vmatprep.subr.bf16.mxu0 %v2429
        %2461 = vmatpush1.bf16.msra.mxu0 %v2428
        %2462 = vmatprep.subr.bf16.mxu0 %v2431
        %2463 = vmatpush1.bf16.msra.mxu0 %v2430
        %2464 = vmatprep.subr.bf16.mxu0 %v2433
        %2465 = vmatpush1.bf16.msra.mxu0 %v2432
        %2466 = vmatprep.subr.bf16.mxu0 %v2435
        %2467 = vmatpush1.bf16.msra.mxu0 %v2434
        %2468 = vmatprep.subr.bf16.mxu0 %v2437
        %2469 = vmatpush1.bf16.msra.mxu0 %v2436
        %2470 = vmatprep.subr.bf16.mxu0 0
        %2471 = vmatpush1.bf16.msra.mxu0 0
        %2472 = vmatprep.subr.bf16.mxu0 0
        %2473 = vmatpush1.bf16.msra.mxu0 0
        %2474 = vmatprep.subr.bf16.mxu0 0
        %2475 = vmatpush1.bf16.msra.mxu0 0
        %2476 = vmatprep.subr.bf16.mxu0 0
        %2477 = vmatpush1.bf16.msra.mxu0 0
        %2478 = vmatprep.subr.bf16.mxu0 0
        %2479 = vmatpush1.bf16.msra.mxu0 0
        %2480 = vmatprep.subr.bf16.mxu0 0
        %2481 = vmatpush1.bf16.msra.mxu0 0
        %2482 = vmatprep.subr.bf16.mxu0 0
        %2483 = vmatpush1.bf16.msra.mxu0 0
        %2484 = vmatprep.subr.bf16.mxu0 0
        %2485 = vmatpush1.bf16.msra.mxu0 0
        %2486 = vmatprep.mubr.bf16.mxu0 0
        %2487 = vmatmul.mubr.bf16.gmra.mrb[0].mxu0 %v2345
        %v2488 = vpop.f32.mrb[0].mxu0
        %v2489 = vadd.f32 %v2367, %v2488
        %v2490 = vpop.f32.mrb[0].mxu0
        %v2491 = vadd.f32 %v2371, %v2490
        %v2492 = vpop.f32.mrb[0].mxu0
        %v2493 = vadd.f32 %v2367, %v2492
        %v2494 = vpop.f32.mrb[0].mxu0
        %v2495 = vadd.f32 %v2371, %v2494
        %2496 = vdwg.mxu0
        %v2497 = vmul.f32 %v2489, %v2489
        %v2498 = vmul.f32 %v2491, %v2491
        %v2499 = vmul.f32 %v2493, %v2493
        %v2500 = vmul.f32 %v2495, %v2495
        %v2501 = vmul.f32 %v2489, %v2497
        %v2502 = vmul.f32 %v2491, %v2498
        %v2503 = vmul.f32 %v2493, %v2499
        %v2504 = vmul.f32 %v2495, %v2500
        %v2505 = vmul.f32 %v2501, 0.044715
        %v2506 = vmul.f32 %v2502, 0.044715
        %v2507 = vmul.f32 %v2503, 0.044715
        %v2508 = vmul.f32 %v2504, 0.044715
        %v2509 = vadd.f32 %v2489, %v2505
        %v2510 = vadd.f32 %v2491, %v2506
        %v2511 = vadd.f32 %v2493, %v2507
        %v2512 = vadd.f32 %v2495, %v2508
        %v2513 = vmul.f32 %v2509, 0.7978846
        %v2514 = vmul.f32 %v2510, 0.7978846
        %v2515 = vmul.f32 %v2511, 0.7978846
        %v2516 = vmul.f32 %v2512, 0.7978846
        %v2517 = vtanh.pop %v2513
        %v2518 = vtanh.pop %v2514
        %v2519 = vtanh.pop %v2515
        %v2520 = vtanh.pop %v2516
        %v2521 = vadd.f32 %v2517, 1.0
        %v2522 = vadd.f32 %v2518, 1.0
        %v2523 = vadd.f32 %v2519, 1.0
        %v2524 = vadd.f32 %v2520, 1.0
        %v2525 = vmul.f32 %v2521, 0.5
        %v2526 = vmul.f32 %v2522, 0.5
        %v2527 = vmul.f32 %v2523, 0.5
        %v2528 = vmul.f32 %v2524, 0.5
        %v2529 = vmul.f32 %v2489, %v2525
        %v2530 = vmul.f32 %v2491, %v2526
        %v2531 = vmul.f32 %v2493, %v2527
        %v2532 = vmul.f32 %v2495, %v2528
        %v2533 = vpack.c.bf16 %v2531, %v2529
        %v2534 = vpack.c.bf16 %v2532, %v2530
        %v2535 = vld [vmem:[%s688] sm:$0xf]
        %v2536 = vld [vmem:[%s688 + $0x4] sm:$0xf]
        %v2537 = vld [vmem:[%s688 + $0x8] sm:$0xf]
        %v2538 = vld [vmem:[%s688 + $0xc] sm:$0xf]
        %v2539 = vld [vmem:[%s688 + $0x10] sm:$0xf]
        %v2540 = vld [vmem:[%s688 + $0x14] sm:$0xf]
        %v2541 = vld [vmem:[%s688 + $0x18] sm:$0xf]
        %v2542 = vld [vmem:[%s688 + $0x1c] sm:$0xf]
        %v2543 = vld [vmem:[%s688 + $0x20] sm:$0xf]
        %v2544 = vld [vmem:[%s688 + $0x24] sm:$0xf]
        %v2545 = vld [vmem:[%s688 + $0x28] sm:$0xf]
        %v2546 = vld [vmem:[%s688 + $0x2c] sm:$0xf]
        %v2547 = vld [vmem:[%s688 + $0x30] sm:$0xf]
        %v2548 = vld [vmem:[%s688 + $0x34] sm:$0xf]
        %v2549 = vld [vmem:[%s688 + $0x38] sm:$0xf]
        %v2550 = vld [vmem:[%s688 + $0x3c] sm:$0xf]
        %v2551 = vld [vmem:[%s688 + $0x40] sm:$0xf]
        %v2552 = vld [vmem:[%s688 + $0x44] sm:$0xf]
        %v2553 = vld [vmem:[%s688 + $0x48] sm:$0xf]
        %v2554 = vld [vmem:[%s688 + $0x4c] sm:$0xf]
        %v2555 = vld [vmem:[%s688 + $0x50] sm:$0xf]
        %v2556 = vld [vmem:[%s688 + $0x54] sm:$0xf]
        %v2557 = vld [vmem:[%s688 + $0x58] sm:$0xf]
        %v2558 = vld [vmem:[%s688 + $0x5c] sm:$0xf]
        %v2559 = vld [vmem:[%s688 + $0x60] sm:$0xf]
        %v2560 = vld [vmem:[%s688 + $0x64] sm:$0xf]
        %v2561 = vld [vmem:[%s688 + $0x68] sm:$0xf]
        %v2562 = vld [vmem:[%s688 + $0x6c] sm:$0xf]
        %v2563 = vld [vmem:[%s688 + $0x70] sm:$0xf]
        %v2564 = vld [vmem:[%s688 + $0x74] sm:$0xf]
        %v2565 = vld [vmem:[%s688 + $0x78] sm:$0xf]
        %v2566 = vld [vmem:[%s688 + $0x7c] sm:$0xf]
        %v2567 = vld [vmem:[%s805] sm:$0x1]
        %v2569 = vlaneseq
        %v2570 = vshrl.u32 %v2569, 7
        %v2571 = vsub.s32 0, %v2570
        %v2572 = vrot.slane %v2567, %v2571
        %v2606 = vunpack.c.l.b16 %v2535
        %v2607 = vunpack.c.l.b16 %v2536
        %v2608 = vunpack.c.l.b16 %v2537
        %v2609 = vunpack.c.l.b16 %v2538
        %v2610 = vunpack.c.l.b16 %v2539
        %v2611 = vunpack.c.l.b16 %v2540
        %v2612 = vunpack.c.l.b16 %v2541
        %v2613 = vunpack.c.l.b16 %v2542
        %v2614 = vunpack.c.l.b16 %v2543
        %v2615 = vunpack.c.l.b16 %v2544
        %v2616 = vunpack.c.l.b16 %v2545
        %v2617 = vunpack.c.l.b16 %v2546
        %v2618 = vunpack.c.l.b16 %v2547
        %v2619 = vunpack.c.l.b16 %v2548
        %v2620 = vunpack.c.l.b16 %v2549
        %v2621 = vunpack.c.l.b16 %v2550
        %v2622 = vunpack.c.l.b16 %v2551
        %v2623 = vunpack.c.l.b16 %v2552
        %v2624 = vunpack.c.l.b16 %v2553
        %v2625 = vunpack.c.l.b16 %v2554
        %v2626 = vunpack.c.l.b16 %v2555
        %v2627 = vunpack.c.l.b16 %v2556
        %v2628 = vunpack.c.l.b16 %v2557
        %v2629 = vunpack.c.l.b16 %v2558
        %v2630 = vunpack.c.l.b16 %v2559
        %v2631 = vunpack.c.l.b16 %v2560
        %v2632 = vunpack.c.l.b16 %v2561
        %v2633 = vunpack.c.l.b16 %v2562
        %v2634 = vunpack.c.l.b16 %v2563
        %v2635 = vunpack.c.l.b16 %v2564
        %v2636 = vunpack.c.l.b16 %v2565
        %v2637 = vunpack.c.l.b16 %v2566
        %v2638 = vpack.c.b16 %v2607, %v2606
        %v2639 = vpack.c.b16 %v2609, %v2608
        %v2640 = vpack.c.b16 %v2611, %v2610
        %v2641 = vpack.c.b16 %v2613, %v2612
        %v2642 = vpack.c.b16 %v2615, %v2614
        %v2643 = vpack.c.b16 %v2617, %v2616
        %v2644 = vpack.c.b16 %v2619, %v2618
        %v2645 = vpack.c.b16 %v2621, %v2620
        %v2646 = vpack.c.b16 %v2623, %v2622
        %v2647 = vpack.c.b16 %v2625, %v2624
        %v2648 = vpack.c.b16 %v2627, %v2626
        %v2649 = vpack.c.b16 %v2629, %v2628
        %v2650 = vpack.c.b16 %v2631, %v2630
        %v2651 = vpack.c.b16 %v2633, %v2632
        %v2652 = vpack.c.b16 %v2635, %v2634
        %v2653 = vpack.c.b16 %v2637, %v2636
        %2670 = vmatprep.subr.bf16.mxu0 0
        %2671 = vmatpush1.bf16.msra.mxu0 %v2638
        %2672 = vmatprep.subr.bf16.mxu0 0
        %2673 = vmatpush1.bf16.msra.mxu0 %v2639
        %2674 = vmatprep.subr.bf16.mxu0 0
        %2675 = vmatpush1.bf16.msra.mxu0 %v2640
        %2676 = vmatprep.subr.bf16.mxu0 0
        %2677 = vmatpush1.bf16.msra.mxu0 %v2641
        %2678 = vmatprep.subr.bf16.mxu0 0
        %2679 = vmatpush1.bf16.msra.mxu0 %v2642
        %2680 = vmatprep.subr.bf16.mxu0 0
        %2681 = vmatpush1.bf16.msra.mxu0 %v2643
        %2682 = vmatprep.subr.bf16.mxu0 0
        %2683 = vmatpush1.bf16.msra.mxu0 %v2644
        %2684 = vmatprep.subr.bf16.mxu0 0
        %2685 = vmatpush1.bf16.msra.mxu0 %v2645
        %2686 = vmatprep.subr.bf16.mxu0 0
        %2687 = vmatpush1.bf16.msra.mxu0 %v2646
        %2688 = vmatprep.subr.bf16.mxu0 0
        %2689 = vmatpush1.bf16.msra.mxu0 %v2647
        %2690 = vmatprep.subr.bf16.mxu0 0
        %2691 = vmatpush1.bf16.msra.mxu0 %v2648
        %2692 = vmatprep.subr.bf16.mxu0 0
        %2693 = vmatpush1.bf16.msra.mxu0 %v2649
        %2694 = vmatprep.subr.bf16.mxu0 0
        %2695 = vmatpush1.bf16.msra.mxu0 %v2650
        %2696 = vmatprep.subr.bf16.mxu0 0
        %2697 = vmatpush1.bf16.msra.mxu0 %v2651
        %2698 = vmatprep.subr.bf16.mxu0 0
        %2699 = vmatpush1.bf16.msra.mxu0 %v2652
        %2700 = vmatprep.subr.bf16.mxu0 0
        %2701 = vmatpush1.bf16.msra.mxu0 %v2653
        %2702 = vmatprep.mubr.bf16.mxu0 %v2534
        %2703 = vmatmul.mubr.bf16.gmra.mrb[0].mxu0 %v2533
        %v2704 = vpop.f32.mrb[0].mxu0
        %v2705 = vadd.f32 %v2572, %v2704
        %v2706 = vpop.f32.mrb[0].mxu0
        %v2707 = vpop.f32.mrb[0].mxu0
        %v2708 = vadd.f32 %v2572, %v2707
        %v2709 = vpop.f32.mrb[0].mxu0
        %2710 = vdwg.mxu0
        %v2711 = vadd.f32 %v2705, %v2343
        %v2712 = vadd.f32 %v2708, %v2344
        %v2713 = vld [vmem:[%s808] sm:$0x1]
        %v2714 = vld [vmem:[%s811] sm:$0x1]
        %2715 = vadd.xlane.f32.xlu0 %v2711
        %v2716 = vpop.xlane.xlu0 %2715
        %2717 = vadd.xlane.f32.xlu0 %v2712
        %v2718 = vpop.xlane.xlu0 %2717
        %v2719 = vmul.f32 %v2716, %v2310
        %v2720 = vmul.f32 %v2718, %v2310
        %v2721 = vsub.f32 %v2711, %v2719
        %v2722 = vsub.f32 %v2712, %v2720
        %v2723 = vmul.f32 %v2721, %v2721
        %v2724 = vmul.f32 %v2722, %v2722
        %2725 = vadd.xlane.f32.xlu0 %v2723
        %v2726 = vpop.xlane.xlu0 %2725
        %2727 = vadd.xlane.f32.xlu0 %v2724
        %v2728 = vpop.xlane.xlu0 %2727
        %v2729 = vmul.f32 %v2726, %v2310
        %v2730 = vmul.f32 %v2728, %v2310
        %v2731 = vadd.f32 %v2729, 1e-12
        %v2732 = vadd.f32 %v2730, 1e-12
        %v2733 = vrsqrt.pop %v2731
        %v2734 = vrsqrt.pop %v2732
        %v2735 = vmul.f32 %v2721, %v2733
        %v2736 = vmul.f32 %v2722, %v2734
        %v2738 = vlaneseq
        %v2739 = vshrl.u32 %v2738, 7
        %v2740 = vsub.s32 0, %v2739
        %v2741 = vrot.slane %v2713, %v2740
        %v2743 = vmul.f32 %v2735, %v2741
        %v2744 = vmul.f32 %v2736, %v2741
        %v2746 = vlaneseq
        %v2747 = vshrl.u32 %v2746, 7
        %v2748 = vsub.s32 0, %v2747
        %v2749 = vrot.slane %v2714, %v2748
        %v2751 = vadd.f32 %v2743, %v2749
        %v2752 = vadd.f32 %v2744, %v2749
        %2753 = vst [vmem:[#allocation2] sm:$0xff] %v2751
        %2754 = vst [vmem:[#allocation2 + $0x8] sm:$0xff] %v2752
        %p2755 = scmp.eq.s32.totalorder %s37, 1
        // Predicated region
        $region113: #{text_encoder_forward.1} parent=91 // pred_check
          %p2756 = pneg %p2755
        $region114: #{text_encoder_forward.1} parent=91 // pred_check_branch
          %2758 = sbr.rel (%p2756) target = $region116
        $region115: #{text_encoder_forward.1} parent=91 // pred_region
          %v2759 = vpack.c.bf16 %v2752, %v2751
          %v2760 = vld [vmem:[#allocation9] sm:$0xff]
          %v2761 = vld [vmem:[#allocation9 + $0x8] sm:$0xff]
          %v2762 = vld [vmem:[#allocation9 + $0x10] sm:$0xff]
          %v2763 = vld [vmem:[#allocation9 + $0x18] sm:$0xff]
          %v2764 = vld [vmem:[#allocation9 + $0x20] sm:$0xff]
          %v2765 = vld [vmem:[#allocation9 + $0x28] sm:$0xff]
          %v2766 = vld [vmem:[#allocation9 + $0x30] sm:$0xff]
          %v2767 = vld [vmem:[#allocation9 + $0x38] sm:$0xff]
          %v2768 = vld [vmem:[#allocation9 + $0x40] sm:$0xff]
          %v2769 = vld [vmem:[#allocation9 + $0x48] sm:$0xff]
          %v2770 = vld [vmem:[#allocation9 + $0x50] sm:$0xff]
          %v2771 = vld [vmem:[#allocation9 + $0x58] sm:$0xff]
          %v2772 = vld [vmem:[#allocation9 + $0x60] sm:$0xff]
          %v2773 = vld [vmem:[#allocation9 + $0x68] sm:$0xff]
          %v2774 = vld [vmem:[#allocation9 + $0x70] sm:$0xff]
          %v2775 = vld [vmem:[#allocation9 + $0x78] sm:$0xff]
          %v2776 = vld [vmem:[%s17] sm:$0x3]
          %v2778 = vlaneseq
          %v2779 = vshrl.u32 %v2778, 7
          %v2780 = vsub.s32 0, %v2779
          %v2781 = vrot.slane %v2776, %v2780
          %v2782 = vlaneseq
          %v2783 = vshrl.u32 %v2782, 7
          %v2784 = vsub.s32 1, %v2783
          %v2785 = vrot.slane %v2776, %v2784
          %v2804 = vunpack.c.l.b16 %v2760
          %v2805 = vunpack.c.h.b16 %v2760
          %v2806 = vunpack.c.l.b16 %v2761
          %v2807 = vunpack.c.h.b16 %v2761
          %v2808 = vunpack.c.l.b16 %v2762
          %v2809 = vunpack.c.h.b16 %v2762
          %v2810 = vunpack.c.l.b16 %v2763
          %v2811 = vunpack.c.h.b16 %v2763
          %v2812 = vunpack.c.l.b16 %v2764
          %v2813 = vunpack.c.h.b16 %v2764
          %v2814 = vunpack.c.l.b16 %v2765
          %v2815 = vunpack.c.h.b16 %v2765
          %v2816 = vunpack.c.l.b16 %v2766
          %v2817 = vunpack.c.h.b16 %v2766
          %v2818 = vunpack.c.l.b16 %v2767
          %v2819 = vunpack.c.h.b16 %v2767
          %v2820 = vunpack.c.l.b16 %v2768
          %v2821 = vunpack.c.h.b16 %v2768
          %v2822 = vunpack.c.l.b16 %v2769
          %v2823 = vunpack.c.h.b16 %v2769
          %v2824 = vunpack.c.l.b16 %v2770
          %v2825 = vunpack.c.h.b16 %v2770
          %v2826 = vunpack.c.l.b16 %v2771
          %v2827 = vunpack.c.h.b16 %v2771
          %v2828 = vunpack.c.l.b16 %v2772
          %v2829 = vunpack.c.h.b16 %v2772
          %v2830 = vunpack.c.l.b16 %v2773
          %v2831 = vunpack.c.h.b16 %v2773
          %v2832 = vunpack.c.l.b16 %v2774
          %v2833 = vunpack.c.h.b16 %v2774
          %v2834 = vunpack.c.l.b16 %v2775
          %v2835 = vunpack.c.h.b16 %v2775
          %v2836 = vpack.c.b16 %v2806, %v2804
          %v2837 = vpack.c.b16 %v2807, %v2805
          %v2838 = vpack.c.b16 %v2810, %v2808
          %v2839 = vpack.c.b16 %v2811, %v2809
          %v2840 = vpack.c.b16 %v2814, %v2812
          %v2841 = vpack.c.b16 %v2815, %v2813
          %v2842 = vpack.c.b16 %v2818, %v2816
          %v2843 = vpack.c.b16 %v2819, %v2817
          %v2844 = vpack.c.b16 %v2822, %v2820
          %v2845 = vpack.c.b16 %v2823, %v2821
          %v2846 = vpack.c.b16 %v2826, %v2824
          %v2847 = vpack.c.b16 %v2827, %v2825
          %v2848 = vpack.c.b16 %v2830, %v2828
          %v2849 = vpack.c.b16 %v2831, %v2829
          %v2850 = vpack.c.b16 %v2834, %v2832
          %v2851 = vpack.c.b16 %v2835, %v2833
          %2868 = vmatprep.subr.bf16.mxu0 %v2837
          %2869 = vmatpush1.bf16.msra.mxu0 %v2836
          %2870 = vmatprep.subr.bf16.mxu0 %v2839
          %2871 = vmatpush1.bf16.msra.mxu0 %v2838
          %2872 = vmatprep.subr.bf16.mxu0 %v2841
          %2873 = vmatpush1.bf16.msra.mxu0 %v2840
          %2874 = vmatprep.subr.bf16.mxu0 %v2843
          %2875 = vmatpush1.bf16.msra.mxu0 %v2842
          %2876 = vmatprep.subr.bf16.mxu0 %v2845
          %2877 = vmatpush1.bf16.msra.mxu0 %v2844
          %2878 = vmatprep.subr.bf16.mxu0 %v2847
          %2879 = vmatpush1.bf16.msra.mxu0 %v2846
          %2880 = vmatprep.subr.bf16.mxu0 %v2849
          %2881 = vmatpush1.bf16.msra.mxu0 %v2848
          %2882 = vmatprep.subr.bf16.mxu0 %v2851
          %2883 = vmatpush1.bf16.msra.mxu0 %v2850
          %2884 = vmatprep.subr.bf16.mxu0 0
          %2885 = vmatpush1.bf16.msra.mxu0 0
          %2886 = vmatprep.subr.bf16.mxu0 0
          %2887 = vmatpush1.bf16.msra.mxu0 0
          %2888 = vmatprep.subr.bf16.mxu0 0
          %2889 = vmatpush1.bf16.msra.mxu0 0
          %2890 = vmatprep.subr.bf16.mxu0 0
          %2891 = vmatpush1.bf16.msra.mxu0 0
          %2892 = vmatprep.subr.bf16.mxu0 0
          %2893 = vmatpush1.bf16.msra.mxu0 0
          %2894 = vmatprep.subr.bf16.mxu0 0
          %2895 = vmatpush1.bf16.msra.mxu0 0
          %2896 = vmatprep.subr.bf16.mxu0 0
          %2897 = vmatpush1.bf16.msra.mxu0 0
          %2898 = vmatprep.subr.bf16.mxu0 0
          %2899 = vmatpush1.bf16.msra.mxu0 0
          %2900 = vmatprep.mubr.bf16.mxu0 0
          %2901 = vmatmul.mubr.bf16.gmra.mrb[0].mxu0 %v2759
          %v2902 = vpop.f32.mrb[0].mxu0
          %v2903 = vadd.f32 %v2781, %v2902
          %v2904 = vpop.f32.mrb[0].mxu0
          %v2905 = vadd.f32 %v2785, %v2904
          %v2906 = vpop.f32.mrb[0].mxu0
          %v2907 = vadd.f32 %v2781, %v2906
          %v2908 = vpop.f32.mrb[0].mxu0
          %v2909 = vadd.f32 %v2785, %v2908
          %2910 = vdwg.mxu0
          %2911 = vst [vmem:[#allocation11] sm:$0xff] %v2903
          %2912 = vst [vmem:[#allocation11 + $0x8] sm:$0xff] %v2905
          %2913 = vst [vmem:[#allocation11 + $0x10] sm:$0xff] %v2907
          %2914 = vst [vmem:[#allocation11 + $0x18] sm:$0xff] %v2909
        $region116: #{text_encoder_forward.1} parent=91 // pred_fallthru
          _
        // Predicated region
        $region117: #{text_encoder_forward.1} parent=91 // pred_check
          %p2915 = pneg %p488
        $region118: #{text_encoder_forward.1} parent=91 // pred_check_branch
          %2917 = sbr.rel (%p2915) target = $region120
        $region119: #{text_encoder_forward.1} parent=91 // pred_region
          %s2919 = ssub.s32 512, 512
          %2920 = vsyncadd [#allocation5], %s2919
          %s2921 = sshll.u32 [#allocation11], 4
          %s2922 = int_to_ptr.vmem [resolvable:$true] %s2921
          %2927 = dma.vmem_to_hbm [thread:$0]  %s2922, 512, %s18, [#allocation5], 256, 256, 16
        $region120: #{text_encoder_forward.1} parent=91 // pred_fallthru
          _
        // Predicated region
        $region121: #{text_encoder_forward.1} parent=91 // pred_check
          %p2928 = pneg %p488
        $region122: #{text_encoder_forward.1} parent=91 // pred_check_branch
          %2930 = sbr.rel (%p2928) target = $region124
        $region123: #{text_encoder_forward.1} parent=91 // pred_region
          %2931 = dma.done [#allocation5], 512
        $region124: #{text_encoder_forward.1} parent=91 // pred_fallthru
          _
      $region92: #{text_encoder_forward.1} parent=5 // pred_fallthru
        _
      %p2932 = scmp.le.s32.totalorder 2, %s32
      // Predicated region
      $region125: #{text_encoder_forward.1} parent=5 // pred_check
        %p2933 = pneg %p2932
      $region126: #{text_encoder_forward.1} parent=5 // pred_check_branch
        %2935 = sbr.rel (%p2933) target = $region128
      $region127: #{text_encoder_forward.1} parent=5 // pred_region
        %s2936 = ssub.s32 %s32, 2
      $region128: #{text_encoder_forward.1} parent=5 // pred_fallthru
        _
    $region6: #{text_encoder_forward.1} parent=1 // loop_footer
      %s36 = sadd.s32 1, %s32
    $region7: #{text_encoder_forward.1} parent=1 // loop_footer_branch
      %31 = sbr.rel target = $region3
    $region8: #{text_encoder_forward.1} parent=1 // loop_exit
      _
    %2937 = vsyncpa [#allocation4], 1
    %s2938 = scalar_lea.sflag [#allocation4], 1
    %2939 = vsyncpa %s2938, 1
    %2940 = vsyncpa [#allocation7], 1
    %s2941 = scalar_lea.sflag [#allocation7], 1
    %2942 = vsyncpa %s2941, 1
    %2943 = vsyncpa [#allocation10], 1
    %2944 = vsyncpa [#allocation5], 1
    %s2945 = scalar_lea.sflag [#allocation5], 1
    %2946 = vsyncpa %s2945, 1

</llo_original>
